<compile_context>
chip_gen: v7x
topology: tpu7x:2x2x1
jax: 0.10.0
libtpu: 0.0.40
codegen_flags: <defaults>
</compile_context>

<pallas_src>
import jax
import jax.numpy as jnp
from jax import lax
from jax.experimental import pallas as pl
from jax.experimental.pallas import tpu as pltpu

EPS = 1e-5        # GGAConv / DeepGGALayer eps
BN_EPS = 1e-5     # BatchNorm1d eps (folded into w1/b1 at init)
NORM_EPS = 1e-12  # F.normalize eps


# ---------------------------------------------------------------------------
# In-kernel building blocks (traced inside the single fused pallas_call)
# ---------------------------------------------------------------------------
def _gga_conv(x, a_bf16, w1, b1, w2, b2):
    """One GGAConv: powermean(p=1) agg + MessageNorm + residual + MLP."""
    # message: relu(x_j) + eps; PowerMean(p=1, learn=True) clamps to [0, 100].
    # relu(x)+eps > 0, so the lower clamp is a no-op -> single minimum.
    msg = jnp.minimum(jnp.maximum(x, 0.0) + EPS, 100.0)
    # mean aggregation over incoming edges == A @ msg  (bf16 MXU, f32 accum)
    agg = jnp.dot(a_bf16, msg.astype(jnp.bfloat16),
                  preferred_element_type=jnp.float32)
    agg = jnp.minimum(agg, 100.0)          # agg >= 0 already (A >= 0, msg > 0)

    # MessageNorm(learn_scale=False): F.normalize(agg, p=2, dim=-1) * ||x||_2
    # fold the two [N,1] row factors before the single [N,C] multiply.
    inv_agg = lax.rsqrt(jnp.maximum(jnp.sum(agg * agg, axis=-1, keepdims=True),
                                    NORM_EPS * NORM_EPS))
    x_norm = jnp.sqrt(jnp.sum(x * x, axis=-1, keepdims=True))
    out = agg * (inv_agg * x_norm) + x     # MessageNorm + conv residual

    # MLP([C,C,C]): Linear -> BN(eval, fresh stats; folded into w1/b1) -> ReLU
    #               -> Dropout(0) -> Linear      (bf16 MXU, f32 accumulate)
    h = jnp.dot(out.astype(jnp.bfloat16), w1,
                preferred_element_type=jnp.float32) + b1
    h = jnp.maximum(h, 0.0)
    return jnp.dot(h.astype(jnp.bfloat16), w2,
                   preferred_element_type=jnp.float32) + b2


def _deep_gga_layer(x, a_bf16, w1s_ref, b1s_ref, w2s_ref, b2s_ref,
                    wexp_ref, bexp_ref):
    """One DeepGGALayer: 8 convs (relu+eps between) + residual + exp_lin."""
    block = w1s_ref.shape[0]
    h = x

    def body(k, xcur):
        y = _gga_conv(xcur, a_bf16, w1s_ref[k], b1s_ref[k],
                      w2s_ref[k], b2s_ref[k])
        return jnp.maximum(y, 0.0) + EPS   # relu + eps between convs

    # convs 0..block-2 with relu+eps, fully unrolled (LLO scheduler visibility)
    x = lax.fori_loop(0, block - 1, body, x, unroll=True)
    # last conv: no relu+eps before the layer residual
    x = _gga_conv(x, a_bf16, w1s_ref[block - 1], b1s_ref[block - 1],
                  w2s_ref[block - 1], b2s_ref[block - 1])
    x = x + h                              # x = h + x
    # exp_lin: Linear(C -> 2C), then relu + eps
    z = jnp.dot(x.astype(jnp.bfloat16), wexp_ref[...],
                preferred_element_type=jnp.float32) + bexp_ref[...]
    return jnp.maximum(z, 0.0) + EPS


def _make_extractor_kernel(num_layers):
    def kernel(*refs):
        # refs = (x, A, 6 weight refs per layer ..., out)
        x_ref, a_ref = refs[0], refs[1]
        o_ref = refs[-1]
        a = a_ref[...]                     # [N, N] bf16, VMEM-resident
        x = x_ref[...]                     # [N, C] f32
        for l in range(num_layers):        # static unroll over layers
            w1s, b1s, w2s, b2s, wexp, bexp = refs[2 + 6 * l: 2 + 6 * (l + 1)]
            x = _deep_gga_layer(x, a, w1s, b1s, w2s, b2s, wexp, bexp)
        o_ref[...] = x
    return kernel


def extractor_pallas(x, a_bf16, layer_params):
    """Single fused pallas_call for the whole Extractor forward."""
    n, _ = x.shape
    num_layers = len(layer_params)
    c_out = layer_params[-1]["w_exp"].shape[1]
    args = [x, a_bf16]
    for lp in layer_params:
        args += [lp["w1"], lp["b1"], lp["w2"], lp["b2"],
                 lp["w_exp"], lp["b_exp"]]
    return pl.pallas_call(
        _make_extractor_kernel(num_layers),
        out_shape=jax.ShapeDtypeStruct((n, c_out), jnp.float32),
        # No grid: everything whole-array VMEM-resident (tiny at these shapes).
        # Raise this if N/C grow while keeping the resident-everything strategy
        # (v5e scoped default is only 16 MiB, v6e 32 MiB of 128 MiB physical).
        compiler_params=pltpu.CompilerParams(
            vmem_limit_bytes=32 * 1024 * 1024),
    )(*args)


# ---------------------------------------------------------------------------
# Plain-JAX glue: adjacency construction, parameter init, module wiring
# ---------------------------------------------------------------------------
def build_mean_adj(edge_index, num_nodes):
    """Dense row-normalized adjacency (bf16): A[i,j] = (#edges j->i)/max(deg_in(i),1)."""
    src = edge_index[0]   # x_j (source, flow='source_to_target')
    dst = edge_index[1]   # aggregation index i
    a = jnp.zeros((num_nodes, num_nodes), jnp.float32).at[dst, src].add(1.0)
    deg = jnp.sum(a, axis=1, keepdims=True)
    return (a / jnp.maximum(deg, 1.0)).astype(jnp.bfloat16)


def init_linear(key, fan_in, fan_out):
    kw, kb = jax.random.split(key)
    bound = 1.0 / jnp.sqrt(jnp.float32(fan_in))
    w = jax.random.uniform(kw, (fan_in, fan_out), jnp.float32, -bound, bound)
    b = jax.random.uniform(kb, (1, fan_out), jnp.float32, -bound, bound)
    return w, b


def init_extractor_params(key, hidden_channels, num_layers=2, block_size=8):
    # eval-mode BatchNorm (fresh stats) is a constant scale; fold into lin1.
    bn_scale = 1.0 / jnp.sqrt(jnp.float32(1.0 + BN_EPS))
    params = []
    h = hidden_channels
    for _ in range(num_layers):
        key, klayer = jax.random.split(key)
        w1s, b1s, w2s, b2s = [], [], [], []
        for _ in range(block_size):
            klayer, k1, k2 = jax.random.split(klayer, 3)
            w1, b1 = init_linear(k1, h, h)
            w2, b2 = init_linear(k2, h, h)
            w1s.append(w1 * bn_scale)
            b1s.append(b1 * bn_scale)
            w2s.append(w2)
            b2s.append(b2)
        klayer, kexp = jax.random.split(klayer)
        w_exp, b_exp = init_linear(kexp, h, 2 * h)
        params.append(dict(
            # matmul operands stored bf16 for the MXU; biases stay f32
            w1=jnp.stack(w1s).astype(jnp.bfloat16),
            b1=jnp.stack(b1s),
            w2=jnp.stack(w2s).astype(jnp.bfloat16),
            b2=jnp.stack(b2s),
            w_exp=w_exp.astype(jnp.bfloat16),
            b_exp=b_exp))
        h = h * 2
    return params


@jax.jit
def extractor_forward(x, edge_index, params):
    a = build_mean_adj(edge_index, x.shape[0])
    return extractor_pallas(x, a, params)


# ---------------------------------------------------------------------------
if __name__ == "__main__":
    key = jax.random.PRNGKey(0)
    kx, ke, kp = jax.random.split(key, 3)

    num_nodes = 16
    hidden = 32
    num_edges = 48
    num_layers = 2

    x = jax.random.normal(kx, (num_nodes, hidden), jnp.float32)
    edge_index = jax.random.randint(ke, (2, num_edges), 0, num_nodes, jnp.int32)
    params = init_extractor_params(kp, hidden, num_layers=num_layers, block_size=8)

    out = extractor_forward(x, edge_index, params)
    out = jax.block_until_ready(out)

    expected_channels = hidden * (2 ** num_layers)
    assert out.shape == (num_nodes, expected_channels), out.shape
    assert bool(jnp.all(jnp.isfinite(out)))
    print("KERNEL_OK")
</pallas_src>

<mosaic_0001>
module attributes {stable_mosaic.version = 11 : i64} {
  func.func private @main(%arg0: i32) attributes {dimension_semantics = [#tpu.dimension_semantics<core_parallel>], iteration_bounds = array<i64: 2>, tpu.core_type = #tpu.core_type<sc_scalar_subcore>, window_params = []} {
    return
  }
}

module attributes {stable_mosaic.version = 11 : i64} {
  func.func private @main(%arg0: i32) attributes {dimension_semantics = [#tpu.dimension_semantics<core_parallel>], iteration_bounds = array<i64: 2>, tpu.core_type = #tpu.core_type<sc_scalar_subcore>, window_params = []} {
    return
  }
}

module attributes {stable_mosaic.version = 11 : i64} {
  func.func @kernel(%arg0: memref<16x32xf32, #tpu.memory_space<vmem>>, %arg1: memref<16x16xbf16, #tpu.memory_space<vmem>>, %arg2: memref<8x32x32xbf16, #tpu.memory_space<vmem>>, %arg3: memref<8x1x32xf32, #tpu.memory_space<vmem>>, %arg4: memref<8x32x32xbf16, #tpu.memory_space<vmem>>, %arg5: memref<8x1x32xf32, #tpu.memory_space<vmem>>, %arg6: memref<32x64xbf16, #tpu.memory_space<vmem>>, %arg7: memref<1x64xf32, #tpu.memory_space<vmem>>, %arg8: memref<8x64x64xbf16, #tpu.memory_space<vmem>>, %arg9: memref<8x1x64xf32, #tpu.memory_space<vmem>>, %arg10: memref<8x64x64xbf16, #tpu.memory_space<vmem>>, %arg11: memref<8x1x64xf32, #tpu.memory_space<vmem>>, %arg12: memref<64x128xbf16, #tpu.memory_space<vmem>>, %arg13: memref<1x128xf32, #tpu.memory_space<vmem>>, %arg14: memref<16x128xf32, #tpu.memory_space<vmem>>) attributes {dimension_semantics = [], scalar_prefetch = 0 : i64, scratch_operands = 0 : i64, tpu.core_type = #tpu.core_type<tc>} {
    %c0 = arith.constant 0 : index
    %c0_0 = arith.constant 0 : index
    %0 = vector.load %arg1[%c0, %c0_0] : memref<16x16xbf16, #tpu.memory_space<vmem>>, vector<16x16xbf16>
    %c0_1 = arith.constant 0 : index
    %c0_2 = arith.constant 0 : index
    %1 = vector.load %arg0[%c0_1, %c0_2] : memref<16x32xf32, #tpu.memory_space<vmem>>, vector<16x32xf32>
    %c0_i32 = arith.constant 0 : i32
    %2 = arith.index_cast %c0_i32 : i32 to index
    %c0_3 = arith.constant 0 : index
    %c0_4 = arith.constant 0 : index
    %3 = vector.load %arg2[%2, %c0_3, %c0_4] : memref<8x32x32xbf16, #tpu.memory_space<vmem>>, vector<1x32x32xbf16>
    %4 = vector.shape_cast %3 : vector<1x32x32xbf16> to vector<32x32xbf16>
    %5 = arith.index_cast %c0_i32 : i32 to index
    %c0_5 = arith.constant 0 : index
    %c0_6 = arith.constant 0 : index
    %6 = vector.load %arg3[%5, %c0_5, %c0_6] : memref<8x1x32xf32, #tpu.memory_space<vmem>>, vector<1x1x32xf32>
    %7 = vector.shape_cast %6 : vector<1x1x32xf32> to vector<1x32xf32>
    %8 = arith.index_cast %c0_i32 : i32 to index
    %c0_7 = arith.constant 0 : index
    %c0_8 = arith.constant 0 : index
    %9 = vector.load %arg4[%8, %c0_7, %c0_8] : memref<8x32x32xbf16, #tpu.memory_space<vmem>>, vector<1x32x32xbf16>
    %10 = vector.shape_cast %9 : vector<1x32x32xbf16> to vector<32x32xbf16>
    %11 = arith.index_cast %c0_i32 : i32 to index
    %c0_9 = arith.constant 0 : index
    %c0_10 = arith.constant 0 : index
    %12 = vector.load %arg5[%11, %c0_9, %c0_10] : memref<8x1x32xf32, #tpu.memory_space<vmem>>, vector<1x1x32xf32>
    %13 = vector.shape_cast %12 : vector<1x1x32xf32> to vector<1x32xf32>
    %cst = arith.constant 0.000000e+00 : f32
    %14 = vector.broadcast %cst : f32 to vector<16x32xf32>
    %15 = arith.maximumf %1, %14 : vector<16x32xf32>
    %cst_11 = arith.constant 9.99999974E-6 : f32
    %16 = vector.broadcast %cst_11 : f32 to vector<16x32xf32>
    %17 = arith.addf %15, %16 : vector<16x32xf32>
    %cst_12 = arith.constant 1.000000e+02 : f32
    %18 = vector.broadcast %cst_12 : f32 to vector<16x32xf32>
    %19 = arith.minimumf %17, %18 : vector<16x32xf32>
    %20 = arith.truncf %19 : vector<16x32xf32> to vector<16x32xbf16>
    %cst_13 = arith.constant dense<0.000000e+00> : vector<16x32xf32>
    %21 = tpu.matmul %0, %20, %cst_13 {dimension_numbers = #tpu.dot_dimension_numbers<[1], [0], [0], [1], [0, 0, 1, 1], [], []>} : vector<16x16xbf16>, vector<16x32xbf16>, vector<16x32xf32> -> vector<16x32xf32>
    %cst_14 = arith.constant 1.000000e+02 : f32
    %22 = vector.broadcast %cst_14 : f32 to vector<16x32xf32>
    %23 = arith.minimumf %21, %22 : vector<16x32xf32>
    %24 = arith.mulf %23, %23 : vector<16x32xf32>
    %cst_15 = arith.constant dense<0.000000e+00> : vector<16xf32>
    %25 = vector.multi_reduction <add>, %24, %cst_15 [1] : vector<16x32xf32> to vector<16xf32>
    %26 = vector.shape_cast %25 : vector<16xf32> to vector<16x1xf32>
    %cst_16 = arith.constant 1.000000e-24 : f32
    %27 = vector.broadcast %cst_16 : f32 to vector<16x1xf32>
    %28 = arith.maximumf %26, %27 : vector<16x1xf32>
    %29 = math.rsqrt %28 : vector<16x1xf32>
    %30 = arith.mulf %1, %1 : vector<16x32xf32>
    %cst_17 = arith.constant dense<0.000000e+00> : vector<16xf32>
    %31 = vector.multi_reduction <add>, %30, %cst_17 [1] : vector<16x32xf32> to vector<16xf32>
    %32 = vector.shape_cast %31 : vector<16xf32> to vector<16x1xf32>
    %33 = math.sqrt %32 : vector<16x1xf32>
    %34 = arith.mulf %29, %33 : vector<16x1xf32>
    %35 = vector.broadcast %34 : vector<16x1xf32> to vector<16x32xf32>
    %36 = arith.mulf %23, %35 : vector<16x32xf32>
    %37 = arith.addf %36, %1 : vector<16x32xf32>
    %38 = arith.truncf %37 : vector<16x32xf32> to vector<16x32xbf16>
    %cst_18 = arith.constant dense<0.000000e+00> : vector<16x32xf32>
    %39 = tpu.matmul %38, %4, %cst_18 {dimension_numbers = #tpu.dot_dimension_numbers<[1], [0], [0], [1], [0, 0, 1, 1], [], []>} : vector<16x32xbf16>, vector<32x32xbf16>, vector<16x32xf32> -> vector<16x32xf32>
    %40 = vector.broadcast %7 : vector<1x32xf32> to vector<16x32xf32>
    %41 = arith.addf %39, %40 : vector<16x32xf32>
    %cst_19 = arith.constant 0.000000e+00 : f32
    %42 = vector.broadcast %cst_19 : f32 to vector<16x32xf32>
    %43 = arith.maximumf %41, %42 : vector<16x32xf32>
    %44 = arith.truncf %43 : vector<16x32xf32> to vector<16x32xbf16>
    %cst_20 = arith.constant dense<0.000000e+00> : vector<16x32xf32>
    %45 = tpu.matmul %44, %10, %cst_20 {dimension_numbers = #tpu.dot_dimension_numbers<[1], [0], [0], [1], [0, 0, 1, 1], [], []>} : vector<16x32xbf16>, vector<32x32xbf16>, vector<16x32xf32> -> vector<16x32xf32>
    %46 = vector.broadcast %13 : vector<1x32xf32> to vector<16x32xf32>
    %47 = arith.addf %45, %46 : vector<16x32xf32>
    %cst_21 = arith.constant 0.000000e+00 : f32
    %48 = vector.broadcast %cst_21 : f32 to vector<16x32xf32>
    %49 = arith.maximumf %47, %48 : vector<16x32xf32>
    %cst_22 = arith.constant 9.99999974E-6 : f32
    %50 = vector.broadcast %cst_22 : f32 to vector<16x32xf32>
    %51 = arith.addf %49, %50 : vector<16x32xf32>
    %c1_i32 = arith.constant 1 : i32
    %52 = arith.index_cast %c1_i32 : i32 to index
    %c0_23 = arith.constant 0 : index
    %c0_24 = arith.constant 0 : index
    %53 = vector.load %arg2[%52, %c0_23, %c0_24] : memref<8x32x32xbf16, #tpu.memory_space<vmem>>, vector<1x32x32xbf16>
    %54 = vector.shape_cast %53 : vector<1x32x32xbf16> to vector<32x32xbf16>
    %55 = arith.index_cast %c1_i32 : i32 to index
    %c0_25 = arith.constant 0 : index
    %c0_26 = arith.constant 0 : index
    %56 = vector.load %arg3[%55, %c0_25, %c0_26] : memref<8x1x32xf32, #tpu.memory_space<vmem>>, vector<1x1x32xf32>
    %57 = vector.shape_cast %56 : vector<1x1x32xf32> to vector<1x32xf32>
    %58 = arith.index_cast %c1_i32 : i32 to index
    %c0_27 = arith.constant 0 : index
    %c0_28 = arith.constant 0 : index
    %59 = vector.load %arg4[%58, %c0_27, %c0_28] : memref<8x32x32xbf16, #tpu.memory_space<vmem>>, vector<1x32x32xbf16>
    %60 = vector.shape_cast %59 : vector<1x32x32xbf16> to vector<32x32xbf16>
    %61 = arith.index_cast %c1_i32 : i32 to index
    %c0_29 = arith.constant 0 : index
    %c0_30 = arith.constant 0 : index
    %62 = vector.load %arg5[%61, %c0_29, %c0_30] : memref<8x1x32xf32, #tpu.memory_space<vmem>>, vector<1x1x32xf32>
    %63 = vector.shape_cast %62 : vector<1x1x32xf32> to vector<1x32xf32>
    %cst_31 = arith.constant 0.000000e+00 : f32
    %64 = vector.broadcast %cst_31 : f32 to vector<16x32xf32>
    %65 = arith.maximumf %51, %64 : vector<16x32xf32>
    %cst_32 = arith.constant 9.99999974E-6 : f32
    %66 = vector.broadcast %cst_32 : f32 to vector<16x32xf32>
    %67 = arith.addf %65, %66 : vector<16x32xf32>
    %cst_33 = arith.constant 1.000000e+02 : f32
    %68 = vector.broadcast %cst_33 : f32 to vector<16x32xf32>
    %69 = arith.minimumf %67, %68 : vector<16x32xf32>
    %70 = arith.truncf %69 : vector<16x32xf32> to vector<16x32xbf16>
    %cst_34 = arith.constant dense<0.000000e+00> : vector<16x32xf32>
    %71 = tpu.matmul %0, %70, %cst_34 {dimension_numbers = #tpu.dot_dimension_numbers<[1], [0], [0], [1], [0, 0, 1, 1], [], []>} : vector<16x16xbf16>, vector<16x32xbf16>, vector<16x32xf32> -> vector<16x32xf32>
    %cst_35 = arith.constant 1.000000e+02 : f32
    %72 = vector.broadcast %cst_35 : f32 to vector<16x32xf32>
    %73 = arith.minimumf %71, %72 : vector<16x32xf32>
    %74 = arith.mulf %73, %73 : vector<16x32xf32>
    %cst_36 = arith.constant dense<0.000000e+00> : vector<16xf32>
    %75 = vector.multi_reduction <add>, %74, %cst_36 [1] : vector<16x32xf32> to vector<16xf32>
    %76 = vector.shape_cast %75 : vector<16xf32> to vector<16x1xf32>
    %cst_37 = arith.constant 1.000000e-24 : f32
    %77 = vector.broadcast %cst_37 : f32 to vector<16x1xf32>
    %78 = arith.maximumf %76, %77 : vector<16x1xf32>
    %79 = math.rsqrt %78 : vector<16x1xf32>
    %80 = arith.mulf %51, %51 : vector<16x32xf32>
    %cst_38 = arith.constant dense<0.000000e+00> : vector<16xf32>
    %81 = vector.multi_reduction <add>, %80, %cst_38 [1] : vector<16x32xf32> to vector<16xf32>
    %82 = vector.shape_cast %81 : vector<16xf32> to vector<16x1xf32>
    %83 = math.sqrt %82 : vector<16x1xf32>
    %84 = arith.mulf %79, %83 : vector<16x1xf32>
    %85 = vector.broadcast %84 : vector<16x1xf32> to vector<16x32xf32>
    %86 = arith.mulf %73, %85 : vector<16x32xf32>
    %87 = arith.addf %86, %51 : vector<16x32xf32>
    %88 = arith.truncf %87 : vector<16x32xf32> to vector<16x32xbf16>
    %cst_39 = arith.constant dense<0.000000e+00> : vector<16x32xf32>
    %89 = tpu.matmul %88, %54, %cst_39 {dimension_numbers = #tpu.dot_dimension_numbers<[1], [0], [0], [1], [0, 0, 1, 1], [], []>} : vector<16x32xbf16>, vector<32x32xbf16>, vector<16x32xf32> -> vector<16x32xf32>
    %90 = vector.broadcast %57 : vector<1x32xf32> to vector<16x32xf32>
    %91 = arith.addf %89, %90 : vector<16x32xf32>
    %cst_40 = arith.constant 0.000000e+00 : f32
    %92 = vector.broadcast %cst_40 : f32 to vector<16x32xf32>
    %93 = arith.maximumf %91, %92 : vector<16x32xf32>
    %94 = arith.truncf %93 : vector<16x32xf32> to vector<16x32xbf16>
    %cst_41 = arith.constant dense<0.000000e+00> : vector<16x32xf32>
    %95 = tpu.matmul %94, %60, %cst_41 {dimension_numbers = #tpu.dot_dimension_numbers<[1], [0], [0], [1], [0, 0, 1, 1], [], []>} : vector<16x32xbf16>, vector<32x32xbf16>, vector<16x32xf32> -> vector<16x32xf32>
    %96 = vector.broadcast %63 : vector<1x32xf32> to vector<16x32xf32>
    %97 = arith.addf %95, %96 : vector<16x32xf32>
    %cst_42 = arith.constant 0.000000e+00 : f32
    %98 = vector.broadcast %cst_42 : f32 to vector<16x32xf32>
    %99 = arith.maximumf %97, %98 : vector<16x32xf32>
    %cst_43 = arith.constant 9.99999974E-6 : f32
    %100 = vector.broadcast %cst_43 : f32 to vector<16x32xf32>
    %101 = arith.addf %99, %100 : vector<16x32xf32>
    %c2_i32 = arith.constant 2 : i32
    %102 = arith.index_cast %c2_i32 : i32 to index
    %c0_44 = arith.constant 0 : index
    %c0_45 = arith.constant 0 : index
    %103 = vector.load %arg2[%102, %c0_44, %c0_45] : memref<8x32x32xbf16, #tpu.memory_space<vmem>>, vector<1x32x32xbf16>
    %104 = vector.shape_cast %103 : vector<1x32x32xbf16> to vector<32x32xbf16>
    %105 = arith.index_cast %c2_i32 : i32 to index
    %c0_46 = arith.constant 0 : index
    %c0_47 = arith.constant 0 : index
    %106 = vector.load %arg3[%105, %c0_46, %c0_47] : memref<8x1x32xf32, #tpu.memory_space<vmem>>, vector<1x1x32xf32>
    %107 = vector.shape_cast %106 : vector<1x1x32xf32> to vector<1x32xf32>
    %108 = arith.index_cast %c2_i32 : i32 to index
    %c0_48 = arith.constant 0 : index
    %c0_49 = arith.constant 0 : index
    %109 = vector.load %arg4[%108, %c0_48, %c0_49] : memref<8x32x32xbf16, #tpu.memory_space<vmem>>, vector<1x32x32xbf16>
    %110 = vector.shape_cast %109 : vector<1x32x32xbf16> to vector<32x32xbf16>
    %111 = arith.index_cast %c2_i32 : i32 to index
    %c0_50 = arith.constant 0 : index
    %c0_51 = arith.constant 0 : index
    %112 = vector.load %arg5[%111, %c0_50, %c0_51] : memref<8x1x32xf32, #tpu.memory_space<vmem>>, vector<1x1x32xf32>
    %113 = vector.shape_cast %112 : vector<1x1x32xf32> to vector<1x32xf32>
    %cst_52 = arith.constant 0.000000e+00 : f32
    %114 = vector.broadcast %cst_52 : f32 to vector<16x32xf32>
    %115 = arith.maximumf %101, %114 : vector<16x32xf32>
    %cst_53 = arith.constant 9.99999974E-6 : f32
    %116 = vector.broadcast %cst_53 : f32 to vector<16x32xf32>
    %117 = arith.addf %115, %116 : vector<16x32xf32>
    %cst_54 = arith.constant 1.000000e+02 : f32
    %118 = vector.broadcast %cst_54 : f32 to vector<16x32xf32>
    %119 = arith.minimumf %117, %118 : vector<16x32xf32>
    %120 = arith.truncf %119 : vector<16x32xf32> to vector<16x32xbf16>
    %cst_55 = arith.constant dense<0.000000e+00> : vector<16x32xf32>
    %121 = tpu.matmul %0, %120, %cst_55 {dimension_numbers = #tpu.dot_dimension_numbers<[1], [0], [0], [1], [0, 0, 1, 1], [], []>} : vector<16x16xbf16>, vector<16x32xbf16>, vector<16x32xf32> -> vector<16x32xf32>
    %cst_56 = arith.constant 1.000000e+02 : f32
    %122 = vector.broadcast %cst_56 : f32 to vector<16x32xf32>
    %123 = arith.minimumf %121, %122 : vector<16x32xf32>
    %124 = arith.mulf %123, %123 : vector<16x32xf32>
    %cst_57 = arith.constant dense<0.000000e+00> : vector<16xf32>
    %125 = vector.multi_reduction <add>, %124, %cst_57 [1] : vector<16x32xf32> to vector<16xf32>
    %126 = vector.shape_cast %125 : vector<16xf32> to vector<16x1xf32>
    %cst_58 = arith.constant 1.000000e-24 : f32
    %127 = vector.broadcast %cst_58 : f32 to vector<16x1xf32>
    %128 = arith.maximumf %126, %127 : vector<16x1xf32>
    %129 = math.rsqrt %128 : vector<16x1xf32>
    %130 = arith.mulf %101, %101 : vector<16x32xf32>
    %cst_59 = arith.constant dense<0.000000e+00> : vector<16xf32>
    %131 = vector.multi_reduction <add>, %130, %cst_59 [1] : vector<16x32xf32> to vector<16xf32>
    %132 = vector.shape_cast %131 : vector<16xf32> to vector<16x1xf32>
    %133 = math.sqrt %132 : vector<16x1xf32>
    %134 = arith.mulf %129, %133 : vector<16x1xf32>
    %135 = vector.broadcast %134 : vector<16x1xf32> to vector<16x32xf32>
    %136 = arith.mulf %123, %135 : vector<16x32xf32>
    %137 = arith.addf %136, %101 : vector<16x32xf32>
    %138 = arith.truncf %137 : vector<16x32xf32> to vector<16x32xbf16>
    %cst_60 = arith.constant dense<0.000000e+00> : vector<16x32xf32>
    %139 = tpu.matmul %138, %104, %cst_60 {dimension_numbers = #tpu.dot_dimension_numbers<[1], [0], [0], [1], [0, 0, 1, 1], [], []>} : vector<16x32xbf16>, vector<32x32xbf16>, vector<16x32xf32> -> vector<16x32xf32>
    %140 = vector.broadcast %107 : vector<1x32xf32> to vector<16x32xf32>
    %141 = arith.addf %139, %140 : vector<16x32xf32>
    %cst_61 = arith.constant 0.000000e+00 : f32
    %142 = vector.broadcast %cst_61 : f32 to vector<16x32xf32>
    %143 = arith.maximumf %141, %142 : vector<16x32xf32>
    %144 = arith.truncf %143 : vector<16x32xf32> to vector<16x32xbf16>
    %cst_62 = arith.constant dense<0.000000e+00> : vector<16x32xf32>
    %145 = tpu.matmul %144, %110, %cst_62 {dimension_numbers = #tpu.dot_dimension_numbers<[1], [0], [0], [1], [0, 0, 1, 1], [], []>} : vector<16x32xbf16>, vector<32x32xbf16>, vector<16x32xf32> -> vector<16x32xf32>
    %146 = vector.broadcast %113 : vector<1x32xf32> to vector<16x32xf32>
    %147 = arith.addf %145, %146 : vector<16x32xf32>
    %cst_63 = arith.constant 0.000000e+00 : f32
    %148 = vector.broadcast %cst_63 : f32 to vector<16x32xf32>
    %149 = arith.maximumf %147, %148 : vector<16x32xf32>
    %cst_64 = arith.constant 9.99999974E-6 : f32
    %150 = vector.broadcast %cst_64 : f32 to vector<16x32xf32>
    %151 = arith.addf %149, %150 : vector<16x32xf32>
    %c3_i32 = arith.constant 3 : i32
    %152 = arith.index_cast %c3_i32 : i32 to index
    %c0_65 = arith.constant 0 : index
    %c0_66 = arith.constant 0 : index
    %153 = vector.load %arg2[%152, %c0_65, %c0_66] : memref<8x32x32xbf16, #tpu.memory_space<vmem>>, vector<1x32x32xbf16>
    %154 = vector.shape_cast %153 : vector<1x32x32xbf16> to vector<32x32xbf16>
    %155 = arith.index_cast %c3_i32 : i32 to index
    %c0_67 = arith.constant 0 : index
    %c0_68 = arith.constant 0 : index
    %156 = vector.load %arg3[%155, %c0_67, %c0_68] : memref<8x1x32xf32, #tpu.memory_space<vmem>>, vector<1x1x32xf32>
    %157 = vector.shape_cast %156 : vector<1x1x32xf32> to vector<1x32xf32>
    %158 = arith.index_cast %c3_i32 : i32 to index
    %c0_69 = arith.constant 0 : index
    %c0_70 = arith.constant 0 : index
    %159 = vector.load %arg4[%158, %c0_69, %c0_70] : memref<8x32x32xbf16, #tpu.memory_space<vmem>>, vector<1x32x32xbf16>
    %160 = vector.shape_cast %159 : vector<1x32x32xbf16> to vector<32x32xbf16>
    %161 = arith.index_cast %c3_i32 : i32 to index
    %c0_71 = arith.constant 0 : index
    %c0_72 = arith.constant 0 : index
    %162 = vector.load %arg5[%161, %c0_71, %c0_72] : memref<8x1x32xf32, #tpu.memory_space<vmem>>, vector<1x1x32xf32>
    %163 = vector.shape_cast %162 : vector<1x1x32xf32> to vector<1x32xf32>
    %cst_73 = arith.constant 0.000000e+00 : f32
    %164 = vector.broadcast %cst_73 : f32 to vector<16x32xf32>
    %165 = arith.maximumf %151, %164 : vector<16x32xf32>
    %cst_74 = arith.constant 9.99999974E-6 : f32
    %166 = vector.broadcast %cst_74 : f32 to vector<16x32xf32>
    %167 = arith.addf %165, %166 : vector<16x32xf32>
    %cst_75 = arith.constant 1.000000e+02 : f32
    %168 = vector.broadcast %cst_75 : f32 to vector<16x32xf32>
    %169 = arith.minimumf %167, %168 : vector<16x32xf32>
    %170 = arith.truncf %169 : vector<16x32xf32> to vector<16x32xbf16>
    %cst_76 = arith.constant dense<0.000000e+00> : vector<16x32xf32>
    %171 = tpu.matmul %0, %170, %cst_76 {dimension_numbers = #tpu.dot_dimension_numbers<[1], [0], [0], [1], [0, 0, 1, 1], [], []>} : vector<16x16xbf16>, vector<16x32xbf16>, vector<16x32xf32> -> vector<16x32xf32>
    %cst_77 = arith.constant 1.000000e+02 : f32
    %172 = vector.broadcast %cst_77 : f32 to vector<16x32xf32>
    %173 = arith.minimumf %171, %172 : vector<16x32xf32>
    %174 = arith.mulf %173, %173 : vector<16x32xf32>
    %cst_78 = arith.constant dense<0.000000e+00> : vector<16xf32>
    %175 = vector.multi_reduction <add>, %174, %cst_78 [1] : vector<16x32xf32> to vector<16xf32>
    %176 = vector.shape_cast %175 : vector<16xf32> to vector<16x1xf32>
    %cst_79 = arith.constant 1.000000e-24 : f32
    %177 = vector.broadcast %cst_79 : f32 to vector<16x1xf32>
    %178 = arith.maximumf %176, %177 : vector<16x1xf32>
    %179 = math.rsqrt %178 : vector<16x1xf32>
    %180 = arith.mulf %151, %151 : vector<16x32xf32>
    %cst_80 = arith.constant dense<0.000000e+00> : vector<16xf32>
    %181 = vector.multi_reduction <add>, %180, %cst_80 [1] : vector<16x32xf32> to vector<16xf32>
    %182 = vector.shape_cast %181 : vector<16xf32> to vector<16x1xf32>
    %183 = math.sqrt %182 : vector<16x1xf32>
    %184 = arith.mulf %179, %183 : vector<16x1xf32>
    %185 = vector.broadcast %184 : vector<16x1xf32> to vector<16x32xf32>
    %186 = arith.mulf %173, %185 : vector<16x32xf32>
    %187 = arith.addf %186, %151 : vector<16x32xf32>
    %188 = arith.truncf %187 : vector<16x32xf32> to vector<16x32xbf16>
    %cst_81 = arith.constant dense<0.000000e+00> : vector<16x32xf32>
    %189 = tpu.matmul %188, %154, %cst_81 {dimension_numbers = #tpu.dot_dimension_numbers<[1], [0], [0], [1], [0, 0, 1, 1], [], []>} : vector<16x32xbf16>, vector<32x32xbf16>, vector<16x32xf32> -> vector<16x32xf32>
    %190 = vector.broadcast %157 : vector<1x32xf32> to vector<16x32xf32>
    %191 = arith.addf %189, %190 : vector<16x32xf32>
    %cst_82 = arith.constant 0.000000e+00 : f32
    %192 = vector.broadcast %cst_82 : f32 to vector<16x32xf32>
    %193 = arith.maximumf %191, %192 : vector<16x32xf32>
    %194 = arith.truncf %193 : vector<16x32xf32> to vector<16x32xbf16>
    %cst_83 = arith.constant dense<0.000000e+00> : vector<16x32xf32>
    %195 = tpu.matmul %194, %160, %cst_83 {dimension_numbers = #tpu.dot_dimension_numbers<[1], [0], [0], [1], [0, 0, 1, 1], [], []>} : vector<16x32xbf16>, vector<32x32xbf16>, vector<16x32xf32> -> vector<16x32xf32>
    %196 = vector.broadcast %163 : vector<1x32xf32> to vector<16x32xf32>
    %197 = arith.addf %195, %196 : vector<16x32xf32>
    %cst_84 = arith.constant 0.000000e+00 : f32
    %198 = vector.broadcast %cst_84 : f32 to vector<16x32xf32>
    %199 = arith.maximumf %197, %198 : vector<16x32xf32>
    %cst_85 = arith.constant 9.99999974E-6 : f32
    %200 = vector.broadcast %cst_85 : f32 to vector<16x32xf32>
    %201 = arith.addf %199, %200 : vector<16x32xf32>
    %c4_i32 = arith.constant 4 : i32
    %202 = arith.index_cast %c4_i32 : i32 to index
    %c0_86 = arith.constant 0 : index
    %c0_87 = arith.constant 0 : index
    %203 = vector.load %arg2[%202, %c0_86, %c0_87] : memref<8x32x32xbf16, #tpu.memory_space<vmem>>, vector<1x32x32xbf16>
    %204 = vector.shape_cast %203 : vector<1x32x32xbf16> to vector<32x32xbf16>
    %205 = arith.index_cast %c4_i32 : i32 to index
    %c0_88 = arith.constant 0 : index
    %c0_89 = arith.constant 0 : index
    %206 = vector.load %arg3[%205, %c0_88, %c0_89] : memref<8x1x32xf32, #tpu.memory_space<vmem>>, vector<1x1x32xf32>
    %207 = vector.shape_cast %206 : vector<1x1x32xf32> to vector<1x32xf32>
    %208 = arith.index_cast %c4_i32 : i32 to index
    %c0_90 = arith.constant 0 : index
    %c0_91 = arith.constant 0 : index
    %209 = vector.load %arg4[%208, %c0_90, %c0_91] : memref<8x32x32xbf16, #tpu.memory_space<vmem>>, vector<1x32x32xbf16>
    %210 = vector.shape_cast %209 : vector<1x32x32xbf16> to vector<32x32xbf16>
    %211 = arith.index_cast %c4_i32 : i32 to index
    %c0_92 = arith.constant 0 : index
    %c0_93 = arith.constant 0 : index
    %212 = vector.load %arg5[%211, %c0_92, %c0_93] : memref<8x1x32xf32, #tpu.memory_space<vmem>>, vector<1x1x32xf32>
    %213 = vector.shape_cast %212 : vector<1x1x32xf32> to vector<1x32xf32>
    %cst_94 = arith.constant 0.000000e+00 : f32
    %214 = vector.broadcast %cst_94 : f32 to vector<16x32xf32>
    %215 = arith.maximumf %201, %214 : vector<16x32xf32>
    %cst_95 = arith.constant 9.99999974E-6 : f32
    %216 = vector.broadcast %cst_95 : f32 to vector<16x32xf32>
    %217 = arith.addf %215, %216 : vector<16x32xf32>
    %cst_96 = arith.constant 1.000000e+02 : f32
    %218 = vector.broadcast %cst_96 : f32 to vector<16x32xf32>
    %219 = arith.minimumf %217, %218 : vector<16x32xf32>
    %220 = arith.truncf %219 : vector<16x32xf32> to vector<16x32xbf16>
    %cst_97 = arith.constant dense<0.000000e+00> : vector<16x32xf32>
    %221 = tpu.matmul %0, %220, %cst_97 {dimension_numbers = #tpu.dot_dimension_numbers<[1], [0], [0], [1], [0, 0, 1, 1], [], []>} : vector<16x16xbf16>, vector<16x32xbf16>, vector<16x32xf32> -> vector<16x32xf32>
    %cst_98 = arith.constant 1.000000e+02 : f32
    %222 = vector.broadcast %cst_98 : f32 to vector<16x32xf32>
    %223 = arith.minimumf %221, %222 : vector<16x32xf32>
    %224 = arith.mulf %223, %223 : vector<16x32xf32>
    %cst_99 = arith.constant dense<0.000000e+00> : vector<16xf32>
    %225 = vector.multi_reduction <add>, %224, %cst_99 [1] : vector<16x32xf32> to vector<16xf32>
    %226 = vector.shape_cast %225 : vector<16xf32> to vector<16x1xf32>
    %cst_100 = arith.constant 1.000000e-24 : f32
    %227 = vector.broadcast %cst_100 : f32 to vector<16x1xf32>
    %228 = arith.maximumf %226, %227 : vector<16x1xf32>
    %229 = math.rsqrt %228 : vector<16x1xf32>
    %230 = arith.mulf %201, %201 : vector<16x32xf32>
    %cst_101 = arith.constant dense<0.000000e+00> : vector<16xf32>
    %231 = vector.multi_reduction <add>, %230, %cst_101 [1] : vector<16x32xf32> to vector<16xf32>
    %232 = vector.shape_cast %231 : vector<16xf32> to vector<16x1xf32>
    %233 = math.sqrt %232 : vector<16x1xf32>
    %234 = arith.mulf %229, %233 : vector<16x1xf32>
    %235 = vector.broadcast %234 : vector<16x1xf32> to vector<16x32xf32>
    %236 = arith.mulf %223, %235 : vector<16x32xf32>
    %237 = arith.addf %236, %201 : vector<16x32xf32>
    %238 = arith.truncf %237 : vector<16x32xf32> to vector<16x32xbf16>
    %cst_102 = arith.constant dense<0.000000e+00> : vector<16x32xf32>
    %239 = tpu.matmul %238, %204, %cst_102 {dimension_numbers = #tpu.dot_dimension_numbers<[1], [0], [0], [1], [0, 0, 1, 1], [], []>} : vector<16x32xbf16>, vector<32x32xbf16>, vector<16x32xf32> -> vector<16x32xf32>
    %240 = vector.broadcast %207 : vector<1x32xf32> to vector<16x32xf32>
    %241 = arith.addf %239, %240 : vector<16x32xf32>
    %cst_103 = arith.constant 0.000000e+00 : f32
    %242 = vector.broadcast %cst_103 : f32 to vector<16x32xf32>
    %243 = arith.maximumf %241, %242 : vector<16x32xf32>
    %244 = arith.truncf %243 : vector<16x32xf32> to vector<16x32xbf16>
    %cst_104 = arith.constant dense<0.000000e+00> : vector<16x32xf32>
    %245 = tpu.matmul %244, %210, %cst_104 {dimension_numbers = #tpu.dot_dimension_numbers<[1], [0], [0], [1], [0, 0, 1, 1], [], []>} : vector<16x32xbf16>, vector<32x32xbf16>, vector<16x32xf32> -> vector<16x32xf32>
    %246 = vector.broadcast %213 : vector<1x32xf32> to vector<16x32xf32>
    %247 = arith.addf %245, %246 : vector<16x32xf32>
    %cst_105 = arith.constant 0.000000e+00 : f32
    %248 = vector.broadcast %cst_105 : f32 to vector<16x32xf32>
    %249 = arith.maximumf %247, %248 : vector<16x32xf32>
    %cst_106 = arith.constant 9.99999974E-6 : f32
    %250 = vector.broadcast %cst_106 : f32 to vector<16x32xf32>
    %251 = arith.addf %249, %250 : vector<16x32xf32>
    %c5_i32 = arith.constant 5 : i32
    %252 = arith.index_cast %c5_i32 : i32 to index
    %c0_107 = arith.constant 0 : index
    %c0_108 = arith.constant 0 : index
    %253 = vector.load %arg2[%252, %c0_107, %c0_108] : memref<8x32x32xbf16, #tpu.memory_space<vmem>>, vector<1x32x32xbf16>
    %254 = vector.shape_cast %253 : vector<1x32x32xbf16> to vector<32x32xbf16>
    %255 = arith.index_cast %c5_i32 : i32 to index
    %c0_109 = arith.constant 0 : index
    %c0_110 = arith.constant 0 : index
    %256 = vector.load %arg3[%255, %c0_109, %c0_110] : memref<8x1x32xf32, #tpu.memory_space<vmem>>, vector<1x1x32xf32>
    %257 = vector.shape_cast %256 : vector<1x1x32xf32> to vector<1x32xf32>
    %258 = arith.index_cast %c5_i32 : i32 to index
    %c0_111 = arith.constant 0 : index
    %c0_112 = arith.constant 0 : index
    %259 = vector.load %arg4[%258, %c0_111, %c0_112] : memref<8x32x32xbf16, #tpu.memory_space<vmem>>, vector<1x32x32xbf16>
    %260 = vector.shape_cast %259 : vector<1x32x32xbf16> to vector<32x32xbf16>
    %261 = arith.index_cast %c5_i32 : i32 to index
    %c0_113 = arith.constant 0 : index
    %c0_114 = arith.constant 0 : index
    %262 = vector.load %arg5[%261, %c0_113, %c0_114] : memref<8x1x32xf32, #tpu.memory_space<vmem>>, vector<1x1x32xf32>
    %263 = vector.shape_cast %262 : vector<1x1x32xf32> to vector<1x32xf32>
    %cst_115 = arith.constant 0.000000e+00 : f32
    %264 = vector.broadcast %cst_115 : f32 to vector<16x32xf32>
    %265 = arith.maximumf %251, %264 : vector<16x32xf32>
    %cst_116 = arith.constant 9.99999974E-6 : f32
    %266 = vector.broadcast %cst_116 : f32 to vector<16x32xf32>
    %267 = arith.addf %265, %266 : vector<16x32xf32>
    %cst_117 = arith.constant 1.000000e+02 : f32
    %268 = vector.broadcast %cst_117 : f32 to vector<16x32xf32>
    %269 = arith.minimumf %267, %268 : vector<16x32xf32>
    %270 = arith.truncf %269 : vector<16x32xf32> to vector<16x32xbf16>
    %cst_118 = arith.constant dense<0.000000e+00> : vector<16x32xf32>
    %271 = tpu.matmul %0, %270, %cst_118 {dimension_numbers = #tpu.dot_dimension_numbers<[1], [0], [0], [1], [0, 0, 1, 1], [], []>} : vector<16x16xbf16>, vector<16x32xbf16>, vector<16x32xf32> -> vector<16x32xf32>
    %cst_119 = arith.constant 1.000000e+02 : f32
    %272 = vector.broadcast %cst_119 : f32 to vector<16x32xf32>
    %273 = arith.minimumf %271, %272 : vector<16x32xf32>
    %274 = arith.mulf %273, %273 : vector<16x32xf32>
    %cst_120 = arith.constant dense<0.000000e+00> : vector<16xf32>
    %275 = vector.multi_reduction <add>, %274, %cst_120 [1] : vector<16x32xf32> to vector<16xf32>
    %276 = vector.shape_cast %275 : vector<16xf32> to vector<16x1xf32>
    %cst_121 = arith.constant 1.000000e-24 : f32
    %277 = vector.broadcast %cst_121 : f32 to vector<16x1xf32>
    %278 = arith.maximumf %276, %277 : vector<16x1xf32>
    %279 = math.rsqrt %278 : vector<16x1xf32>
    %280 = arith.mulf %251, %251 : vector<16x32xf32>
    %cst_122 = arith.constant dense<0.000000e+00> : vector<16xf32>
    %281 = vector.multi_reduction <add>, %280, %cst_122 [1] : vector<16x32xf32> to vector<16xf32>
    %282 = vector.shape_cast %281 : vector<16xf32> to vector<16x1xf32>
    %283 = math.sqrt %282 : vector<16x1xf32>
    %284 = arith.mulf %279, %283 : vector<16x1xf32>
    %285 = vector.broadcast %284 : vector<16x1xf32> to vector<16x32xf32>
    %286 = arith.mulf %273, %285 : vector<16x32xf32>
    %287 = arith.addf %286, %251 : vector<16x32xf32>
    %288 = arith.truncf %287 : vector<16x32xf32> to vector<16x32xbf16>
    %cst_123 = arith.constant dense<0.000000e+00> : vector<16x32xf32>
    %289 = tpu.matmul %288, %254, %cst_123 {dimension_numbers = #tpu.dot_dimension_numbers<[1], [0], [0], [1], [0, 0, 1, 1], [], []>} : vector<16x32xbf16>, vector<32x32xbf16>, vector<16x32xf32> -> vector<16x32xf32>
    %290 = vector.broadcast %257 : vector<1x32xf32> to vector<16x32xf32>
    %291 = arith.addf %289, %290 : vector<16x32xf32>
    %cst_124 = arith.constant 0.000000e+00 : f32
    %292 = vector.broadcast %cst_124 : f32 to vector<16x32xf32>
    %293 = arith.maximumf %291, %292 : vector<16x32xf32>
    %294 = arith.truncf %293 : vector<16x32xf32> to vector<16x32xbf16>
    %cst_125 = arith.constant dense<0.000000e+00> : vector<16x32xf32>
    %295 = tpu.matmul %294, %260, %cst_125 {dimension_numbers = #tpu.dot_dimension_numbers<[1], [0], [0], [1], [0, 0, 1, 1], [], []>} : vector<16x32xbf16>, vector<32x32xbf16>, vector<16x32xf32> -> vector<16x32xf32>
    %296 = vector.broadcast %263 : vector<1x32xf32> to vector<16x32xf32>
    %297 = arith.addf %295, %296 : vector<16x32xf32>
    %cst_126 = arith.constant 0.000000e+00 : f32
    %298 = vector.broadcast %cst_126 : f32 to vector<16x32xf32>
    %299 = arith.maximumf %297, %298 : vector<16x32xf32>
    %cst_127 = arith.constant 9.99999974E-6 : f32
    %300 = vector.broadcast %cst_127 : f32 to vector<16x32xf32>
    %301 = arith.addf %299, %300 : vector<16x32xf32>
    %c6_i32 = arith.constant 6 : i32
    %302 = arith.index_cast %c6_i32 : i32 to index
    %c0_128 = arith.constant 0 : index
    %c0_129 = arith.constant 0 : index
    %303 = vector.load %arg2[%302, %c0_128, %c0_129] : memref<8x32x32xbf16, #tpu.memory_space<vmem>>, vector<1x32x32xbf16>
    %304 = vector.shape_cast %303 : vector<1x32x32xbf16> to vector<32x32xbf16>
    %305 = arith.index_cast %c6_i32 : i32 to index
    %c0_130 = arith.constant 0 : index
    %c0_131 = arith.constant 0 : index
    %306 = vector.load %arg3[%305, %c0_130, %c0_131] : memref<8x1x32xf32, #tpu.memory_space<vmem>>, vector<1x1x32xf32>
    %307 = vector.shape_cast %306 : vector<1x1x32xf32> to vector<1x32xf32>
    %308 = arith.index_cast %c6_i32 : i32 to index
    %c0_132 = arith.constant 0 : index
    %c0_133 = arith.constant 0 : index
    %309 = vector.load %arg4[%308, %c0_132, %c0_133] : memref<8x32x32xbf16, #tpu.memory_space<vmem>>, vector<1x32x32xbf16>
    %310 = vector.shape_cast %309 : vector<1x32x32xbf16> to vector<32x32xbf16>
    %311 = arith.index_cast %c6_i32 : i32 to index
    %c0_134 = arith.constant 0 : index
    %c0_135 = arith.constant 0 : index
    %312 = vector.load %arg5[%311, %c0_134, %c0_135] : memref<8x1x32xf32, #tpu.memory_space<vmem>>, vector<1x1x32xf32>
    %313 = vector.shape_cast %312 : vector<1x1x32xf32> to vector<1x32xf32>
    %cst_136 = arith.constant 0.000000e+00 : f32
    %314 = vector.broadcast %cst_136 : f32 to vector<16x32xf32>
    %315 = arith.maximumf %301, %314 : vector<16x32xf32>
    %cst_137 = arith.constant 9.99999974E-6 : f32
    %316 = vector.broadcast %cst_137 : f32 to vector<16x32xf32>
    %317 = arith.addf %315, %316 : vector<16x32xf32>
    %cst_138 = arith.constant 1.000000e+02 : f32
    %318 = vector.broadcast %cst_138 : f32 to vector<16x32xf32>
    %319 = arith.minimumf %317, %318 : vector<16x32xf32>
    %320 = arith.truncf %319 : vector<16x32xf32> to vector<16x32xbf16>
    %cst_139 = arith.constant dense<0.000000e+00> : vector<16x32xf32>
    %321 = tpu.matmul %0, %320, %cst_139 {dimension_numbers = #tpu.dot_dimension_numbers<[1], [0], [0], [1], [0, 0, 1, 1], [], []>} : vector<16x16xbf16>, vector<16x32xbf16>, vector<16x32xf32> -> vector<16x32xf32>
    %cst_140 = arith.constant 1.000000e+02 : f32
    %322 = vector.broadcast %cst_140 : f32 to vector<16x32xf32>
    %323 = arith.minimumf %321, %322 : vector<16x32xf32>
    %324 = arith.mulf %323, %323 : vector<16x32xf32>
    %cst_141 = arith.constant dense<0.000000e+00> : vector<16xf32>
    %325 = vector.multi_reduction <add>, %324, %cst_141 [1] : vector<16x32xf32> to vector<16xf32>
    %326 = vector.shape_cast %325 : vector<16xf32> to vector<16x1xf32>
    %cst_142 = arith.constant 1.000000e-24 : f32
    %327 = vector.broadcast %cst_142 : f32 to vector<16x1xf32>
    %328 = arith.maximumf %326, %327 : vector<16x1xf32>
    %329 = math.rsqrt %328 : vector<16x1xf32>
    %330 = arith.mulf %301, %301 : vector<16x32xf32>
    %cst_143 = arith.constant dense<0.000000e+00> : vector<16xf32>
    %331 = vector.multi_reduction <add>, %330, %cst_143 [1] : vector<16x32xf32> to vector<16xf32>
    %332 = vector.shape_cast %331 : vector<16xf32> to vector<16x1xf32>
    %333 = math.sqrt %332 : vector<16x1xf32>
    %334 = arith.mulf %329, %333 : vector<16x1xf32>
    %335 = vector.broadcast %334 : vector<16x1xf32> to vector<16x32xf32>
    %336 = arith.mulf %323, %335 : vector<16x32xf32>
    %337 = arith.addf %336, %301 : vector<16x32xf32>
    %338 = arith.truncf %337 : vector<16x32xf32> to vector<16x32xbf16>
    %cst_144 = arith.constant dense<0.000000e+00> : vector<16x32xf32>
    %339 = tpu.matmul %338, %304, %cst_144 {dimension_numbers = #tpu.dot_dimension_numbers<[1], [0], [0], [1], [0, 0, 1, 1], [], []>} : vector<16x32xbf16>, vector<32x32xbf16>, vector<16x32xf32> -> vector<16x32xf32>
    %340 = vector.broadcast %307 : vector<1x32xf32> to vector<16x32xf32>
    %341 = arith.addf %339, %340 : vector<16x32xf32>
    %cst_145 = arith.constant 0.000000e+00 : f32
    %342 = vector.broadcast %cst_145 : f32 to vector<16x32xf32>
    %343 = arith.maximumf %341, %342 : vector<16x32xf32>
    %344 = arith.truncf %343 : vector<16x32xf32> to vector<16x32xbf16>
    %cst_146 = arith.constant dense<0.000000e+00> : vector<16x32xf32>
    %345 = tpu.matmul %344, %310, %cst_146 {dimension_numbers = #tpu.dot_dimension_numbers<[1], [0], [0], [1], [0, 0, 1, 1], [], []>} : vector<16x32xbf16>, vector<32x32xbf16>, vector<16x32xf32> -> vector<16x32xf32>
    %346 = vector.broadcast %313 : vector<1x32xf32> to vector<16x32xf32>
    %347 = arith.addf %345, %346 : vector<16x32xf32>
    %cst_147 = arith.constant 0.000000e+00 : f32
    %348 = vector.broadcast %cst_147 : f32 to vector<16x32xf32>
    %349 = arith.maximumf %347, %348 : vector<16x32xf32>
    %cst_148 = arith.constant 9.99999974E-6 : f32
    %350 = vector.broadcast %cst_148 : f32 to vector<16x32xf32>
    %351 = arith.addf %349, %350 : vector<16x32xf32>
    %c7_i32 = arith.constant 7 : i32
    %c7 = arith.constant 7 : index
    %c0_149 = arith.constant 0 : index
    %c0_150 = arith.constant 0 : index
    %352 = vector.load %arg2[%c7, %c0_149, %c0_150] : memref<8x32x32xbf16, #tpu.memory_space<vmem>>, vector<1x32x32xbf16>
    %353 = vector.shape_cast %352 : vector<1x32x32xbf16> to vector<32x32xbf16>
    %c7_151 = arith.constant 7 : index
    %c0_152 = arith.constant 0 : index
    %c0_153 = arith.constant 0 : index
    %354 = vector.load %arg3[%c7_151, %c0_152, %c0_153] : memref<8x1x32xf32, #tpu.memory_space<vmem>>, vector<1x1x32xf32>
    %355 = vector.shape_cast %354 : vector<1x1x32xf32> to vector<1x32xf32>
    %c7_154 = arith.constant 7 : index
    %c0_155 = arith.constant 0 : index
    %c0_156 = arith.constant 0 : index
    %356 = vector.load %arg4[%c7_154, %c0_155, %c0_156] : memref<8x32x32xbf16, #tpu.memory_space<vmem>>, vector<1x32x32xbf16>
    %357 = vector.shape_cast %356 : vector<1x32x32xbf16> to vector<32x32xbf16>
    %c7_157 = arith.constant 7 : index
    %c0_158 = arith.constant 0 : index
    %c0_159 = arith.constant 0 : index
    %358 = vector.load %arg5[%c7_157, %c0_158, %c0_159] : memref<8x1x32xf32, #tpu.memory_space<vmem>>, vector<1x1x32xf32>
    %359 = vector.shape_cast %358 : vector<1x1x32xf32> to vector<1x32xf32>
    %cst_160 = arith.constant 0.000000e+00 : f32
    %360 = vector.broadcast %cst_160 : f32 to vector<16x32xf32>
    %361 = arith.maximumf %351, %360 : vector<16x32xf32>
    %cst_161 = arith.constant 9.99999974E-6 : f32
    %362 = vector.broadcast %cst_161 : f32 to vector<16x32xf32>
    %363 = arith.addf %361, %362 : vector<16x32xf32>
    %cst_162 = arith.constant 1.000000e+02 : f32
    %364 = vector.broadcast %cst_162 : f32 to vector<16x32xf32>
    %365 = arith.minimumf %363, %364 : vector<16x32xf32>
    %366 = arith.truncf %365 : vector<16x32xf32> to vector<16x32xbf16>
    %cst_163 = arith.constant dense<0.000000e+00> : vector<16x32xf32>
    %367 = tpu.matmul %0, %366, %cst_163 {dimension_numbers = #tpu.dot_dimension_numbers<[1], [0], [0], [1], [0, 0, 1, 1], [], []>} : vector<16x16xbf16>, vector<16x32xbf16>, vector<16x32xf32> -> vector<16x32xf32>
    %cst_164 = arith.constant 1.000000e+02 : f32
    %368 = vector.broadcast %cst_164 : f32 to vector<16x32xf32>
    %369 = arith.minimumf %367, %368 : vector<16x32xf32>
    %370 = arith.mulf %369, %369 : vector<16x32xf32>
    %cst_165 = arith.constant dense<0.000000e+00> : vector<16xf32>
    %371 = vector.multi_reduction <add>, %370, %cst_165 [1] : vector<16x32xf32> to vector<16xf32>
    %372 = vector.shape_cast %371 : vector<16xf32> to vector<16x1xf32>
    %cst_166 = arith.constant 1.000000e-24 : f32
    %373 = vector.broadcast %cst_166 : f32 to vector<16x1xf32>
    %374 = arith.maximumf %372, %373 : vector<16x1xf32>
    %375 = math.rsqrt %374 : vector<16x1xf32>
    %376 = arith.mulf %351, %351 : vector<16x32xf32>
    %cst_167 = arith.constant dense<0.000000e+00> : vector<16xf32>
    %377 = vector.multi_reduction <add>, %376, %cst_167 [1] : vector<16x32xf32> to vector<16xf32>
    %378 = vector.shape_cast %377 : vector<16xf32> to vector<16x1xf32>
    %379 = math.sqrt %378 : vector<16x1xf32>
    %380 = arith.mulf %375, %379 : vector<16x1xf32>
    %381 = vector.broadcast %380 : vector<16x1xf32> to vector<16x32xf32>
    %382 = arith.mulf %369, %381 : vector<16x32xf32>
    %383 = arith.addf %382, %351 : vector<16x32xf32>
    %384 = arith.truncf %383 : vector<16x32xf32> to vector<16x32xbf16>
    %cst_168 = arith.constant dense<0.000000e+00> : vector<16x32xf32>
    %385 = tpu.matmul %384, %353, %cst_168 {dimension_numbers = #tpu.dot_dimension_numbers<[1], [0], [0], [1], [0, 0, 1, 1], [], []>} : vector<16x32xbf16>, vector<32x32xbf16>, vector<16x32xf32> -> vector<16x32xf32>
    %386 = vector.broadcast %355 : vector<1x32xf32> to vector<16x32xf32>
    %387 = arith.addf %385, %386 : vector<16x32xf32>
    %cst_169 = arith.constant 0.000000e+00 : f32
    %388 = vector.broadcast %cst_169 : f32 to vector<16x32xf32>
    %389 = arith.maximumf %387, %388 : vector<16x32xf32>
    %390 = arith.truncf %389 : vector<16x32xf32> to vector<16x32xbf16>
    %cst_170 = arith.constant dense<0.000000e+00> : vector<16x32xf32>
    %391 = tpu.matmul %390, %357, %cst_170 {dimension_numbers = #tpu.dot_dimension_numbers<[1], [0], [0], [1], [0, 0, 1, 1], [], []>} : vector<16x32xbf16>, vector<32x32xbf16>, vector<16x32xf32> -> vector<16x32xf32>
    %392 = vector.broadcast %359 : vector<1x32xf32> to vector<16x32xf32>
    %393 = arith.addf %391, %392 : vector<16x32xf32>
    %394 = arith.addf %393, %1 : vector<16x32xf32>
    %395 = arith.truncf %394 : vector<16x32xf32> to vector<16x32xbf16>
    %c0_171 = arith.constant 0 : index
    %c0_172 = arith.constant 0 : index
    %396 = vector.load %arg6[%c0_171, %c0_172] : memref<32x64xbf16, #tpu.memory_space<vmem>>, vector<32x64xbf16>
    %cst_173 = arith.constant dense<0.000000e+00> : vector<16x64xf32>
    %397 = tpu.matmul %395, %396, %cst_173 {dimension_numbers = #tpu.dot_dimension_numbers<[1], [0], [0], [1], [0, 0, 1, 1], [], []>} : vector<16x32xbf16>, vector<32x64xbf16>, vector<16x64xf32> -> vector<16x64xf32>
    %c0_174 = arith.constant 0 : index
    %c0_175 = arith.constant 0 : index
    %398 = vector.load %arg7[%c0_174, %c0_175] : memref<1x64xf32, #tpu.memory_space<vmem>>, vector<1x64xf32>
    %399 = vector.broadcast %398 : vector<1x64xf32> to vector<16x64xf32>
    %400 = arith.addf %397, %399 : vector<16x64xf32>
    %cst_176 = arith.constant 0.000000e+00 : f32
    %401 = vector.broadcast %cst_176 : f32 to vector<16x64xf32>
    %402 = arith.maximumf %400, %401 : vector<16x64xf32>
    %cst_177 = arith.constant 9.99999974E-6 : f32
    %403 = vector.broadcast %cst_177 : f32 to vector<16x64xf32>
    %404 = arith.addf %402, %403 : vector<16x64xf32>
    %c0_i32_178 = arith.constant 0 : i32
    %405 = arith.index_cast %c0_i32_178 : i32 to index
    %c0_179 = arith.constant 0 : index
    %c0_180 = arith.constant 0 : index
    %406 = vector.load %arg8[%405, %c0_179, %c0_180] : memref<8x64x64xbf16, #tpu.memory_space<vmem>>, vector<1x64x64xbf16>
    %407 = vector.shape_cast %406 : vector<1x64x64xbf16> to vector<64x64xbf16>
    %408 = arith.index_cast %c0_i32_178 : i32 to index
    %c0_181 = arith.constant 0 : index
    %c0_182 = arith.constant 0 : index
    %409 = vector.load %arg9[%408, %c0_181, %c0_182] : memref<8x1x64xf32, #tpu.memory_space<vmem>>, vector<1x1x64xf32>
    %410 = vector.shape_cast %409 : vector<1x1x64xf32> to vector<1x64xf32>
    %411 = arith.index_cast %c0_i32_178 : i32 to index
    %c0_183 = arith.constant 0 : index
    %c0_184 = arith.constant 0 : index
    %412 = vector.load %arg10[%411, %c0_183, %c0_184] : memref<8x64x64xbf16, #tpu.memory_space<vmem>>, vector<1x64x64xbf16>
    %413 = vector.shape_cast %412 : vector<1x64x64xbf16> to vector<64x64xbf16>
    %414 = arith.index_cast %c0_i32_178 : i32 to index
    %c0_185 = arith.constant 0 : index
    %c0_186 = arith.constant 0 : index
    %415 = vector.load %arg11[%414, %c0_185, %c0_186] : memref<8x1x64xf32, #tpu.memory_space<vmem>>, vector<1x1x64xf32>
    %416 = vector.shape_cast %415 : vector<1x1x64xf32> to vector<1x64xf32>
    %cst_187 = arith.constant 0.000000e+00 : f32
    %417 = vector.broadcast %cst_187 : f32 to vector<16x64xf32>
    %418 = arith.maximumf %404, %417 : vector<16x64xf32>
    %cst_188 = arith.constant 9.99999974E-6 : f32
    %419 = vector.broadcast %cst_188 : f32 to vector<16x64xf32>
    %420 = arith.addf %418, %419 : vector<16x64xf32>
    %cst_189 = arith.constant 1.000000e+02 : f32
    %421 = vector.broadcast %cst_189 : f32 to vector<16x64xf32>
    %422 = arith.minimumf %420, %421 : vector<16x64xf32>
    %423 = arith.truncf %422 : vector<16x64xf32> to vector<16x64xbf16>
    %cst_190 = arith.constant dense<0.000000e+00> : vector<16x64xf32>
    %424 = tpu.matmul %0, %423, %cst_190 {dimension_numbers = #tpu.dot_dimension_numbers<[1], [0], [0], [1], [0, 0, 1, 1], [], []>} : vector<16x16xbf16>, vector<16x64xbf16>, vector<16x64xf32> -> vector<16x64xf32>
    %cst_191 = arith.constant 1.000000e+02 : f32
    %425 = vector.broadcast %cst_191 : f32 to vector<16x64xf32>
    %426 = arith.minimumf %424, %425 : vector<16x64xf32>
    %427 = arith.mulf %426, %426 : vector<16x64xf32>
    %cst_192 = arith.constant dense<0.000000e+00> : vector<16xf32>
    %428 = vector.multi_reduction <add>, %427, %cst_192 [1] : vector<16x64xf32> to vector<16xf32>
    %429 = vector.shape_cast %428 : vector<16xf32> to vector<16x1xf32>
    %cst_193 = arith.constant 1.000000e-24 : f32
    %430 = vector.broadcast %cst_193 : f32 to vector<16x1xf32>
    %431 = arith.maximumf %429, %430 : vector<16x1xf32>
    %432 = math.rsqrt %431 : vector<16x1xf32>
    %433 = arith.mulf %404, %404 : vector<16x64xf32>
    %cst_194 = arith.constant dense<0.000000e+00> : vector<16xf32>
    %434 = vector.multi_reduction <add>, %433, %cst_194 [1] : vector<16x64xf32> to vector<16xf32>
    %435 = vector.shape_cast %434 : vector<16xf32> to vector<16x1xf32>
    %436 = math.sqrt %435 : vector<16x1xf32>
    %437 = arith.mulf %432, %436 : vector<16x1xf32>
    %438 = vector.broadcast %437 : vector<16x1xf32> to vector<16x64xf32>
    %439 = arith.mulf %426, %438 : vector<16x64xf32>
    %440 = arith.addf %439, %404 : vector<16x64xf32>
    %441 = arith.truncf %440 : vector<16x64xf32> to vector<16x64xbf16>
    %cst_195 = arith.constant dense<0.000000e+00> : vector<16x64xf32>
    %442 = tpu.matmul %441, %407, %cst_195 {dimension_numbers = #tpu.dot_dimension_numbers<[1], [0], [0], [1], [0, 0, 1, 1], [], []>} : vector<16x64xbf16>, vector<64x64xbf16>, vector<16x64xf32> -> vector<16x64xf32>
    %443 = vector.broadcast %410 : vector<1x64xf32> to vector<16x64xf32>
    %444 = arith.addf %442, %443 : vector<16x64xf32>
    %cst_196 = arith.constant 0.000000e+00 : f32
    %445 = vector.broadcast %cst_196 : f32 to vector<16x64xf32>
    %446 = arith.maximumf %444, %445 : vector<16x64xf32>
    %447 = arith.truncf %446 : vector<16x64xf32> to vector<16x64xbf16>
    %cst_197 = arith.constant dense<0.000000e+00> : vector<16x64xf32>
    %448 = tpu.matmul %447, %413, %cst_197 {dimension_numbers = #tpu.dot_dimension_numbers<[1], [0], [0], [1], [0, 0, 1, 1], [], []>} : vector<16x64xbf16>, vector<64x64xbf16>, vector<16x64xf32> -> vector<16x64xf32>
    %449 = vector.broadcast %416 : vector<1x64xf32> to vector<16x64xf32>
    %450 = arith.addf %448, %449 : vector<16x64xf32>
    %cst_198 = arith.constant 0.000000e+00 : f32
    %451 = vector.broadcast %cst_198 : f32 to vector<16x64xf32>
    %452 = arith.maximumf %450, %451 : vector<16x64xf32>
    %cst_199 = arith.constant 9.99999974E-6 : f32
    %453 = vector.broadcast %cst_199 : f32 to vector<16x64xf32>
    %454 = arith.addf %452, %453 : vector<16x64xf32>
    %c1_i32_200 = arith.constant 1 : i32
    %455 = arith.index_cast %c1_i32_200 : i32 to index
    %c0_201 = arith.constant 0 : index
    %c0_202 = arith.constant 0 : index
    %456 = vector.load %arg8[%455, %c0_201, %c0_202] : memref<8x64x64xbf16, #tpu.memory_space<vmem>>, vector<1x64x64xbf16>
    %457 = vector.shape_cast %456 : vector<1x64x64xbf16> to vector<64x64xbf16>
    %458 = arith.index_cast %c1_i32_200 : i32 to index
    %c0_203 = arith.constant 0 : index
    %c0_204 = arith.constant 0 : index
    %459 = vector.load %arg9[%458, %c0_203, %c0_204] : memref<8x1x64xf32, #tpu.memory_space<vmem>>, vector<1x1x64xf32>
    %460 = vector.shape_cast %459 : vector<1x1x64xf32> to vector<1x64xf32>
    %461 = arith.index_cast %c1_i32_200 : i32 to index
    %c0_205 = arith.constant 0 : index
    %c0_206 = arith.constant 0 : index
    %462 = vector.load %arg10[%461, %c0_205, %c0_206] : memref<8x64x64xbf16, #tpu.memory_space<vmem>>, vector<1x64x64xbf16>
    %463 = vector.shape_cast %462 : vector<1x64x64xbf16> to vector<64x64xbf16>
    %464 = arith.index_cast %c1_i32_200 : i32 to index
    %c0_207 = arith.constant 0 : index
    %c0_208 = arith.constant 0 : index
    %465 = vector.load %arg11[%464, %c0_207, %c0_208] : memref<8x1x64xf32, #tpu.memory_space<vmem>>, vector<1x1x64xf32>
    %466 = vector.shape_cast %465 : vector<1x1x64xf32> to vector<1x64xf32>
    %cst_209 = arith.constant 0.000000e+00 : f32
    %467 = vector.broadcast %cst_209 : f32 to vector<16x64xf32>
    %468 = arith.maximumf %454, %467 : vector<16x64xf32>
    %cst_210 = arith.constant 9.99999974E-6 : f32
    %469 = vector.broadcast %cst_210 : f32 to vector<16x64xf32>
    %470 = arith.addf %468, %469 : vector<16x64xf32>
    %cst_211 = arith.constant 1.000000e+02 : f32
    %471 = vector.broadcast %cst_211 : f32 to vector<16x64xf32>
    %472 = arith.minimumf %470, %471 : vector<16x64xf32>
    %473 = arith.truncf %472 : vector<16x64xf32> to vector<16x64xbf16>
    %cst_212 = arith.constant dense<0.000000e+00> : vector<16x64xf32>
    %474 = tpu.matmul %0, %473, %cst_212 {dimension_numbers = #tpu.dot_dimension_numbers<[1], [0], [0], [1], [0, 0, 1, 1], [], []>} : vector<16x16xbf16>, vector<16x64xbf16>, vector<16x64xf32> -> vector<16x64xf32>
    %cst_213 = arith.constant 1.000000e+02 : f32
    %475 = vector.broadcast %cst_213 : f32 to vector<16x64xf32>
    %476 = arith.minimumf %474, %475 : vector<16x64xf32>
    %477 = arith.mulf %476, %476 : vector<16x64xf32>
    %cst_214 = arith.constant dense<0.000000e+00> : vector<16xf32>
    %478 = vector.multi_reduction <add>, %477, %cst_214 [1] : vector<16x64xf32> to vector<16xf32>
    %479 = vector.shape_cast %478 : vector<16xf32> to vector<16x1xf32>
    %cst_215 = arith.constant 1.000000e-24 : f32
    %480 = vector.broadcast %cst_215 : f32 to vector<16x1xf32>
    %481 = arith.maximumf %479, %480 : vector<16x1xf32>
    %482 = math.rsqrt %481 : vector<16x1xf32>
    %483 = arith.mulf %454, %454 : vector<16x64xf32>
    %cst_216 = arith.constant dense<0.000000e+00> : vector<16xf32>
    %484 = vector.multi_reduction <add>, %483, %cst_216 [1] : vector<16x64xf32> to vector<16xf32>
    %485 = vector.shape_cast %484 : vector<16xf32> to vector<16x1xf32>
    %486 = math.sqrt %485 : vector<16x1xf32>
    %487 = arith.mulf %482, %486 : vector<16x1xf32>
    %488 = vector.broadcast %487 : vector<16x1xf32> to vector<16x64xf32>
    %489 = arith.mulf %476, %488 : vector<16x64xf32>
    %490 = arith.addf %489, %454 : vector<16x64xf32>
    %491 = arith.truncf %490 : vector<16x64xf32> to vector<16x64xbf16>
    %cst_217 = arith.constant dense<0.000000e+00> : vector<16x64xf32>
    %492 = tpu.matmul %491, %457, %cst_217 {dimension_numbers = #tpu.dot_dimension_numbers<[1], [0], [0], [1], [0, 0, 1, 1], [], []>} : vector<16x64xbf16>, vector<64x64xbf16>, vector<16x64xf32> -> vector<16x64xf32>
    %493 = vector.broadcast %460 : vector<1x64xf32> to vector<16x64xf32>
    %494 = arith.addf %492, %493 : vector<16x64xf32>
    %cst_218 = arith.constant 0.000000e+00 : f32
    %495 = vector.broadcast %cst_218 : f32 to vector<16x64xf32>
    %496 = arith.maximumf %494, %495 : vector<16x64xf32>
    %497 = arith.truncf %496 : vector<16x64xf32> to vector<16x64xbf16>
    %cst_219 = arith.constant dense<0.000000e+00> : vector<16x64xf32>
    %498 = tpu.matmul %497, %463, %cst_219 {dimension_numbers = #tpu.dot_dimension_numbers<[1], [0], [0], [1], [0, 0, 1, 1], [], []>} : vector<16x64xbf16>, vector<64x64xbf16>, vector<16x64xf32> -> vector<16x64xf32>
    %499 = vector.broadcast %466 : vector<1x64xf32> to vector<16x64xf32>
    %500 = arith.addf %498, %499 : vector<16x64xf32>
    %cst_220 = arith.constant 0.000000e+00 : f32
    %501 = vector.broadcast %cst_220 : f32 to vector<16x64xf32>
    %502 = arith.maximumf %500, %501 : vector<16x64xf32>
    %cst_221 = arith.constant 9.99999974E-6 : f32
    %503 = vector.broadcast %cst_221 : f32 to vector<16x64xf32>
    %504 = arith.addf %502, %503 : vector<16x64xf32>
    %c2_i32_222 = arith.constant 2 : i32
    %505 = arith.index_cast %c2_i32_222 : i32 to index
    %c0_223 = arith.constant 0 : index
    %c0_224 = arith.constant 0 : index
    %506 = vector.load %arg8[%505, %c0_223, %c0_224] : memref<8x64x64xbf16, #tpu.memory_space<vmem>>, vector<1x64x64xbf16>
    %507 = vector.shape_cast %506 : vector<1x64x64xbf16> to vector<64x64xbf16>
    %508 = arith.index_cast %c2_i32_222 : i32 to index
    %c0_225 = arith.constant 0 : index
    %c0_226 = arith.constant 0 : index
    %509 = vector.load %arg9[%508, %c0_225, %c0_226] : memref<8x1x64xf32, #tpu.memory_space<vmem>>, vector<1x1x64xf32>
    %510 = vector.shape_cast %509 : vector<1x1x64xf32> to vector<1x64xf32>
    %511 = arith.index_cast %c2_i32_222 : i32 to index
    %c0_227 = arith.constant 0 : index
    %c0_228 = arith.constant 0 : index
    %512 = vector.load %arg10[%511, %c0_227, %c0_228] : memref<8x64x64xbf16, #tpu.memory_space<vmem>>, vector<1x64x64xbf16>
    %513 = vector.shape_cast %512 : vector<1x64x64xbf16> to vector<64x64xbf16>
    %514 = arith.index_cast %c2_i32_222 : i32 to index
    %c0_229 = arith.constant 0 : index
    %c0_230 = arith.constant 0 : index
    %515 = vector.load %arg11[%514, %c0_229, %c0_230] : memref<8x1x64xf32, #tpu.memory_space<vmem>>, vector<1x1x64xf32>
    %516 = vector.shape_cast %515 : vector<1x1x64xf32> to vector<1x64xf32>
    %cst_231 = arith.constant 0.000000e+00 : f32
    %517 = vector.broadcast %cst_231 : f32 to vector<16x64xf32>
    %518 = arith.maximumf %504, %517 : vector<16x64xf32>
    %cst_232 = arith.constant 9.99999974E-6 : f32
    %519 = vector.broadcast %cst_232 : f32 to vector<16x64xf32>
    %520 = arith.addf %518, %519 : vector<16x64xf32>
    %cst_233 = arith.constant 1.000000e+02 : f32
    %521 = vector.broadcast %cst_233 : f32 to vector<16x64xf32>
    %522 = arith.minimumf %520, %521 : vector<16x64xf32>
    %523 = arith.truncf %522 : vector<16x64xf32> to vector<16x64xbf16>
    %cst_234 = arith.constant dense<0.000000e+00> : vector<16x64xf32>
    %524 = tpu.matmul %0, %523, %cst_234 {dimension_numbers = #tpu.dot_dimension_numbers<[1], [0], [0], [1], [0, 0, 1, 1], [], []>} : vector<16x16xbf16>, vector<16x64xbf16>, vector<16x64xf32> -> vector<16x64xf32>
    %cst_235 = arith.constant 1.000000e+02 : f32
    %525 = vector.broadcast %cst_235 : f32 to vector<16x64xf32>
    %526 = arith.minimumf %524, %525 : vector<16x64xf32>
    %527 = arith.mulf %526, %526 : vector<16x64xf32>
    %cst_236 = arith.constant dense<0.000000e+00> : vector<16xf32>
    %528 = vector.multi_reduction <add>, %527, %cst_236 [1] : vector<16x64xf32> to vector<16xf32>
    %529 = vector.shape_cast %528 : vector<16xf32> to vector<16x1xf32>
    %cst_237 = arith.constant 1.000000e-24 : f32
    %530 = vector.broadcast %cst_237 : f32 to vector<16x1xf32>
    %531 = arith.maximumf %529, %530 : vector<16x1xf32>
    %532 = math.rsqrt %531 : vector<16x1xf32>
    %533 = arith.mulf %504, %504 : vector<16x64xf32>
    %cst_238 = arith.constant dense<0.000000e+00> : vector<16xf32>
    %534 = vector.multi_reduction <add>, %533, %cst_238 [1] : vector<16x64xf32> to vector<16xf32>
    %535 = vector.shape_cast %534 : vector<16xf32> to vector<16x1xf32>
    %536 = math.sqrt %535 : vector<16x1xf32>
    %537 = arith.mulf %532, %536 : vector<16x1xf32>
    %538 = vector.broadcast %537 : vector<16x1xf32> to vector<16x64xf32>
    %539 = arith.mulf %526, %538 : vector<16x64xf32>
    %540 = arith.addf %539, %504 : vector<16x64xf32>
    %541 = arith.truncf %540 : vector<16x64xf32> to vector<16x64xbf16>
    %cst_239 = arith.constant dense<0.000000e+00> : vector<16x64xf32>
    %542 = tpu.matmul %541, %507, %cst_239 {dimension_numbers = #tpu.dot_dimension_numbers<[1], [0], [0], [1], [0, 0, 1, 1], [], []>} : vector<16x64xbf16>, vector<64x64xbf16>, vector<16x64xf32> -> vector<16x64xf32>
    %543 = vector.broadcast %510 : vector<1x64xf32> to vector<16x64xf32>
    %544 = arith.addf %542, %543 : vector<16x64xf32>
    %cst_240 = arith.constant 0.000000e+00 : f32
    %545 = vector.broadcast %cst_240 : f32 to vector<16x64xf32>
    %546 = arith.maximumf %544, %545 : vector<16x64xf32>
    %547 = arith.truncf %546 : vector<16x64xf32> to vector<16x64xbf16>
    %cst_241 = arith.constant dense<0.000000e+00> : vector<16x64xf32>
    %548 = tpu.matmul %547, %513, %cst_241 {dimension_numbers = #tpu.dot_dimension_numbers<[1], [0], [0], [1], [0, 0, 1, 1], [], []>} : vector<16x64xbf16>, vector<64x64xbf16>, vector<16x64xf32> -> vector<16x64xf32>
    %549 = vector.broadcast %516 : vector<1x64xf32> to vector<16x64xf32>
    %550 = arith.addf %548, %549 : vector<16x64xf32>
    %cst_242 = arith.constant 0.000000e+00 : f32
    %551 = vector.broadcast %cst_242 : f32 to vector<16x64xf32>
    %552 = arith.maximumf %550, %551 : vector<16x64xf32>
    %cst_243 = arith.constant 9.99999974E-6 : f32
    %553 = vector.broadcast %cst_243 : f32 to vector<16x64xf32>
    %554 = arith.addf %552, %553 : vector<16x64xf32>
    %c3_i32_244 = arith.constant 3 : i32
    %555 = arith.index_cast %c3_i32_244 : i32 to index
    %c0_245 = arith.constant 0 : index
    %c0_246 = arith.constant 0 : index
    %556 = vector.load %arg8[%555, %c0_245, %c0_246] : memref<8x64x64xbf16, #tpu.memory_space<vmem>>, vector<1x64x64xbf16>
    %557 = vector.shape_cast %556 : vector<1x64x64xbf16> to vector<64x64xbf16>
    %558 = arith.index_cast %c3_i32_244 : i32 to index
    %c0_247 = arith.constant 0 : index
    %c0_248 = arith.constant 0 : index
    %559 = vector.load %arg9[%558, %c0_247, %c0_248] : memref<8x1x64xf32, #tpu.memory_space<vmem>>, vector<1x1x64xf32>
    %560 = vector.shape_cast %559 : vector<1x1x64xf32> to vector<1x64xf32>
    %561 = arith.index_cast %c3_i32_244 : i32 to index
    %c0_249 = arith.constant 0 : index
    %c0_250 = arith.constant 0 : index
    %562 = vector.load %arg10[%561, %c0_249, %c0_250] : memref<8x64x64xbf16, #tpu.memory_space<vmem>>, vector<1x64x64xbf16>
    %563 = vector.shape_cast %562 : vector<1x64x64xbf16> to vector<64x64xbf16>
    %564 = arith.index_cast %c3_i32_244 : i32 to index
    %c0_251 = arith.constant 0 : index
    %c0_252 = arith.constant 0 : index
    %565 = vector.load %arg11[%564, %c0_251, %c0_252] : memref<8x1x64xf32, #tpu.memory_space<vmem>>, vector<1x1x64xf32>
    %566 = vector.shape_cast %565 : vector<1x1x64xf32> to vector<1x64xf32>
    %cst_253 = arith.constant 0.000000e+00 : f32
    %567 = vector.broadcast %cst_253 : f32 to vector<16x64xf32>
    %568 = arith.maximumf %554, %567 : vector<16x64xf32>
    %cst_254 = arith.constant 9.99999974E-6 : f32
    %569 = vector.broadcast %cst_254 : f32 to vector<16x64xf32>
    %570 = arith.addf %568, %569 : vector<16x64xf32>
    %cst_255 = arith.constant 1.000000e+02 : f32
    %571 = vector.broadcast %cst_255 : f32 to vector<16x64xf32>
    %572 = arith.minimumf %570, %571 : vector<16x64xf32>
    %573 = arith.truncf %572 : vector<16x64xf32> to vector<16x64xbf16>
    %cst_256 = arith.constant dense<0.000000e+00> : vector<16x64xf32>
    %574 = tpu.matmul %0, %573, %cst_256 {dimension_numbers = #tpu.dot_dimension_numbers<[1], [0], [0], [1], [0, 0, 1, 1], [], []>} : vector<16x16xbf16>, vector<16x64xbf16>, vector<16x64xf32> -> vector<16x64xf32>
    %cst_257 = arith.constant 1.000000e+02 : f32
    %575 = vector.broadcast %cst_257 : f32 to vector<16x64xf32>
    %576 = arith.minimumf %574, %575 : vector<16x64xf32>
    %577 = arith.mulf %576, %576 : vector<16x64xf32>
    %cst_258 = arith.constant dense<0.000000e+00> : vector<16xf32>
    %578 = vector.multi_reduction <add>, %577, %cst_258 [1] : vector<16x64xf32> to vector<16xf32>
    %579 = vector.shape_cast %578 : vector<16xf32> to vector<16x1xf32>
    %cst_259 = arith.constant 1.000000e-24 : f32
    %580 = vector.broadcast %cst_259 : f32 to vector<16x1xf32>
    %581 = arith.maximumf %579, %580 : vector<16x1xf32>
    %582 = math.rsqrt %581 : vector<16x1xf32>
    %583 = arith.mulf %554, %554 : vector<16x64xf32>
    %cst_260 = arith.constant dense<0.000000e+00> : vector<16xf32>
    %584 = vector.multi_reduction <add>, %583, %cst_260 [1] : vector<16x64xf32> to vector<16xf32>
    %585 = vector.shape_cast %584 : vector<16xf32> to vector<16x1xf32>
    %586 = math.sqrt %585 : vector<16x1xf32>
    %587 = arith.mulf %582, %586 : vector<16x1xf32>
    %588 = vector.broadcast %587 : vector<16x1xf32> to vector<16x64xf32>
    %589 = arith.mulf %576, %588 : vector<16x64xf32>
    %590 = arith.addf %589, %554 : vector<16x64xf32>
    %591 = arith.truncf %590 : vector<16x64xf32> to vector<16x64xbf16>
    %cst_261 = arith.constant dense<0.000000e+00> : vector<16x64xf32>
    %592 = tpu.matmul %591, %557, %cst_261 {dimension_numbers = #tpu.dot_dimension_numbers<[1], [0], [0], [1], [0, 0, 1, 1], [], []>} : vector<16x64xbf16>, vector<64x64xbf16>, vector<16x64xf32> -> vector<16x64xf32>
    %593 = vector.broadcast %560 : vector<1x64xf32> to vector<16x64xf32>
    %594 = arith.addf %592, %593 : vector<16x64xf32>
    %cst_262 = arith.constant 0.000000e+00 : f32
    %595 = vector.broadcast %cst_262 : f32 to vector<16x64xf32>
    %596 = arith.maximumf %594, %595 : vector<16x64xf32>
    %597 = arith.truncf %596 : vector<16x64xf32> to vector<16x64xbf16>
    %cst_263 = arith.constant dense<0.000000e+00> : vector<16x64xf32>
    %598 = tpu.matmul %597, %563, %cst_263 {dimension_numbers = #tpu.dot_dimension_numbers<[1], [0], [0], [1], [0, 0, 1, 1], [], []>} : vector<16x64xbf16>, vector<64x64xbf16>, vector<16x64xf32> -> vector<16x64xf32>
    %599 = vector.broadcast %566 : vector<1x64xf32> to vector<16x64xf32>
    %600 = arith.addf %598, %599 : vector<16x64xf32>
    %cst_264 = arith.constant 0.000000e+00 : f32
    %601 = vector.broadcast %cst_264 : f32 to vector<16x64xf32>
    %602 = arith.maximumf %600, %601 : vector<16x64xf32>
    %cst_265 = arith.constant 9.99999974E-6 : f32
    %603 = vector.broadcast %cst_265 : f32 to vector<16x64xf32>
    %604 = arith.addf %602, %603 : vector<16x64xf32>
    %c4_i32_266 = arith.constant 4 : i32
    %605 = arith.index_cast %c4_i32_266 : i32 to index
    %c0_267 = arith.constant 0 : index
    %c0_268 = arith.constant 0 : index
    %606 = vector.load %arg8[%605, %c0_267, %c0_268] : memref<8x64x64xbf16, #tpu.memory_space<vmem>>, vector<1x64x64xbf16>
    %607 = vector.shape_cast %606 : vector<1x64x64xbf16> to vector<64x64xbf16>
    %608 = arith.index_cast %c4_i32_266 : i32 to index
    %c0_269 = arith.constant 0 : index
    %c0_270 = arith.constant 0 : index
    %609 = vector.load %arg9[%608, %c0_269, %c0_270] : memref<8x1x64xf32, #tpu.memory_space<vmem>>, vector<1x1x64xf32>
    %610 = vector.shape_cast %609 : vector<1x1x64xf32> to vector<1x64xf32>
    %611 = arith.index_cast %c4_i32_266 : i32 to index
    %c0_271 = arith.constant 0 : index
    %c0_272 = arith.constant 0 : index
    %612 = vector.load %arg10[%611, %c0_271, %c0_272] : memref<8x64x64xbf16, #tpu.memory_space<vmem>>, vector<1x64x64xbf16>
    %613 = vector.shape_cast %612 : vector<1x64x64xbf16> to vector<64x64xbf16>
    %614 = arith.index_cast %c4_i32_266 : i32 to index
    %c0_273 = arith.constant 0 : index
    %c0_274 = arith.constant 0 : index
    %615 = vector.load %arg11[%614, %c0_273, %c0_274] : memref<8x1x64xf32, #tpu.memory_space<vmem>>, vector<1x1x64xf32>
    %616 = vector.shape_cast %615 : vector<1x1x64xf32> to vector<1x64xf32>
    %cst_275 = arith.constant 0.000000e+00 : f32
    %617 = vector.broadcast %cst_275 : f32 to vector<16x64xf32>
    %618 = arith.maximumf %604, %617 : vector<16x64xf32>
    %cst_276 = arith.constant 9.99999974E-6 : f32
    %619 = vector.broadcast %cst_276 : f32 to vector<16x64xf32>
    %620 = arith.addf %618, %619 : vector<16x64xf32>
    %cst_277 = arith.constant 1.000000e+02 : f32
    %621 = vector.broadcast %cst_277 : f32 to vector<16x64xf32>
    %622 = arith.minimumf %620, %621 : vector<16x64xf32>
    %623 = arith.truncf %622 : vector<16x64xf32> to vector<16x64xbf16>
    %cst_278 = arith.constant dense<0.000000e+00> : vector<16x64xf32>
    %624 = tpu.matmul %0, %623, %cst_278 {dimension_numbers = #tpu.dot_dimension_numbers<[1], [0], [0], [1], [0, 0, 1, 1], [], []>} : vector<16x16xbf16>, vector<16x64xbf16>, vector<16x64xf32> -> vector<16x64xf32>
    %cst_279 = arith.constant 1.000000e+02 : f32
    %625 = vector.broadcast %cst_279 : f32 to vector<16x64xf32>
    %626 = arith.minimumf %624, %625 : vector<16x64xf32>
    %627 = arith.mulf %626, %626 : vector<16x64xf32>
    %cst_280 = arith.constant dense<0.000000e+00> : vector<16xf32>
    %628 = vector.multi_reduction <add>, %627, %cst_280 [1] : vector<16x64xf32> to vector<16xf32>
    %629 = vector.shape_cast %628 : vector<16xf32> to vector<16x1xf32>
    %cst_281 = arith.constant 1.000000e-24 : f32
    %630 = vector.broadcast %cst_281 : f32 to vector<16x1xf32>
    %631 = arith.maximumf %629, %630 : vector<16x1xf32>
    %632 = math.rsqrt %631 : vector<16x1xf32>
    %633 = arith.mulf %604, %604 : vector<16x64xf32>
    %cst_282 = arith.constant dense<0.000000e+00> : vector<16xf32>
    %634 = vector.multi_reduction <add>, %633, %cst_282 [1] : vector<16x64xf32> to vector<16xf32>
    %635 = vector.shape_cast %634 : vector<16xf32> to vector<16x1xf32>
    %636 = math.sqrt %635 : vector<16x1xf32>
    %637 = arith.mulf %632, %636 : vector<16x1xf32>
    %638 = vector.broadcast %637 : vector<16x1xf32> to vector<16x64xf32>
    %639 = arith.mulf %626, %638 : vector<16x64xf32>
    %640 = arith.addf %639, %604 : vector<16x64xf32>
    %641 = arith.truncf %640 : vector<16x64xf32> to vector<16x64xbf16>
    %cst_283 = arith.constant dense<0.000000e+00> : vector<16x64xf32>
    %642 = tpu.matmul %641, %607, %cst_283 {dimension_numbers = #tpu.dot_dimension_numbers<[1], [0], [0], [1], [0, 0, 1, 1], [], []>} : vector<16x64xbf16>, vector<64x64xbf16>, vector<16x64xf32> -> vector<16x64xf32>
    %643 = vector.broadcast %610 : vector<1x64xf32> to vector<16x64xf32>
    %644 = arith.addf %642, %643 : vector<16x64xf32>
    %cst_284 = arith.constant 0.000000e+00 : f32
    %645 = vector.broadcast %cst_284 : f32 to vector<16x64xf32>
    %646 = arith.maximumf %644, %645 : vector<16x64xf32>
    %647 = arith.truncf %646 : vector<16x64xf32> to vector<16x64xbf16>
    %cst_285 = arith.constant dense<0.000000e+00> : vector<16x64xf32>
    %648 = tpu.matmul %647, %613, %cst_285 {dimension_numbers = #tpu.dot_dimension_numbers<[1], [0], [0], [1], [0, 0, 1, 1], [], []>} : vector<16x64xbf16>, vector<64x64xbf16>, vector<16x64xf32> -> vector<16x64xf32>
    %649 = vector.broadcast %616 : vector<1x64xf32> to vector<16x64xf32>
    %650 = arith.addf %648, %649 : vector<16x64xf32>
    %cst_286 = arith.constant 0.000000e+00 : f32
    %651 = vector.broadcast %cst_286 : f32 to vector<16x64xf32>
    %652 = arith.maximumf %650, %651 : vector<16x64xf32>
    %cst_287 = arith.constant 9.99999974E-6 : f32
    %653 = vector.broadcast %cst_287 : f32 to vector<16x64xf32>
    %654 = arith.addf %652, %653 : vector<16x64xf32>
    %c5_i32_288 = arith.constant 5 : i32
    %655 = arith.index_cast %c5_i32_288 : i32 to index
    %c0_289 = arith.constant 0 : index
    %c0_290 = arith.constant 0 : index
    %656 = vector.load %arg8[%655, %c0_289, %c0_290] : memref<8x64x64xbf16, #tpu.memory_space<vmem>>, vector<1x64x64xbf16>
    %657 = vector.shape_cast %656 : vector<1x64x64xbf16> to vector<64x64xbf16>
    %658 = arith.index_cast %c5_i32_288 : i32 to index
    %c0_291 = arith.constant 0 : index
    %c0_292 = arith.constant 0 : index
    %659 = vector.load %arg9[%658, %c0_291, %c0_292] : memref<8x1x64xf32, #tpu.memory_space<vmem>>, vector<1x1x64xf32>
    %660 = vector.shape_cast %659 : vector<1x1x64xf32> to vector<1x64xf32>
    %661 = arith.index_cast %c5_i32_288 : i32 to index
    %c0_293 = arith.constant 0 : index
    %c0_294 = arith.constant 0 : index
    %662 = vector.load %arg10[%661, %c0_293, %c0_294] : memref<8x64x64xbf16, #tpu.memory_space<vmem>>, vector<1x64x64xbf16>
    %663 = vector.shape_cast %662 : vector<1x64x64xbf16> to vector<64x64xbf16>
    %664 = arith.index_cast %c5_i32_288 : i32 to index
    %c0_295 = arith.constant 0 : index
    %c0_296 = arith.constant 0 : index
    %665 = vector.load %arg11[%664, %c0_295, %c0_296] : memref<8x1x64xf32, #tpu.memory_space<vmem>>, vector<1x1x64xf32>
    %666 = vector.shape_cast %665 : vector<1x1x64xf32> to vector<1x64xf32>
    %cst_297 = arith.constant 0.000000e+00 : f32
    %667 = vector.broadcast %cst_297 : f32 to vector<16x64xf32>
    %668 = arith.maximumf %654, %667 : vector<16x64xf32>
    %cst_298 = arith.constant 9.99999974E-6 : f32
    %669 = vector.broadcast %cst_298 : f32 to vector<16x64xf32>
    %670 = arith.addf %668, %669 : vector<16x64xf32>
    %cst_299 = arith.constant 1.000000e+02 : f32
    %671 = vector.broadcast %cst_299 : f32 to vector<16x64xf32>
    %672 = arith.minimumf %670, %671 : vector<16x64xf32>
    %673 = arith.truncf %672 : vector<16x64xf32> to vector<16x64xbf16>
    %cst_300 = arith.constant dense<0.000000e+00> : vector<16x64xf32>
    %674 = tpu.matmul %0, %673, %cst_300 {dimension_numbers = #tpu.dot_dimension_numbers<[1], [0], [0], [1], [0, 0, 1, 1], [], []>} : vector<16x16xbf16>, vector<16x64xbf16>, vector<16x64xf32> -> vector<16x64xf32>
    %cst_301 = arith.constant 1.000000e+02 : f32
    %675 = vector.broadcast %cst_301 : f32 to vector<16x64xf32>
    %676 = arith.minimumf %674, %675 : vector<16x64xf32>
    %677 = arith.mulf %676, %676 : vector<16x64xf32>
    %cst_302 = arith.constant dense<0.000000e+00> : vector<16xf32>
    %678 = vector.multi_reduction <add>, %677, %cst_302 [1] : vector<16x64xf32> to vector<16xf32>
    %679 = vector.shape_cast %678 : vector<16xf32> to vector<16x1xf32>
    %cst_303 = arith.constant 1.000000e-24 : f32
    %680 = vector.broadcast %cst_303 : f32 to vector<16x1xf32>
    %681 = arith.maximumf %679, %680 : vector<16x1xf32>
    %682 = math.rsqrt %681 : vector<16x1xf32>
    %683 = arith.mulf %654, %654 : vector<16x64xf32>
    %cst_304 = arith.constant dense<0.000000e+00> : vector<16xf32>
    %684 = vector.multi_reduction <add>, %683, %cst_304 [1] : vector<16x64xf32> to vector<16xf32>
    %685 = vector.shape_cast %684 : vector<16xf32> to vector<16x1xf32>
    %686 = math.sqrt %685 : vector<16x1xf32>
    %687 = arith.mulf %682, %686 : vector<16x1xf32>
    %688 = vector.broadcast %687 : vector<16x1xf32> to vector<16x64xf32>
    %689 = arith.mulf %676, %688 : vector<16x64xf32>
    %690 = arith.addf %689, %654 : vector<16x64xf32>
    %691 = arith.truncf %690 : vector<16x64xf32> to vector<16x64xbf16>
    %cst_305 = arith.constant dense<0.000000e+00> : vector<16x64xf32>
    %692 = tpu.matmul %691, %657, %cst_305 {dimension_numbers = #tpu.dot_dimension_numbers<[1], [0], [0], [1], [0, 0, 1, 1], [], []>} : vector<16x64xbf16>, vector<64x64xbf16>, vector<16x64xf32> -> vector<16x64xf32>
    %693 = vector.broadcast %660 : vector<1x64xf32> to vector<16x64xf32>
    %694 = arith.addf %692, %693 : vector<16x64xf32>
    %cst_306 = arith.constant 0.000000e+00 : f32
    %695 = vector.broadcast %cst_306 : f32 to vector<16x64xf32>
    %696 = arith.maximumf %694, %695 : vector<16x64xf32>
    %697 = arith.truncf %696 : vector<16x64xf32> to vector<16x64xbf16>
    %cst_307 = arith.constant dense<0.000000e+00> : vector<16x64xf32>
    %698 = tpu.matmul %697, %663, %cst_307 {dimension_numbers = #tpu.dot_dimension_numbers<[1], [0], [0], [1], [0, 0, 1, 1], [], []>} : vector<16x64xbf16>, vector<64x64xbf16>, vector<16x64xf32> -> vector<16x64xf32>
    %699 = vector.broadcast %666 : vector<1x64xf32> to vector<16x64xf32>
    %700 = arith.addf %698, %699 : vector<16x64xf32>
    %cst_308 = arith.constant 0.000000e+00 : f32
    %701 = vector.broadcast %cst_308 : f32 to vector<16x64xf32>
    %702 = arith.maximumf %700, %701 : vector<16x64xf32>
    %cst_309 = arith.constant 9.99999974E-6 : f32
    %703 = vector.broadcast %cst_309 : f32 to vector<16x64xf32>
    %704 = arith.addf %702, %703 : vector<16x64xf32>
    %c6_i32_310 = arith.constant 6 : i32
    %705 = arith.index_cast %c6_i32_310 : i32 to index
    %c0_311 = arith.constant 0 : index
    %c0_312 = arith.constant 0 : index
    %706 = vector.load %arg8[%705, %c0_311, %c0_312] : memref<8x64x64xbf16, #tpu.memory_space<vmem>>, vector<1x64x64xbf16>
    %707 = vector.shape_cast %706 : vector<1x64x64xbf16> to vector<64x64xbf16>
    %708 = arith.index_cast %c6_i32_310 : i32 to index
    %c0_313 = arith.constant 0 : index
    %c0_314 = arith.constant 0 : index
    %709 = vector.load %arg9[%708, %c0_313, %c0_314] : memref<8x1x64xf32, #tpu.memory_space<vmem>>, vector<1x1x64xf32>
    %710 = vector.shape_cast %709 : vector<1x1x64xf32> to vector<1x64xf32>
    %711 = arith.index_cast %c6_i32_310 : i32 to index
    %c0_315 = arith.constant 0 : index
    %c0_316 = arith.constant 0 : index
    %712 = vector.load %arg10[%711, %c0_315, %c0_316] : memref<8x64x64xbf16, #tpu.memory_space<vmem>>, vector<1x64x64xbf16>
    %713 = vector.shape_cast %712 : vector<1x64x64xbf16> to vector<64x64xbf16>
    %714 = arith.index_cast %c6_i32_310 : i32 to index
    %c0_317 = arith.constant 0 : index
    %c0_318 = arith.constant 0 : index
    %715 = vector.load %arg11[%714, %c0_317, %c0_318] : memref<8x1x64xf32, #tpu.memory_space<vmem>>, vector<1x1x64xf32>
    %716 = vector.shape_cast %715 : vector<1x1x64xf32> to vector<1x64xf32>
    %cst_319 = arith.constant 0.000000e+00 : f32
    %717 = vector.broadcast %cst_319 : f32 to vector<16x64xf32>
    %718 = arith.maximumf %704, %717 : vector<16x64xf32>
    %cst_320 = arith.constant 9.99999974E-6 : f32
    %719 = vector.broadcast %cst_320 : f32 to vector<16x64xf32>
    %720 = arith.addf %718, %719 : vector<16x64xf32>
    %cst_321 = arith.constant 1.000000e+02 : f32
    %721 = vector.broadcast %cst_321 : f32 to vector<16x64xf32>
    %722 = arith.minimumf %720, %721 : vector<16x64xf32>
    %723 = arith.truncf %722 : vector<16x64xf32> to vector<16x64xbf16>
    %cst_322 = arith.constant dense<0.000000e+00> : vector<16x64xf32>
    %724 = tpu.matmul %0, %723, %cst_322 {dimension_numbers = #tpu.dot_dimension_numbers<[1], [0], [0], [1], [0, 0, 1, 1], [], []>} : vector<16x16xbf16>, vector<16x64xbf16>, vector<16x64xf32> -> vector<16x64xf32>
    %cst_323 = arith.constant 1.000000e+02 : f32
    %725 = vector.broadcast %cst_323 : f32 to vector<16x64xf32>
    %726 = arith.minimumf %724, %725 : vector<16x64xf32>
    %727 = arith.mulf %726, %726 : vector<16x64xf32>
    %cst_324 = arith.constant dense<0.000000e+00> : vector<16xf32>
    %728 = vector.multi_reduction <add>, %727, %cst_324 [1] : vector<16x64xf32> to vector<16xf32>
    %729 = vector.shape_cast %728 : vector<16xf32> to vector<16x1xf32>
    %cst_325 = arith.constant 1.000000e-24 : f32
    %730 = vector.broadcast %cst_325 : f32 to vector<16x1xf32>
    %731 = arith.maximumf %729, %730 : vector<16x1xf32>
    %732 = math.rsqrt %731 : vector<16x1xf32>
    %733 = arith.mulf %704, %704 : vector<16x64xf32>
    %cst_326 = arith.constant dense<0.000000e+00> : vector<16xf32>
    %734 = vector.multi_reduction <add>, %733, %cst_326 [1] : vector<16x64xf32> to vector<16xf32>
    %735 = vector.shape_cast %734 : vector<16xf32> to vector<16x1xf32>
    %736 = math.sqrt %735 : vector<16x1xf32>
    %737 = arith.mulf %732, %736 : vector<16x1xf32>
    %738 = vector.broadcast %737 : vector<16x1xf32> to vector<16x64xf32>
    %739 = arith.mulf %726, %738 : vector<16x64xf32>
    %740 = arith.addf %739, %704 : vector<16x64xf32>
    %741 = arith.truncf %740 : vector<16x64xf32> to vector<16x64xbf16>
    %cst_327 = arith.constant dense<0.000000e+00> : vector<16x64xf32>
    %742 = tpu.matmul %741, %707, %cst_327 {dimension_numbers = #tpu.dot_dimension_numbers<[1], [0], [0], [1], [0, 0, 1, 1], [], []>} : vector<16x64xbf16>, vector<64x64xbf16>, vector<16x64xf32> -> vector<16x64xf32>
    %743 = vector.broadcast %710 : vector<1x64xf32> to vector<16x64xf32>
    %744 = arith.addf %742, %743 : vector<16x64xf32>
    %cst_328 = arith.constant 0.000000e+00 : f32
    %745 = vector.broadcast %cst_328 : f32 to vector<16x64xf32>
    %746 = arith.maximumf %744, %745 : vector<16x64xf32>
    %747 = arith.truncf %746 : vector<16x64xf32> to vector<16x64xbf16>
    %cst_329 = arith.constant dense<0.000000e+00> : vector<16x64xf32>
    %748 = tpu.matmul %747, %713, %cst_329 {dimension_numbers = #tpu.dot_dimension_numbers<[1], [0], [0], [1], [0, 0, 1, 1], [], []>} : vector<16x64xbf16>, vector<64x64xbf16>, vector<16x64xf32> -> vector<16x64xf32>
    %749 = vector.broadcast %716 : vector<1x64xf32> to vector<16x64xf32>
    %750 = arith.addf %748, %749 : vector<16x64xf32>
    %cst_330 = arith.constant 0.000000e+00 : f32
    %751 = vector.broadcast %cst_330 : f32 to vector<16x64xf32>
    %752 = arith.maximumf %750, %751 : vector<16x64xf32>
    %cst_331 = arith.constant 9.99999974E-6 : f32
    %753 = vector.broadcast %cst_331 : f32 to vector<16x64xf32>
    %754 = arith.addf %752, %753 : vector<16x64xf32>
    %c7_i32_332 = arith.constant 7 : i32
    %c7_333 = arith.constant 7 : index
    %c0_334 = arith.constant 0 : index
    %c0_335 = arith.constant 0 : index
    %755 = vector.load %arg8[%c7_333, %c0_334, %c0_335] : memref<8x64x64xbf16, #tpu.memory_space<vmem>>, vector<1x64x64xbf16>
    %756 = vector.shape_cast %755 : vector<1x64x64xbf16> to vector<64x64xbf16>
    %c7_336 = arith.constant 7 : index
    %c0_337 = arith.constant 0 : index
    %c0_338 = arith.constant 0 : index
    %757 = vector.load %arg9[%c7_336, %c0_337, %c0_338] : memref<8x1x64xf32, #tpu.memory_space<vmem>>, vector<1x1x64xf32>
    %758 = vector.shape_cast %757 : vector<1x1x64xf32> to vector<1x64xf32>
    %c7_339 = arith.constant 7 : index
    %c0_340 = arith.constant 0 : index
    %c0_341 = arith.constant 0 : index
    %759 = vector.load %arg10[%c7_339, %c0_340, %c0_341] : memref<8x64x64xbf16, #tpu.memory_space<vmem>>, vector<1x64x64xbf16>
    %760 = vector.shape_cast %759 : vector<1x64x64xbf16> to vector<64x64xbf16>
    %c7_342 = arith.constant 7 : index
    %c0_343 = arith.constant 0 : index
    %c0_344 = arith.constant 0 : index
    %761 = vector.load %arg11[%c7_342, %c0_343, %c0_344] : memref<8x1x64xf32, #tpu.memory_space<vmem>>, vector<1x1x64xf32>
    %762 = vector.shape_cast %761 : vector<1x1x64xf32> to vector<1x64xf32>
    %cst_345 = arith.constant 0.000000e+00 : f32
    %763 = vector.broadcast %cst_345 : f32 to vector<16x64xf32>
    %764 = arith.maximumf %754, %763 : vector<16x64xf32>
    %cst_346 = arith.constant 9.99999974E-6 : f32
    %765 = vector.broadcast %cst_346 : f32 to vector<16x64xf32>
    %766 = arith.addf %764, %765 : vector<16x64xf32>
    %cst_347 = arith.constant 1.000000e+02 : f32
    %767 = vector.broadcast %cst_347 : f32 to vector<16x64xf32>
    %768 = arith.minimumf %766, %767 : vector<16x64xf32>
    %769 = arith.truncf %768 : vector<16x64xf32> to vector<16x64xbf16>
    %cst_348 = arith.constant dense<0.000000e+00> : vector<16x64xf32>
    %770 = tpu.matmul %0, %769, %cst_348 {dimension_numbers = #tpu.dot_dimension_numbers<[1], [0], [0], [1], [0, 0, 1, 1], [], []>} : vector<16x16xbf16>, vector<16x64xbf16>, vector<16x64xf32> -> vector<16x64xf32>
    %cst_349 = arith.constant 1.000000e+02 : f32
    %771 = vector.broadcast %cst_349 : f32 to vector<16x64xf32>
    %772 = arith.minimumf %770, %771 : vector<16x64xf32>
    %773 = arith.mulf %772, %772 : vector<16x64xf32>
    %cst_350 = arith.constant dense<0.000000e+00> : vector<16xf32>
    %774 = vector.multi_reduction <add>, %773, %cst_350 [1] : vector<16x64xf32> to vector<16xf32>
    %775 = vector.shape_cast %774 : vector<16xf32> to vector<16x1xf32>
    %cst_351 = arith.constant 1.000000e-24 : f32
    %776 = vector.broadcast %cst_351 : f32 to vector<16x1xf32>
    %777 = arith.maximumf %775, %776 : vector<16x1xf32>
    %778 = math.rsqrt %777 : vector<16x1xf32>
    %779 = arith.mulf %754, %754 : vector<16x64xf32>
    %cst_352 = arith.constant dense<0.000000e+00> : vector<16xf32>
    %780 = vector.multi_reduction <add>, %779, %cst_352 [1] : vector<16x64xf32> to vector<16xf32>
    %781 = vector.shape_cast %780 : vector<16xf32> to vector<16x1xf32>
    %782 = math.sqrt %781 : vector<16x1xf32>
    %783 = arith.mulf %778, %782 : vector<16x1xf32>
    %784 = vector.broadcast %783 : vector<16x1xf32> to vector<16x64xf32>
    %785 = arith.mulf %772, %784 : vector<16x64xf32>
    %786 = arith.addf %785, %754 : vector<16x64xf32>
    %787 = arith.truncf %786 : vector<16x64xf32> to vector<16x64xbf16>
    %cst_353 = arith.constant dense<0.000000e+00> : vector<16x64xf32>
    %788 = tpu.matmul %787, %756, %cst_353 {dimension_numbers = #tpu.dot_dimension_numbers<[1], [0], [0], [1], [0, 0, 1, 1], [], []>} : vector<16x64xbf16>, vector<64x64xbf16>, vector<16x64xf32> -> vector<16x64xf32>
    %789 = vector.broadcast %758 : vector<1x64xf32> to vector<16x64xf32>
    %790 = arith.addf %788, %789 : vector<16x64xf32>
    %cst_354 = arith.constant 0.000000e+00 : f32
    %791 = vector.broadcast %cst_354 : f32 to vector<16x64xf32>
    %792 = arith.maximumf %790, %791 : vector<16x64xf32>
    %793 = arith.truncf %792 : vector<16x64xf32> to vector<16x64xbf16>
    %cst_355 = arith.constant dense<0.000000e+00> : vector<16x64xf32>
    %794 = tpu.matmul %793, %760, %cst_355 {dimension_numbers = #tpu.dot_dimension_numbers<[1], [0], [0], [1], [0, 0, 1, 1], [], []>} : vector<16x64xbf16>, vector<64x64xbf16>, vector<16x64xf32> -> vector<16x64xf32>
    %795 = vector.broadcast %762 : vector<1x64xf32> to vector<16x64xf32>
    %796 = arith.addf %794, %795 : vector<16x64xf32>
    %797 = arith.addf %796, %404 : vector<16x64xf32>
    %798 = arith.truncf %797 : vector<16x64xf32> to vector<16x64xbf16>
    %c0_356 = arith.constant 0 : index
    %c0_357 = arith.constant 0 : index
    %799 = vector.load %arg12[%c0_356, %c0_357] : memref<64x128xbf16, #tpu.memory_space<vmem>>, vector<64x128xbf16>
    %cst_358 = arith.constant dense<0.000000e+00> : vector<16x128xf32>
    %800 = tpu.matmul %798, %799, %cst_358 {dimension_numbers = #tpu.dot_dimension_numbers<[1], [0], [0], [1], [0, 0, 1, 1], [], []>} : vector<16x64xbf16>, vector<64x128xbf16>, vector<16x128xf32> -> vector<16x128xf32>
    %c0_359 = arith.constant 0 : index
    %c0_360 = arith.constant 0 : index
    %801 = vector.load %arg13[%c0_359, %c0_360] : memref<1x128xf32, #tpu.memory_space<vmem>>, vector<1x128xf32>
    %802 = vector.broadcast %801 : vector<1x128xf32> to vector<16x128xf32>
    %803 = arith.addf %800, %802 : vector<16x128xf32>
    %cst_361 = arith.constant 0.000000e+00 : f32
    %804 = vector.broadcast %cst_361 : f32 to vector<16x128xf32>
    %805 = arith.maximumf %803, %804 : vector<16x128xf32>
    %cst_362 = arith.constant 9.99999974E-6 : f32
    %806 = vector.broadcast %cst_362 : f32 to vector<16x128xf32>
    %807 = arith.addf %805, %806 : vector<16x128xf32>
    %c0_363 = arith.constant 0 : index
    %c0_364 = arith.constant 0 : index
    %808 = vector.load %arg14[%c0_363, %c0_364] : memref<16x128xf32, #tpu.memory_space<vmem>>, vector<16x128xf32>
    tpu.vector_store %arg14[%c0_363, %c0_364], %807 {strides = array<i32>} : memref<16x128xf32, #tpu.memory_space<vmem>>, vector<16x128xf32>,
    return
  }
}

</mosaic_0001>

<llo_original>
// kernel: extractor_forward.1
$region0: #{extractor_forward.1}
  #allocation0 [shape = 'u32[]', space=smem, size = 0x4, offset = 0x4, fixed_abs, tag = 'smem constant byte address 0x4 - core index']
  #allocation1 [shape = 'u32[144,128]{1,0:T(1,128)}', space=vmem, size = 0x12000, scoped, tag = 'internal scratch']
  %s0 = inlined_call_operand.vmem [shape: f32[16,32], index: 0, kind: input, shape index: {}]
  %s1 = inlined_call_operand.vmem [shape: bf16[16,16], index: 1, kind: input, shape index: {}]
  %s2 = inlined_call_operand.vmem [shape: bf16[8,32,32], index: 2, kind: input, shape index: {}]
  %s3 = inlined_call_operand.vmem [shape: f32[8,1,32], index: 3, kind: input, shape index: {}]
  %s4 = inlined_call_operand.vmem [shape: bf16[8,32,32], index: 4, kind: input, shape index: {}]
  %s5 = inlined_call_operand.vmem [shape: f32[8,1,32], index: 5, kind: input, shape index: {}]
  %s6 = inlined_call_operand.vmem [shape: bf16[32,64], index: 6, kind: input, shape index: {}]
  %s7 = inlined_call_operand.vmem [shape: f32[1,64], index: 7, kind: input, shape index: {}]
  %s8 = inlined_call_operand.vmem [shape: bf16[8,64,64], index: 8, kind: input, shape index: {}]
  %s9 = inlined_call_operand.vmem [shape: f32[8,1,64], index: 9, kind: input, shape index: {}]
  %s10 = inlined_call_operand.vmem [shape: bf16[8,64,64], index: 10, kind: input, shape index: {}]
  %s11 = inlined_call_operand.vmem [shape: f32[8,1,64], index: 11, kind: input, shape index: {}]
  %s12 = inlined_call_operand.vmem [shape: bf16[64,128], index: 12, kind: input, shape index: {}]
  %s13 = inlined_call_operand.vmem [shape: f32[1,128], index: 13, kind: input, shape index: {}]
  %s14 = inlined_call_operand.hbm [shape: f32[16,128], index: 14, kind: output, shape index: {}]
  %s15 = sld [smem:[#allocation0]]
  $region66: #{extractor_forward.1} parent=0
    _
  %s17 = ssub.s32 1, %s15
  %s18 = scalar_select 0, %s17, %s15
  $region1: #{extractor_forward.1} parent=0
    #allocation2 [shape = 'u8[8192]{0}', space=vmem, size = 0x2000, scoped, tag = 'output window, operand 0, single buffered']
    #allocation3 [shape = 's32[1]{0}', space=sflag, size = 0x4, scoped, tag = 'scoped memory for extractor_forward.1']
    %19 = vsyncpa [#allocation3], 0
    // Predicated region
    $region2: #{extractor_forward.1} parent=1 // pred_check
      _
    $region3: #{extractor_forward.1} parent=1 // pred_check_branch
      %21 = sbr.rel (0) target = $region5
    $region4: #{extractor_forward.1} parent=1 // pred_region
      _
    $region5: #{extractor_forward.1} parent=1 // pred_fallthru
      _
    // Predicated region
    $region6: #{extractor_forward.1} parent=1 // pred_check
      _
    $region7: #{extractor_forward.1} parent=1 // pred_check_branch
      %23 = sbr.rel (0) target = $region9
    $region8: #{extractor_forward.1} parent=1 // pred_region
      _
    $region9: #{extractor_forward.1} parent=1 // pred_fallthru
      _
    // Predicated region
    $region10: #{extractor_forward.1} parent=1 // pred_check
      _
    $region11: #{extractor_forward.1} parent=1 // pred_check_branch
      %25 = sbr.rel (0) target = $region13
    $region12: #{extractor_forward.1} parent=1 // pred_region
      _
    $region13: #{extractor_forward.1} parent=1 // pred_fallthru
      _
    // Predicated region
    $region14: #{extractor_forward.1} parent=1 // pred_check
      _
    $region15: #{extractor_forward.1} parent=1 // pred_check_branch
      %27 = sbr.rel (0) target = $region17
    $region16: #{extractor_forward.1} parent=1 // pred_region
      _
    $region17: #{extractor_forward.1} parent=1 // pred_fallthru
      _
    // Predicated region
    $region18: #{extractor_forward.1} parent=1 // pred_check
      _
    $region19: #{extractor_forward.1} parent=1 // pred_check_branch
      %29 = sbr.rel (0) target = $region21
    $region20: #{extractor_forward.1} parent=1 // pred_region
      _
    $region21: #{extractor_forward.1} parent=1 // pred_fallthru
      _
    // Predicated region
    $region22: #{extractor_forward.1} parent=1 // pred_check
      _
    $region23: #{extractor_forward.1} parent=1 // pred_check_branch
      %31 = sbr.rel (0) target = $region25
    $region24: #{extractor_forward.1} parent=1 // pred_region
      _
    $region25: #{extractor_forward.1} parent=1 // pred_fallthru
      _
    // Predicated region
    $region26: #{extractor_forward.1} parent=1 // pred_check
      _
    $region27: #{extractor_forward.1} parent=1 // pred_check_branch
      %33 = sbr.rel (0) target = $region29
    $region28: #{extractor_forward.1} parent=1 // pred_region
      _
    $region29: #{extractor_forward.1} parent=1 // pred_fallthru
      _
    // Predicated region
    $region30: #{extractor_forward.1} parent=1 // pred_check
      _
    $region31: #{extractor_forward.1} parent=1 // pred_check_branch
      %35 = sbr.rel (0) target = $region33
    $region32: #{extractor_forward.1} parent=1 // pred_region
      _
    $region33: #{extractor_forward.1} parent=1 // pred_fallthru
      _
    // Predicated region
    $region34: #{extractor_forward.1} parent=1 // pred_check
      _
    $region35: #{extractor_forward.1} parent=1 // pred_check_branch
      %37 = sbr.rel (0) target = $region37
    $region36: #{extractor_forward.1} parent=1 // pred_region
      _
    $region37: #{extractor_forward.1} parent=1 // pred_fallthru
      _
    // Predicated region
    $region38: #{extractor_forward.1} parent=1 // pred_check
      _
    $region39: #{extractor_forward.1} parent=1 // pred_check_branch
      %39 = sbr.rel (0) target = $region41
    $region40: #{extractor_forward.1} parent=1 // pred_region
      _
    $region41: #{extractor_forward.1} parent=1 // pred_fallthru
      _
    // Predicated region
    $region42: #{extractor_forward.1} parent=1 // pred_check
      _
    $region43: #{extractor_forward.1} parent=1 // pred_check_branch
      %41 = sbr.rel (0) target = $region45
    $region44: #{extractor_forward.1} parent=1 // pred_region
      _
    $region45: #{extractor_forward.1} parent=1 // pred_fallthru
      _
    // Predicated region
    $region46: #{extractor_forward.1} parent=1 // pred_check
      _
    $region47: #{extractor_forward.1} parent=1 // pred_check_branch
      %43 = sbr.rel (0) target = $region49
    $region48: #{extractor_forward.1} parent=1 // pred_region
      _
    $region49: #{extractor_forward.1} parent=1 // pred_fallthru
      _
    // Predicated region
    $region50: #{extractor_forward.1} parent=1 // pred_check
      _
    $region51: #{extractor_forward.1} parent=1 // pred_check_branch
      %45 = sbr.rel (0) target = $region53
    $region52: #{extractor_forward.1} parent=1 // pred_region
      _
    $region53: #{extractor_forward.1} parent=1 // pred_fallthru
      _
    // Predicated region
    $region54: #{extractor_forward.1} parent=1 // pred_check
      _
    $region55: #{extractor_forward.1} parent=1 // pred_check_branch
      %47 = sbr.rel (0) target = $region57
    $region56: #{extractor_forward.1} parent=1 // pred_region
      _
    $region57: #{extractor_forward.1} parent=1 // pred_fallthru
      _
    %v49 = vld [vmem:[%s1] sm:$0xf]
    %v50 = vld [vmem:[%s1 + $0x4] sm:$0xf]
    %v51 = vld [vmem:[%s0] sm:$0xff]
    %v52 = vld [vmem:[%s0 + $0x8] sm:$0xff]
    %v53 = vld [vmem:[%s2] sm:$0xf]
    %v54 = vld [vmem:[%s2 + $0x4] sm:$0xf]
    %v55 = vld [vmem:[%s2 + $0x8] sm:$0xf]
    %v56 = vld [vmem:[%s2 + $0xc] sm:$0xf]
    %v57 = vld [vmem:[%s3] sm:$0x1]
    %v58 = vld [vmem:[%s4] sm:$0xf]
    %v59 = vld [vmem:[%s4 + $0x4] sm:$0xf]
    %v60 = vld [vmem:[%s4 + $0x8] sm:$0xf]
    %v61 = vld [vmem:[%s4 + $0xc] sm:$0xf]
    %v62 = vld [vmem:[%s5] sm:$0x1]
    %v63 = vmax.f32 %v51, 0.0
    %v64 = vmax.f32 %v52, 0.0
    %v65 = vadd.f32 %v63, 1e-05
    %v66 = vadd.f32 %v64, 1e-05
    %v67 = vmin.f32 %v65, 100.0
    %v68 = vmin.f32 %v66, 100.0
    %v69 = vpack.c.bf16 %v68, %v67
    %v72 = vunpack.c.l.b16 %v49
    %v73 = vunpack.c.l.b16 %v50
    %v74 = vpack.c.b16 %v73, %v72
    %vm75 = vcmask 130048
    %v77 = vsel %vm75, %v74, 0
    %79 = vmatprep.subr.bf16.mxu0 0
    %80 = vmatpush1.bf16.msra.mxu0 %v69
    %81 = vmatprep.subr.bf16.mxu0 0
    %82 = vmatpush1.bf16.msra.mxu0 0
    %83 = vmatprep.subr.bf16.mxu0 0
    %84 = vmatpush1.bf16.msra.mxu0 0
    %85 = vmatprep.subr.bf16.mxu0 0
    %86 = vmatpush1.bf16.msra.mxu0 0
    %87 = vmatprep.subr.bf16.mxu0 0
    %88 = vmatpush1.bf16.msra.mxu0 0
    %89 = vmatprep.subr.bf16.mxu0 0
    %90 = vmatpush1.bf16.msra.mxu0 0
    %91 = vmatprep.subr.bf16.mxu0 0
    %92 = vmatpush1.bf16.msra.mxu0 0
    %93 = vmatprep.subr.bf16.mxu0 0
    %94 = vmatpush1.bf16.msra.mxu0 0
    %95 = vmatprep.subr.bf16.mxu0 0
    %96 = vmatpush1.bf16.msra.mxu0 0
    %97 = vmatprep.subr.bf16.mxu0 0
    %98 = vmatpush1.bf16.msra.mxu0 0
    %99 = vmatprep.subr.bf16.mxu0 0
    %100 = vmatpush1.bf16.msra.mxu0 0
    %101 = vmatprep.subr.bf16.mxu0 0
    %102 = vmatpush1.bf16.msra.mxu0 0
    %103 = vmatprep.subr.bf16.mxu0 0
    %104 = vmatpush1.bf16.msra.mxu0 0
    %105 = vmatprep.subr.bf16.mxu0 0
    %106 = vmatpush1.bf16.msra.mxu0 0
    %107 = vmatprep.subr.bf16.mxu0 0
    %108 = vmatpush1.bf16.msra.mxu0 0
    %109 = vmatprep.subr.bf16.mxu0 0
    %110 = vmatpush1.bf16.msra.mxu0 0
    %111 = vmatprep.mubr.bf16.mxu0 0
    %112 = vmatmul.mubr.bf16.gmra.mrb[0].mxu0 %v77
    %v113 = vpop.f32.mrb[0].mxu0
    %v114 = vadd.f32 0.0, %v113
    %v115 = vpop.f32.mrb[0].mxu0
    %v116 = vpop.f32.mrb[0].mxu0
    %v117 = vadd.f32 0.0, %v116
    %v118 = vpop.f32.mrb[0].mxu0
    %119 = vdwg.mxu0
    %v120 = vmin.f32 %v114, 100.0
    %v121 = vmin.f32 %v117, 100.0
    %v122 = vmul.f32 %v120, %v120
    %v123 = vmul.f32 %v121, %v121
    %vm124 = vcmask 261120
    %v125 = vsel %vm124, %v122, 0.0
    %126 = vadd.xlane.f32.xlu0 %v125
    %v127 = vpop.xlane.xlu0 %126
    %v128 = vsel %vm124, %v123, 0.0
    %129 = vadd.xlane.f32.xlu0 %v128
    %v130 = vpop.xlane.xlu0 %129
    %v131 = vmax.f32 %v127, 1e-24
    %v132 = vmax.f32 %v130, 1e-24
    %v133 = vrsqrt.pop %v131
    %v134 = vrsqrt.pop %v132
    %v135 = vmul.f32 %v51, %v51
    %v136 = vmul.f32 %v52, %v52
    %v137 = vsel %vm124, %v135, 0.0
    %138 = vadd.xlane.f32.xlu0 %v137
    %v139 = vpop.xlane.xlu0 %138
    %v140 = vsel %vm124, %v136, 0.0
    %141 = vadd.xlane.f32.xlu0 %v140
    %v142 = vpop.xlane.xlu0 %141
    %v143 = vrsqrt.pop %v139
    %v144 = vmul.f32 %v139, %v143
    %vm145 = vcmp.eq.f32.partialorder %v139, inf
    %v146 = vsel %vm145, %v139, %v144
    %vm147 = vcmp.eq.f32.partialorder %v139, 0.0
    %v148 = vand.u32 %v139, 2147483648
    %v149 = vsel %vm147, %v148, %v146
    %v150 = vrsqrt.pop %v142
    %v151 = vmul.f32 %v142, %v150
    %vm152 = vcmp.eq.f32.partialorder %v142, inf
    %v153 = vsel %vm152, %v142, %v151
    %vm154 = vcmp.eq.f32.partialorder %v142, 0.0
    %v155 = vand.u32 %v142, 2147483648
    %v156 = vsel %vm154, %v155, %v153
    %v157 = vmul.f32 %v133, %v149
    %v158 = vmul.f32 %v134, %v156
    %v159 = vmul.f32 %v120, %v157
    %v160 = vmul.f32 %v121, %v158
    %v161 = vadd.f32 %v159, %v51
    %v162 = vadd.f32 %v160, %v52
    %v163 = vpack.c.bf16 %v162, %v161
    %v165 = vlaneseq
    %v166 = vshrl.u32 %v165, 7
    %v167 = vsub.s32 0, %v166
    %v168 = vrot.slane %v57, %v167
    %v174 = vunpack.c.l.b16 %v53
    %v175 = vunpack.c.l.b16 %v54
    %v176 = vunpack.c.l.b16 %v55
    %v177 = vunpack.c.l.b16 %v56
    %v178 = vpack.c.b16 %v175, %v174
    %v179 = vpack.c.b16 %v177, %v176
    %v183 = vsel %vm124, %v163, 0
    %185 = vmatprep.subr.bf16.mxu0 0
    %186 = vmatpush1.bf16.msra.mxu0 %v178
    %187 = vmatprep.subr.bf16.mxu0 0
    %188 = vmatpush1.bf16.msra.mxu0 %v179
    %189 = vmatprep.subr.bf16.mxu0 0
    %190 = vmatpush1.bf16.msra.mxu0 0
    %191 = vmatprep.subr.bf16.mxu0 0
    %192 = vmatpush1.bf16.msra.mxu0 0
    %193 = vmatprep.subr.bf16.mxu0 0
    %194 = vmatpush1.bf16.msra.mxu0 0
    %195 = vmatprep.subr.bf16.mxu0 0
    %196 = vmatpush1.bf16.msra.mxu0 0
    %197 = vmatprep.subr.bf16.mxu0 0
    %198 = vmatpush1.bf16.msra.mxu0 0
    %199 = vmatprep.subr.bf16.mxu0 0
    %200 = vmatpush1.bf16.msra.mxu0 0
    %201 = vmatprep.subr.bf16.mxu0 0
    %202 = vmatpush1.bf16.msra.mxu0 0
    %203 = vmatprep.subr.bf16.mxu0 0
    %204 = vmatpush1.bf16.msra.mxu0 0
    %205 = vmatprep.subr.bf16.mxu0 0
    %206 = vmatpush1.bf16.msra.mxu0 0
    %207 = vmatprep.subr.bf16.mxu0 0
    %208 = vmatpush1.bf16.msra.mxu0 0
    %209 = vmatprep.subr.bf16.mxu0 0
    %210 = vmatpush1.bf16.msra.mxu0 0
    %211 = vmatprep.subr.bf16.mxu0 0
    %212 = vmatpush1.bf16.msra.mxu0 0
    %213 = vmatprep.subr.bf16.mxu0 0
    %214 = vmatpush1.bf16.msra.mxu0 0
    %215 = vmatprep.subr.bf16.mxu0 0
    %216 = vmatpush1.bf16.msra.mxu0 0
    %217 = vmatprep.mubr.bf16.mxu0 0
    %218 = vmatmul.mubr.bf16.gmra.mrb[0].mxu0 %v183
    %v219 = vpop.f32.mrb[0].mxu0
    %v220 = vadd.f32 %v168, %v219
    %v221 = vpop.f32.mrb[0].mxu0
    %v222 = vpop.f32.mrb[0].mxu0
    %v223 = vadd.f32 %v168, %v222
    %v224 = vpop.f32.mrb[0].mxu0
    %225 = vdwg.mxu0
    %v226 = vmax.f32 %v220, 0.0
    %v227 = vmax.f32 %v223, 0.0
    %v228 = vpack.c.bf16 %v227, %v226
    %v230 = vlaneseq
    %v231 = vshrl.u32 %v230, 7
    %v232 = vsub.s32 0, %v231
    %v233 = vrot.slane %v62, %v232
    %v239 = vunpack.c.l.b16 %v58
    %v240 = vunpack.c.l.b16 %v59
    %v241 = vunpack.c.l.b16 %v60
    %v242 = vunpack.c.l.b16 %v61
    %v243 = vpack.c.b16 %v240, %v239
    %v244 = vpack.c.b16 %v242, %v241
    %v248 = vsel %vm124, %v228, 0
    %250 = vmatprep.subr.bf16.mxu0 0
    %251 = vmatpush1.bf16.msra.mxu0 %v243
    %252 = vmatprep.subr.bf16.mxu0 0
    %253 = vmatpush1.bf16.msra.mxu0 %v244
    %254 = vmatprep.subr.bf16.mxu0 0
    %255 = vmatpush1.bf16.msra.mxu0 0
    %256 = vmatprep.subr.bf16.mxu0 0
    %257 = vmatpush1.bf16.msra.mxu0 0
    %258 = vmatprep.subr.bf16.mxu0 0
    %259 = vmatpush1.bf16.msra.mxu0 0
    %260 = vmatprep.subr.bf16.mxu0 0
    %261 = vmatpush1.bf16.msra.mxu0 0
    %262 = vmatprep.subr.bf16.mxu0 0
    %263 = vmatpush1.bf16.msra.mxu0 0
    %264 = vmatprep.subr.bf16.mxu0 0
    %265 = vmatpush1.bf16.msra.mxu0 0
    %266 = vmatprep.subr.bf16.mxu0 0
    %267 = vmatpush1.bf16.msra.mxu0 0
    %268 = vmatprep.subr.bf16.mxu0 0
    %269 = vmatpush1.bf16.msra.mxu0 0
    %270 = vmatprep.subr.bf16.mxu0 0
    %271 = vmatpush1.bf16.msra.mxu0 0
    %272 = vmatprep.subr.bf16.mxu0 0
    %273 = vmatpush1.bf16.msra.mxu0 0
    %274 = vmatprep.subr.bf16.mxu0 0
    %275 = vmatpush1.bf16.msra.mxu0 0
    %276 = vmatprep.subr.bf16.mxu0 0
    %277 = vmatpush1.bf16.msra.mxu0 0
    %278 = vmatprep.subr.bf16.mxu0 0
    %279 = vmatpush1.bf16.msra.mxu0 0
    %280 = vmatprep.subr.bf16.mxu0 0
    %281 = vmatpush1.bf16.msra.mxu0 0
    %282 = vmatprep.mubr.bf16.mxu0 0
    %283 = vmatmul.mubr.bf16.gmra.mrb[0].mxu0 %v248
    %v284 = vpop.f32.mrb[0].mxu0
    %v285 = vadd.f32 %v233, %v284
    %v286 = vpop.f32.mrb[0].mxu0
    %v287 = vpop.f32.mrb[0].mxu0
    %v288 = vadd.f32 %v233, %v287
    %v289 = vpop.f32.mrb[0].mxu0
    %290 = vdwg.mxu0
    %v291 = vmax.f32 %v285, 0.0
    %v292 = vmax.f32 %v288, 0.0
    %v293 = vadd.f32 %v291, 1e-05
    %v294 = vadd.f32 %v292, 1e-05
    %s295 = scalar_lea.vmem %s2, 16
    %v296 = vld [vmem:[%s295] sm:$0xf]
    %v297 = vld [vmem:[%s295 + $0x4] sm:$0xf]
    %v298 = vld [vmem:[%s295 + $0x8] sm:$0xf]
    %v299 = vld [vmem:[%s295 + $0xc] sm:$0xf]
    %s300 = scalar_lea.vmem %s3, 1
    %v301 = vld [vmem:[%s300] sm:$0x1]
    %s302 = scalar_lea.vmem %s4, 16
    %v303 = vld [vmem:[%s302] sm:$0xf]
    %v304 = vld [vmem:[%s302 + $0x4] sm:$0xf]
    %v305 = vld [vmem:[%s302 + $0x8] sm:$0xf]
    %v306 = vld [vmem:[%s302 + $0xc] sm:$0xf]
    %s307 = scalar_lea.vmem %s5, 1
    %v308 = vld [vmem:[%s307] sm:$0x1]
    %v309 = vmax.f32 %v293, 0.0
    %v310 = vmax.f32 %v294, 0.0
    %v311 = vadd.f32 %v309, 1e-05
    %v312 = vadd.f32 %v310, 1e-05
    %v313 = vmin.f32 %v311, 100.0
    %v314 = vmin.f32 %v312, 100.0
    %v315 = vpack.c.bf16 %v314, %v313
    %316 = vmatprep.subr.bf16.mxu0 0
    %317 = vmatpush1.bf16.msra.mxu0 %v315
    %318 = vmatprep.subr.bf16.mxu0 0
    %319 = vmatpush1.bf16.msra.mxu0 0
    %320 = vmatprep.subr.bf16.mxu0 0
    %321 = vmatpush1.bf16.msra.mxu0 0
    %322 = vmatprep.subr.bf16.mxu0 0
    %323 = vmatpush1.bf16.msra.mxu0 0
    %324 = vmatprep.subr.bf16.mxu0 0
    %325 = vmatpush1.bf16.msra.mxu0 0
    %326 = vmatprep.subr.bf16.mxu0 0
    %327 = vmatpush1.bf16.msra.mxu0 0
    %328 = vmatprep.subr.bf16.mxu0 0
    %329 = vmatpush1.bf16.msra.mxu0 0
    %330 = vmatprep.subr.bf16.mxu0 0
    %331 = vmatpush1.bf16.msra.mxu0 0
    %332 = vmatprep.subr.bf16.mxu0 0
    %333 = vmatpush1.bf16.msra.mxu0 0
    %334 = vmatprep.subr.bf16.mxu0 0
    %335 = vmatpush1.bf16.msra.mxu0 0
    %336 = vmatprep.subr.bf16.mxu0 0
    %337 = vmatpush1.bf16.msra.mxu0 0
    %338 = vmatprep.subr.bf16.mxu0 0
    %339 = vmatpush1.bf16.msra.mxu0 0
    %340 = vmatprep.subr.bf16.mxu0 0
    %341 = vmatpush1.bf16.msra.mxu0 0
    %342 = vmatprep.subr.bf16.mxu0 0
    %343 = vmatpush1.bf16.msra.mxu0 0
    %344 = vmatprep.subr.bf16.mxu0 0
    %345 = vmatpush1.bf16.msra.mxu0 0
    %346 = vmatprep.subr.bf16.mxu0 0
    %347 = vmatpush1.bf16.msra.mxu0 0
    %348 = vmatprep.mubr.bf16.mxu0 0
    %349 = vmatmul.mubr.bf16.gmra.mrb[0].mxu0 %v77
    %v350 = vpop.f32.mrb[0].mxu0
    %v351 = vadd.f32 0.0, %v350
    %v352 = vpop.f32.mrb[0].mxu0
    %v353 = vpop.f32.mrb[0].mxu0
    %v354 = vadd.f32 0.0, %v353
    %v355 = vpop.f32.mrb[0].mxu0
    %356 = vdwg.mxu0
    %v357 = vmin.f32 %v351, 100.0
    %v358 = vmin.f32 %v354, 100.0
    %v359 = vmul.f32 %v357, %v357
    %v360 = vmul.f32 %v358, %v358
    %v361 = vsel %vm124, %v359, 0.0
    %362 = vadd.xlane.f32.xlu0 %v361
    %v363 = vpop.xlane.xlu0 %362
    %v364 = vsel %vm124, %v360, 0.0
    %365 = vadd.xlane.f32.xlu0 %v364
    %v366 = vpop.xlane.xlu0 %365
    %v367 = vmax.f32 %v363, 1e-24
    %v368 = vmax.f32 %v366, 1e-24
    %v369 = vrsqrt.pop %v367
    %v370 = vrsqrt.pop %v368
    %v371 = vmul.f32 %v293, %v293
    %v372 = vmul.f32 %v294, %v294
    %v373 = vsel %vm124, %v371, 0.0
    %374 = vadd.xlane.f32.xlu0 %v373
    %v375 = vpop.xlane.xlu0 %374
    %v376 = vsel %vm124, %v372, 0.0
    %377 = vadd.xlane.f32.xlu0 %v376
    %v378 = vpop.xlane.xlu0 %377
    %v379 = vrsqrt.pop %v375
    %v380 = vmul.f32 %v375, %v379
    %vm381 = vcmp.eq.f32.partialorder %v375, inf
    %v382 = vsel %vm381, %v375, %v380
    %vm383 = vcmp.eq.f32.partialorder %v375, 0.0
    %v384 = vand.u32 %v375, 2147483648
    %v385 = vsel %vm383, %v384, %v382
    %v386 = vrsqrt.pop %v378
    %v387 = vmul.f32 %v378, %v386
    %vm388 = vcmp.eq.f32.partialorder %v378, inf
    %v389 = vsel %vm388, %v378, %v387
    %vm390 = vcmp.eq.f32.partialorder %v378, 0.0
    %v391 = vand.u32 %v378, 2147483648
    %v392 = vsel %vm390, %v391, %v389
    %v393 = vmul.f32 %v369, %v385
    %v394 = vmul.f32 %v370, %v392
    %v395 = vmul.f32 %v357, %v393
    %v396 = vmul.f32 %v358, %v394
    %v397 = vadd.f32 %v395, %v293
    %v398 = vadd.f32 %v396, %v294
    %v399 = vpack.c.bf16 %v398, %v397
    %v401 = vlaneseq
    %v402 = vshrl.u32 %v401, 7
    %v403 = vsub.s32 0, %v402
    %v404 = vrot.slane %v301, %v403
    %v410 = vunpack.c.l.b16 %v296
    %v411 = vunpack.c.l.b16 %v297
    %v412 = vunpack.c.l.b16 %v298
    %v413 = vunpack.c.l.b16 %v299
    %v414 = vpack.c.b16 %v411, %v410
    %v415 = vpack.c.b16 %v413, %v412
    %v419 = vsel %vm124, %v399, 0
    %421 = vmatprep.subr.bf16.mxu0 0
    %422 = vmatpush1.bf16.msra.mxu0 %v414
    %423 = vmatprep.subr.bf16.mxu0 0
    %424 = vmatpush1.bf16.msra.mxu0 %v415
    %425 = vmatprep.subr.bf16.mxu0 0
    %426 = vmatpush1.bf16.msra.mxu0 0
    %427 = vmatprep.subr.bf16.mxu0 0
    %428 = vmatpush1.bf16.msra.mxu0 0
    %429 = vmatprep.subr.bf16.mxu0 0
    %430 = vmatpush1.bf16.msra.mxu0 0
    %431 = vmatprep.subr.bf16.mxu0 0
    %432 = vmatpush1.bf16.msra.mxu0 0
    %433 = vmatprep.subr.bf16.mxu0 0
    %434 = vmatpush1.bf16.msra.mxu0 0
    %435 = vmatprep.subr.bf16.mxu0 0
    %436 = vmatpush1.bf16.msra.mxu0 0
    %437 = vmatprep.subr.bf16.mxu0 0
    %438 = vmatpush1.bf16.msra.mxu0 0
    %439 = vmatprep.subr.bf16.mxu0 0
    %440 = vmatpush1.bf16.msra.mxu0 0
    %441 = vmatprep.subr.bf16.mxu0 0
    %442 = vmatpush1.bf16.msra.mxu0 0
    %443 = vmatprep.subr.bf16.mxu0 0
    %444 = vmatpush1.bf16.msra.mxu0 0
    %445 = vmatprep.subr.bf16.mxu0 0
    %446 = vmatpush1.bf16.msra.mxu0 0
    %447 = vmatprep.subr.bf16.mxu0 0
    %448 = vmatpush1.bf16.msra.mxu0 0
    %449 = vmatprep.subr.bf16.mxu0 0
    %450 = vmatpush1.bf16.msra.mxu0 0
    %451 = vmatprep.subr.bf16.mxu0 0
    %452 = vmatpush1.bf16.msra.mxu0 0
    %453 = vmatprep.mubr.bf16.mxu0 0
    %454 = vmatmul.mubr.bf16.gmra.mrb[0].mxu0 %v419
    %v455 = vpop.f32.mrb[0].mxu0
    %v456 = vadd.f32 %v404, %v455
    %v457 = vpop.f32.mrb[0].mxu0
    %v458 = vpop.f32.mrb[0].mxu0
    %v459 = vadd.f32 %v404, %v458
    %v460 = vpop.f32.mrb[0].mxu0
    %461 = vdwg.mxu0
    %v462 = vmax.f32 %v456, 0.0
    %v463 = vmax.f32 %v459, 0.0
    %v464 = vpack.c.bf16 %v463, %v462
    %v466 = vlaneseq
    %v467 = vshrl.u32 %v466, 7
    %v468 = vsub.s32 0, %v467
    %v469 = vrot.slane %v308, %v468
    %v475 = vunpack.c.l.b16 %v303
    %v476 = vunpack.c.l.b16 %v304
    %v477 = vunpack.c.l.b16 %v305
    %v478 = vunpack.c.l.b16 %v306
    %v479 = vpack.c.b16 %v476, %v475
    %v480 = vpack.c.b16 %v478, %v477
    %v484 = vsel %vm124, %v464, 0
    %486 = vmatprep.subr.bf16.mxu0 0
    %487 = vmatpush1.bf16.msra.mxu0 %v479
    %488 = vmatprep.subr.bf16.mxu0 0
    %489 = vmatpush1.bf16.msra.mxu0 %v480
    %490 = vmatprep.subr.bf16.mxu0 0
    %491 = vmatpush1.bf16.msra.mxu0 0
    %492 = vmatprep.subr.bf16.mxu0 0
    %493 = vmatpush1.bf16.msra.mxu0 0
    %494 = vmatprep.subr.bf16.mxu0 0
    %495 = vmatpush1.bf16.msra.mxu0 0
    %496 = vmatprep.subr.bf16.mxu0 0
    %497 = vmatpush1.bf16.msra.mxu0 0
    %498 = vmatprep.subr.bf16.mxu0 0
    %499 = vmatpush1.bf16.msra.mxu0 0
    %500 = vmatprep.subr.bf16.mxu0 0
    %501 = vmatpush1.bf16.msra.mxu0 0
    %502 = vmatprep.subr.bf16.mxu0 0
    %503 = vmatpush1.bf16.msra.mxu0 0
    %504 = vmatprep.subr.bf16.mxu0 0
    %505 = vmatpush1.bf16.msra.mxu0 0
    %506 = vmatprep.subr.bf16.mxu0 0
    %507 = vmatpush1.bf16.msra.mxu0 0
    %508 = vmatprep.subr.bf16.mxu0 0
    %509 = vmatpush1.bf16.msra.mxu0 0
    %510 = vmatprep.subr.bf16.mxu0 0
    %511 = vmatpush1.bf16.msra.mxu0 0
    %512 = vmatprep.subr.bf16.mxu0 0
    %513 = vmatpush1.bf16.msra.mxu0 0
    %514 = vmatprep.subr.bf16.mxu0 0
    %515 = vmatpush1.bf16.msra.mxu0 0
    %516 = vmatprep.subr.bf16.mxu0 0
    %517 = vmatpush1.bf16.msra.mxu0 0
    %518 = vmatprep.mubr.bf16.mxu0 0
    %519 = vmatmul.mubr.bf16.gmra.mrb[0].mxu0 %v484
    %v520 = vpop.f32.mrb[0].mxu0
    %v521 = vadd.f32 %v469, %v520
    %v522 = vpop.f32.mrb[0].mxu0
    %v523 = vpop.f32.mrb[0].mxu0
    %v524 = vadd.f32 %v469, %v523
    %v525 = vpop.f32.mrb[0].mxu0
    %526 = vdwg.mxu0
    %v527 = vmax.f32 %v521, 0.0
    %v528 = vmax.f32 %v524, 0.0
    %v529 = vadd.f32 %v527, 1e-05
    %v530 = vadd.f32 %v528, 1e-05
    %s531 = scalar_lea.vmem %s2, 32
    %v532 = vld [vmem:[%s531] sm:$0xf]
    %v533 = vld [vmem:[%s531 + $0x4] sm:$0xf]
    %v534 = vld [vmem:[%s531 + $0x8] sm:$0xf]
    %v535 = vld [vmem:[%s531 + $0xc] sm:$0xf]
    %s536 = scalar_lea.vmem %s3, 2
    %v537 = vld [vmem:[%s536] sm:$0x1]
    %s538 = scalar_lea.vmem %s4, 32
    %v539 = vld [vmem:[%s538] sm:$0xf]
    %v540 = vld [vmem:[%s538 + $0x4] sm:$0xf]
    %v541 = vld [vmem:[%s538 + $0x8] sm:$0xf]
    %v542 = vld [vmem:[%s538 + $0xc] sm:$0xf]
    %s543 = scalar_lea.vmem %s5, 2
    %v544 = vld [vmem:[%s543] sm:$0x1]
    %v545 = vmax.f32 %v529, 0.0
    %v546 = vmax.f32 %v530, 0.0
    %v547 = vadd.f32 %v545, 1e-05
    %v548 = vadd.f32 %v546, 1e-05
    %v549 = vmin.f32 %v547, 100.0
    %v550 = vmin.f32 %v548, 100.0
    %v551 = vpack.c.bf16 %v550, %v549
    %552 = vmatprep.subr.bf16.mxu0 0
    %553 = vmatpush1.bf16.msra.mxu0 %v551
    %554 = vmatprep.subr.bf16.mxu0 0
    %555 = vmatpush1.bf16.msra.mxu0 0
    %556 = vmatprep.subr.bf16.mxu0 0
    %557 = vmatpush1.bf16.msra.mxu0 0
    %558 = vmatprep.subr.bf16.mxu0 0
    %559 = vmatpush1.bf16.msra.mxu0 0
    %560 = vmatprep.subr.bf16.mxu0 0
    %561 = vmatpush1.bf16.msra.mxu0 0
    %562 = vmatprep.subr.bf16.mxu0 0
    %563 = vmatpush1.bf16.msra.mxu0 0
    %564 = vmatprep.subr.bf16.mxu0 0
    %565 = vmatpush1.bf16.msra.mxu0 0
    %566 = vmatprep.subr.bf16.mxu0 0
    %567 = vmatpush1.bf16.msra.mxu0 0
    %568 = vmatprep.subr.bf16.mxu0 0
    %569 = vmatpush1.bf16.msra.mxu0 0
    %570 = vmatprep.subr.bf16.mxu0 0
    %571 = vmatpush1.bf16.msra.mxu0 0
    %572 = vmatprep.subr.bf16.mxu0 0
    %573 = vmatpush1.bf16.msra.mxu0 0
    %574 = vmatprep.subr.bf16.mxu0 0
    %575 = vmatpush1.bf16.msra.mxu0 0
    %576 = vmatprep.subr.bf16.mxu0 0
    %577 = vmatpush1.bf16.msra.mxu0 0
    %578 = vmatprep.subr.bf16.mxu0 0
    %579 = vmatpush1.bf16.msra.mxu0 0
    %580 = vmatprep.subr.bf16.mxu0 0
    %581 = vmatpush1.bf16.msra.mxu0 0
    %582 = vmatprep.subr.bf16.mxu0 0
    %583 = vmatpush1.bf16.msra.mxu0 0
    %584 = vmatprep.mubr.bf16.mxu0 0
    %585 = vmatmul.mubr.bf16.gmra.mrb[0].mxu0 %v77
    %v586 = vpop.f32.mrb[0].mxu0
    %v587 = vadd.f32 0.0, %v586
    %v588 = vpop.f32.mrb[0].mxu0
    %v589 = vpop.f32.mrb[0].mxu0
    %v590 = vadd.f32 0.0, %v589
    %v591 = vpop.f32.mrb[0].mxu0
    %592 = vdwg.mxu0
    %v593 = vmin.f32 %v587, 100.0
    %v594 = vmin.f32 %v590, 100.0
    %v595 = vmul.f32 %v593, %v593
    %v596 = vmul.f32 %v594, %v594
    %v597 = vsel %vm124, %v595, 0.0
    %598 = vadd.xlane.f32.xlu0 %v597
    %v599 = vpop.xlane.xlu0 %598
    %v600 = vsel %vm124, %v596, 0.0
    %601 = vadd.xlane.f32.xlu0 %v600
    %v602 = vpop.xlane.xlu0 %601
    %v603 = vmax.f32 %v599, 1e-24
    %v604 = vmax.f32 %v602, 1e-24
    %v605 = vrsqrt.pop %v603
    %v606 = vrsqrt.pop %v604
    %v607 = vmul.f32 %v529, %v529
    %v608 = vmul.f32 %v530, %v530
    %v609 = vsel %vm124, %v607, 0.0
    %610 = vadd.xlane.f32.xlu0 %v609
    %v611 = vpop.xlane.xlu0 %610
    %v612 = vsel %vm124, %v608, 0.0
    %613 = vadd.xlane.f32.xlu0 %v612
    %v614 = vpop.xlane.xlu0 %613
    %v615 = vrsqrt.pop %v611
    %v616 = vmul.f32 %v611, %v615
    %vm617 = vcmp.eq.f32.partialorder %v611, inf
    %v618 = vsel %vm617, %v611, %v616
    %vm619 = vcmp.eq.f32.partialorder %v611, 0.0
    %v620 = vand.u32 %v611, 2147483648
    %v621 = vsel %vm619, %v620, %v618
    %v622 = vrsqrt.pop %v614
    %v623 = vmul.f32 %v614, %v622
    %vm624 = vcmp.eq.f32.partialorder %v614, inf
    %v625 = vsel %vm624, %v614, %v623
    %vm626 = vcmp.eq.f32.partialorder %v614, 0.0
    %v627 = vand.u32 %v614, 2147483648
    %v628 = vsel %vm626, %v627, %v625
    %v629 = vmul.f32 %v605, %v621
    %v630 = vmul.f32 %v606, %v628
    %v631 = vmul.f32 %v593, %v629
    %v632 = vmul.f32 %v594, %v630
    %v633 = vadd.f32 %v631, %v529
    %v634 = vadd.f32 %v632, %v530
    %v635 = vpack.c.bf16 %v634, %v633
    %v637 = vlaneseq
    %v638 = vshrl.u32 %v637, 7
    %v639 = vsub.s32 0, %v638
    %v640 = vrot.slane %v537, %v639
    %v646 = vunpack.c.l.b16 %v532
    %v647 = vunpack.c.l.b16 %v533
    %v648 = vunpack.c.l.b16 %v534
    %v649 = vunpack.c.l.b16 %v535
    %v650 = vpack.c.b16 %v647, %v646
    %v651 = vpack.c.b16 %v649, %v648
    %v655 = vsel %vm124, %v635, 0
    %657 = vmatprep.subr.bf16.mxu0 0
    %658 = vmatpush1.bf16.msra.mxu0 %v650
    %659 = vmatprep.subr.bf16.mxu0 0
    %660 = vmatpush1.bf16.msra.mxu0 %v651
    %661 = vmatprep.subr.bf16.mxu0 0
    %662 = vmatpush1.bf16.msra.mxu0 0
    %663 = vmatprep.subr.bf16.mxu0 0
    %664 = vmatpush1.bf16.msra.mxu0 0
    %665 = vmatprep.subr.bf16.mxu0 0
    %666 = vmatpush1.bf16.msra.mxu0 0
    %667 = vmatprep.subr.bf16.mxu0 0
    %668 = vmatpush1.bf16.msra.mxu0 0
    %669 = vmatprep.subr.bf16.mxu0 0
    %670 = vmatpush1.bf16.msra.mxu0 0
    %671 = vmatprep.subr.bf16.mxu0 0
    %672 = vmatpush1.bf16.msra.mxu0 0
    %673 = vmatprep.subr.bf16.mxu0 0
    %674 = vmatpush1.bf16.msra.mxu0 0
    %675 = vmatprep.subr.bf16.mxu0 0
    %676 = vmatpush1.bf16.msra.mxu0 0
    %677 = vmatprep.subr.bf16.mxu0 0
    %678 = vmatpush1.bf16.msra.mxu0 0
    %679 = vmatprep.subr.bf16.mxu0 0
    %680 = vmatpush1.bf16.msra.mxu0 0
    %681 = vmatprep.subr.bf16.mxu0 0
    %682 = vmatpush1.bf16.msra.mxu0 0
    %683 = vmatprep.subr.bf16.mxu0 0
    %684 = vmatpush1.bf16.msra.mxu0 0
    %685 = vmatprep.subr.bf16.mxu0 0
    %686 = vmatpush1.bf16.msra.mxu0 0
    %687 = vmatprep.subr.bf16.mxu0 0
    %688 = vmatpush1.bf16.msra.mxu0 0
    %689 = vmatprep.mubr.bf16.mxu0 0
    %690 = vmatmul.mubr.bf16.gmra.mrb[0].mxu0 %v655
    %v691 = vpop.f32.mrb[0].mxu0
    %v692 = vadd.f32 %v640, %v691
    %v693 = vpop.f32.mrb[0].mxu0
    %v694 = vpop.f32.mrb[0].mxu0
    %v695 = vadd.f32 %v640, %v694
    %v696 = vpop.f32.mrb[0].mxu0
    %697 = vdwg.mxu0
    %v698 = vmax.f32 %v692, 0.0
    %v699 = vmax.f32 %v695, 0.0
    %v700 = vpack.c.bf16 %v699, %v698
    %v702 = vlaneseq
    %v703 = vshrl.u32 %v702, 7
    %v704 = vsub.s32 0, %v703
    %v705 = vrot.slane %v544, %v704
    %v711 = vunpack.c.l.b16 %v539
    %v712 = vunpack.c.l.b16 %v540
    %v713 = vunpack.c.l.b16 %v541
    %v714 = vunpack.c.l.b16 %v542
    %v715 = vpack.c.b16 %v712, %v711
    %v716 = vpack.c.b16 %v714, %v713
    %v720 = vsel %vm124, %v700, 0
    %722 = vmatprep.subr.bf16.mxu0 0
    %723 = vmatpush1.bf16.msra.mxu0 %v715
    %724 = vmatprep.subr.bf16.mxu0 0
    %725 = vmatpush1.bf16.msra.mxu0 %v716
    %726 = vmatprep.subr.bf16.mxu0 0
    %727 = vmatpush1.bf16.msra.mxu0 0
    %728 = vmatprep.subr.bf16.mxu0 0
    %729 = vmatpush1.bf16.msra.mxu0 0
    %730 = vmatprep.subr.bf16.mxu0 0
    %731 = vmatpush1.bf16.msra.mxu0 0
    %732 = vmatprep.subr.bf16.mxu0 0
    %733 = vmatpush1.bf16.msra.mxu0 0
    %734 = vmatprep.subr.bf16.mxu0 0
    %735 = vmatpush1.bf16.msra.mxu0 0
    %736 = vmatprep.subr.bf16.mxu0 0
    %737 = vmatpush1.bf16.msra.mxu0 0
    %738 = vmatprep.subr.bf16.mxu0 0
    %739 = vmatpush1.bf16.msra.mxu0 0
    %740 = vmatprep.subr.bf16.mxu0 0
    %741 = vmatpush1.bf16.msra.mxu0 0
    %742 = vmatprep.subr.bf16.mxu0 0
    %743 = vmatpush1.bf16.msra.mxu0 0
    %744 = vmatprep.subr.bf16.mxu0 0
    %745 = vmatpush1.bf16.msra.mxu0 0
    %746 = vmatprep.subr.bf16.mxu0 0
    %747 = vmatpush1.bf16.msra.mxu0 0
    %748 = vmatprep.subr.bf16.mxu0 0
    %749 = vmatpush1.bf16.msra.mxu0 0
    %750 = vmatprep.subr.bf16.mxu0 0
    %751 = vmatpush1.bf16.msra.mxu0 0
    %752 = vmatprep.subr.bf16.mxu0 0
    %753 = vmatpush1.bf16.msra.mxu0 0
    %754 = vmatprep.mubr.bf16.mxu0 0
    %755 = vmatmul.mubr.bf16.gmra.mrb[0].mxu0 %v720
    %v756 = vpop.f32.mrb[0].mxu0
    %v757 = vadd.f32 %v705, %v756
    %v758 = vpop.f32.mrb[0].mxu0
    %v759 = vpop.f32.mrb[0].mxu0
    %v760 = vadd.f32 %v705, %v759
    %v761 = vpop.f32.mrb[0].mxu0
    %762 = vdwg.mxu0
    %v763 = vmax.f32 %v757, 0.0
    %v764 = vmax.f32 %v760, 0.0
    %v765 = vadd.f32 %v763, 1e-05
    %v766 = vadd.f32 %v764, 1e-05
    %s767 = scalar_lea.vmem %s2, 48
    %v768 = vld [vmem:[%s767] sm:$0xf]
    %v769 = vld [vmem:[%s767 + $0x4] sm:$0xf]
    %v770 = vld [vmem:[%s767 + $0x8] sm:$0xf]
    %v771 = vld [vmem:[%s767 + $0xc] sm:$0xf]
    %s772 = scalar_lea.vmem %s3, 3
    %v773 = vld [vmem:[%s772] sm:$0x1]
    %s774 = scalar_lea.vmem %s4, 48
    %v775 = vld [vmem:[%s774] sm:$0xf]
    %v776 = vld [vmem:[%s774 + $0x4] sm:$0xf]
    %v777 = vld [vmem:[%s774 + $0x8] sm:$0xf]
    %v778 = vld [vmem:[%s774 + $0xc] sm:$0xf]
    %s779 = scalar_lea.vmem %s5, 3
    %v780 = vld [vmem:[%s779] sm:$0x1]
    %v781 = vmax.f32 %v765, 0.0
    %v782 = vmax.f32 %v766, 0.0
    %v783 = vadd.f32 %v781, 1e-05
    %v784 = vadd.f32 %v782, 1e-05
    %v785 = vmin.f32 %v783, 100.0
    %v786 = vmin.f32 %v784, 100.0
    %v787 = vpack.c.bf16 %v786, %v785
    %788 = vmatprep.subr.bf16.mxu0 0
    %789 = vmatpush1.bf16.msra.mxu0 %v787
    %790 = vmatprep.subr.bf16.mxu0 0
    %791 = vmatpush1.bf16.msra.mxu0 0
    %792 = vmatprep.subr.bf16.mxu0 0
    %793 = vmatpush1.bf16.msra.mxu0 0
    %794 = vmatprep.subr.bf16.mxu0 0
    %795 = vmatpush1.bf16.msra.mxu0 0
    %796 = vmatprep.subr.bf16.mxu0 0
    %797 = vmatpush1.bf16.msra.mxu0 0
    %798 = vmatprep.subr.bf16.mxu0 0
    %799 = vmatpush1.bf16.msra.mxu0 0
    %800 = vmatprep.subr.bf16.mxu0 0
    %801 = vmatpush1.bf16.msra.mxu0 0
    %802 = vmatprep.subr.bf16.mxu0 0
    %803 = vmatpush1.bf16.msra.mxu0 0
    %804 = vmatprep.subr.bf16.mxu0 0
    %805 = vmatpush1.bf16.msra.mxu0 0
    %806 = vmatprep.subr.bf16.mxu0 0
    %807 = vmatpush1.bf16.msra.mxu0 0
    %808 = vmatprep.subr.bf16.mxu0 0
    %809 = vmatpush1.bf16.msra.mxu0 0
    %810 = vmatprep.subr.bf16.mxu0 0
    %811 = vmatpush1.bf16.msra.mxu0 0
    %812 = vmatprep.subr.bf16.mxu0 0
    %813 = vmatpush1.bf16.msra.mxu0 0
    %814 = vmatprep.subr.bf16.mxu0 0
    %815 = vmatpush1.bf16.msra.mxu0 0
    %816 = vmatprep.subr.bf16.mxu0 0
    %817 = vmatpush1.bf16.msra.mxu0 0
    %818 = vmatprep.subr.bf16.mxu0 0
    %819 = vmatpush1.bf16.msra.mxu0 0
    %820 = vmatprep.mubr.bf16.mxu0 0
    %821 = vmatmul.mubr.bf16.gmra.mrb[0].mxu0 %v77
    %v822 = vpop.f32.mrb[0].mxu0
    %v823 = vadd.f32 0.0, %v822
    %v824 = vpop.f32.mrb[0].mxu0
    %v825 = vpop.f32.mrb[0].mxu0
    %v826 = vadd.f32 0.0, %v825
    %v827 = vpop.f32.mrb[0].mxu0
    %828 = vdwg.mxu0
    %v829 = vmin.f32 %v823, 100.0
    %v830 = vmin.f32 %v826, 100.0
    %v831 = vmul.f32 %v829, %v829
    %v832 = vmul.f32 %v830, %v830
    %v833 = vsel %vm124, %v831, 0.0
    %834 = vadd.xlane.f32.xlu0 %v833
    %v835 = vpop.xlane.xlu0 %834
    %v836 = vsel %vm124, %v832, 0.0
    %837 = vadd.xlane.f32.xlu0 %v836
    %v838 = vpop.xlane.xlu0 %837
    %v839 = vmax.f32 %v835, 1e-24
    %v840 = vmax.f32 %v838, 1e-24
    %v841 = vrsqrt.pop %v839
    %v842 = vrsqrt.pop %v840
    %v843 = vmul.f32 %v765, %v765
    %v844 = vmul.f32 %v766, %v766
    %v845 = vsel %vm124, %v843, 0.0
    %846 = vadd.xlane.f32.xlu0 %v845
    %v847 = vpop.xlane.xlu0 %846
    %v848 = vsel %vm124, %v844, 0.0
    %849 = vadd.xlane.f32.xlu0 %v848
    %v850 = vpop.xlane.xlu0 %849
    %v851 = vrsqrt.pop %v847
    %v852 = vmul.f32 %v847, %v851
    %vm853 = vcmp.eq.f32.partialorder %v847, inf
    %v854 = vsel %vm853, %v847, %v852
    %vm855 = vcmp.eq.f32.partialorder %v847, 0.0
    %v856 = vand.u32 %v847, 2147483648
    %v857 = vsel %vm855, %v856, %v854
    %v858 = vrsqrt.pop %v850
    %v859 = vmul.f32 %v850, %v858
    %vm860 = vcmp.eq.f32.partialorder %v850, inf
    %v861 = vsel %vm860, %v850, %v859
    %vm862 = vcmp.eq.f32.partialorder %v850, 0.0
    %v863 = vand.u32 %v850, 2147483648
    %v864 = vsel %vm862, %v863, %v861
    %v865 = vmul.f32 %v841, %v857
    %v866 = vmul.f32 %v842, %v864
    %v867 = vmul.f32 %v829, %v865
    %v868 = vmul.f32 %v830, %v866
    %v869 = vadd.f32 %v867, %v765
    %v870 = vadd.f32 %v868, %v766
    %v871 = vpack.c.bf16 %v870, %v869
    %v873 = vlaneseq
    %v874 = vshrl.u32 %v873, 7
    %v875 = vsub.s32 0, %v874
    %v876 = vrot.slane %v773, %v875
    %v882 = vunpack.c.l.b16 %v768
    %v883 = vunpack.c.l.b16 %v769
    %v884 = vunpack.c.l.b16 %v770
    %v885 = vunpack.c.l.b16 %v771
    %v886 = vpack.c.b16 %v883, %v882
    %v887 = vpack.c.b16 %v885, %v884
    %v891 = vsel %vm124, %v871, 0
    %893 = vmatprep.subr.bf16.mxu0 0
    %894 = vmatpush1.bf16.msra.mxu0 %v886
    %895 = vmatprep.subr.bf16.mxu0 0
    %896 = vmatpush1.bf16.msra.mxu0 %v887
    %897 = vmatprep.subr.bf16.mxu0 0
    %898 = vmatpush1.bf16.msra.mxu0 0
    %899 = vmatprep.subr.bf16.mxu0 0
    %900 = vmatpush1.bf16.msra.mxu0 0
    %901 = vmatprep.subr.bf16.mxu0 0
    %902 = vmatpush1.bf16.msra.mxu0 0
    %903 = vmatprep.subr.bf16.mxu0 0
    %904 = vmatpush1.bf16.msra.mxu0 0
    %905 = vmatprep.subr.bf16.mxu0 0
    %906 = vmatpush1.bf16.msra.mxu0 0
    %907 = vmatprep.subr.bf16.mxu0 0
    %908 = vmatpush1.bf16.msra.mxu0 0
    %909 = vmatprep.subr.bf16.mxu0 0
    %910 = vmatpush1.bf16.msra.mxu0 0
    %911 = vmatprep.subr.bf16.mxu0 0
    %912 = vmatpush1.bf16.msra.mxu0 0
    %913 = vmatprep.subr.bf16.mxu0 0
    %914 = vmatpush1.bf16.msra.mxu0 0
    %915 = vmatprep.subr.bf16.mxu0 0
    %916 = vmatpush1.bf16.msra.mxu0 0
    %917 = vmatprep.subr.bf16.mxu0 0
    %918 = vmatpush1.bf16.msra.mxu0 0
    %919 = vmatprep.subr.bf16.mxu0 0
    %920 = vmatpush1.bf16.msra.mxu0 0
    %921 = vmatprep.subr.bf16.mxu0 0
    %922 = vmatpush1.bf16.msra.mxu0 0
    %923 = vmatprep.subr.bf16.mxu0 0
    %924 = vmatpush1.bf16.msra.mxu0 0
    %925 = vmatprep.mubr.bf16.mxu0 0
    %926 = vmatmul.mubr.bf16.gmra.mrb[0].mxu0 %v891
    %v927 = vpop.f32.mrb[0].mxu0
    %v928 = vadd.f32 %v876, %v927
    %v929 = vpop.f32.mrb[0].mxu0
    %v930 = vpop.f32.mrb[0].mxu0
    %v931 = vadd.f32 %v876, %v930
    %v932 = vpop.f32.mrb[0].mxu0
    %933 = vdwg.mxu0
    %v934 = vmax.f32 %v928, 0.0
    %v935 = vmax.f32 %v931, 0.0
    %v936 = vpack.c.bf16 %v935, %v934
    %v938 = vlaneseq
    %v939 = vshrl.u32 %v938, 7
    %v940 = vsub.s32 0, %v939
    %v941 = vrot.slane %v780, %v940
    %v947 = vunpack.c.l.b16 %v775
    %v948 = vunpack.c.l.b16 %v776
    %v949 = vunpack.c.l.b16 %v777
    %v950 = vunpack.c.l.b16 %v778
    %v951 = vpack.c.b16 %v948, %v947
    %v952 = vpack.c.b16 %v950, %v949
    %v956 = vsel %vm124, %v936, 0
    %958 = vmatprep.subr.bf16.mxu0 0
    %959 = vmatpush1.bf16.msra.mxu0 %v951
    %960 = vmatprep.subr.bf16.mxu0 0
    %961 = vmatpush1.bf16.msra.mxu0 %v952
    %962 = vmatprep.subr.bf16.mxu0 0
    %963 = vmatpush1.bf16.msra.mxu0 0
    %964 = vmatprep.subr.bf16.mxu0 0
    %965 = vmatpush1.bf16.msra.mxu0 0
    %966 = vmatprep.subr.bf16.mxu0 0
    %967 = vmatpush1.bf16.msra.mxu0 0
    %968 = vmatprep.subr.bf16.mxu0 0
    %969 = vmatpush1.bf16.msra.mxu0 0
    %970 = vmatprep.subr.bf16.mxu0 0
    %971 = vmatpush1.bf16.msra.mxu0 0
    %972 = vmatprep.subr.bf16.mxu0 0
    %973 = vmatpush1.bf16.msra.mxu0 0
    %974 = vmatprep.subr.bf16.mxu0 0
    %975 = vmatpush1.bf16.msra.mxu0 0
    %976 = vmatprep.subr.bf16.mxu0 0
    %977 = vmatpush1.bf16.msra.mxu0 0
    %978 = vmatprep.subr.bf16.mxu0 0
    %979 = vmatpush1.bf16.msra.mxu0 0
    %980 = vmatprep.subr.bf16.mxu0 0
    %981 = vmatpush1.bf16.msra.mxu0 0
    %982 = vmatprep.subr.bf16.mxu0 0
    %983 = vmatpush1.bf16.msra.mxu0 0
    %984 = vmatprep.subr.bf16.mxu0 0
    %985 = vmatpush1.bf16.msra.mxu0 0
    %986 = vmatprep.subr.bf16.mxu0 0
    %987 = vmatpush1.bf16.msra.mxu0 0
    %988 = vmatprep.subr.bf16.mxu0 0
    %989 = vmatpush1.bf16.msra.mxu0 0
    %990 = vmatprep.mubr.bf16.mxu0 0
    %991 = vmatmul.mubr.bf16.gmra.mrb[0].mxu0 %v956
    %v992 = vpop.f32.mrb[0].mxu0
    %v993 = vadd.f32 %v941, %v992
    %v994 = vpop.f32.mrb[0].mxu0
    %v995 = vpop.f32.mrb[0].mxu0
    %v996 = vadd.f32 %v941, %v995
    %v997 = vpop.f32.mrb[0].mxu0
    %998 = vdwg.mxu0
    %v999 = vmax.f32 %v993, 0.0
    %v1000 = vmax.f32 %v996, 0.0
    %v1001 = vadd.f32 %v999, 1e-05
    %v1002 = vadd.f32 %v1000, 1e-05
    %s1003 = scalar_lea.vmem %s2, 64
    %v1004 = vld [vmem:[%s1003] sm:$0xf]
    %v1005 = vld [vmem:[%s1003 + $0x4] sm:$0xf]
    %v1006 = vld [vmem:[%s1003 + $0x8] sm:$0xf]
    %v1007 = vld [vmem:[%s1003 + $0xc] sm:$0xf]
    %s1008 = scalar_lea.vmem %s3, 4
    %v1009 = vld [vmem:[%s1008] sm:$0x1]
    %s1010 = scalar_lea.vmem %s4, 64
    %v1011 = vld [vmem:[%s1010] sm:$0xf]
    %v1012 = vld [vmem:[%s1010 + $0x4] sm:$0xf]
    %v1013 = vld [vmem:[%s1010 + $0x8] sm:$0xf]
    %v1014 = vld [vmem:[%s1010 + $0xc] sm:$0xf]
    %s1015 = scalar_lea.vmem %s5, 4
    %v1016 = vld [vmem:[%s1015] sm:$0x1]
    %v1017 = vmax.f32 %v1001, 0.0
    %v1018 = vmax.f32 %v1002, 0.0
    %v1019 = vadd.f32 %v1017, 1e-05
    %v1020 = vadd.f32 %v1018, 1e-05
    %v1021 = vmin.f32 %v1019, 100.0
    %v1022 = vmin.f32 %v1020, 100.0
    %v1023 = vpack.c.bf16 %v1022, %v1021
    %1024 = vmatprep.subr.bf16.mxu0 0
    %1025 = vmatpush1.bf16.msra.mxu0 %v1023
    %1026 = vmatprep.subr.bf16.mxu0 0
    %1027 = vmatpush1.bf16.msra.mxu0 0
    %1028 = vmatprep.subr.bf16.mxu0 0
    %1029 = vmatpush1.bf16.msra.mxu0 0
    %1030 = vmatprep.subr.bf16.mxu0 0
    %1031 = vmatpush1.bf16.msra.mxu0 0
    %1032 = vmatprep.subr.bf16.mxu0 0
    %1033 = vmatpush1.bf16.msra.mxu0 0
    %1034 = vmatprep.subr.bf16.mxu0 0
    %1035 = vmatpush1.bf16.msra.mxu0 0
    %1036 = vmatprep.subr.bf16.mxu0 0
    %1037 = vmatpush1.bf16.msra.mxu0 0
    %1038 = vmatprep.subr.bf16.mxu0 0
    %1039 = vmatpush1.bf16.msra.mxu0 0
    %1040 = vmatprep.subr.bf16.mxu0 0
    %1041 = vmatpush1.bf16.msra.mxu0 0
    %1042 = vmatprep.subr.bf16.mxu0 0
    %1043 = vmatpush1.bf16.msra.mxu0 0
    %1044 = vmatprep.subr.bf16.mxu0 0
    %1045 = vmatpush1.bf16.msra.mxu0 0
    %1046 = vmatprep.subr.bf16.mxu0 0
    %1047 = vmatpush1.bf16.msra.mxu0 0
    %1048 = vmatprep.subr.bf16.mxu0 0
    %1049 = vmatpush1.bf16.msra.mxu0 0
    %1050 = vmatprep.subr.bf16.mxu0 0
    %1051 = vmatpush1.bf16.msra.mxu0 0
    %1052 = vmatprep.subr.bf16.mxu0 0
    %1053 = vmatpush1.bf16.msra.mxu0 0
    %1054 = vmatprep.subr.bf16.mxu0 0
    %1055 = vmatpush1.bf16.msra.mxu0 0
    %1056 = vmatprep.mubr.bf16.mxu0 0
    %1057 = vmatmul.mubr.bf16.gmra.mrb[0].mxu0 %v77
    %v1058 = vpop.f32.mrb[0].mxu0
    %v1059 = vadd.f32 0.0, %v1058
    %v1060 = vpop.f32.mrb[0].mxu0
    %v1061 = vpop.f32.mrb[0].mxu0
    %v1062 = vadd.f32 0.0, %v1061
    %v1063 = vpop.f32.mrb[0].mxu0
    %1064 = vdwg.mxu0
    %v1065 = vmin.f32 %v1059, 100.0
    %v1066 = vmin.f32 %v1062, 100.0
    %v1067 = vmul.f32 %v1065, %v1065
    %v1068 = vmul.f32 %v1066, %v1066
    %v1069 = vsel %vm124, %v1067, 0.0
    %1070 = vadd.xlane.f32.xlu0 %v1069
    %v1071 = vpop.xlane.xlu0 %1070
    %v1072 = vsel %vm124, %v1068, 0.0
    %1073 = vadd.xlane.f32.xlu0 %v1072
    %v1074 = vpop.xlane.xlu0 %1073
    %v1075 = vmax.f32 %v1071, 1e-24
    %v1076 = vmax.f32 %v1074, 1e-24
    %v1077 = vrsqrt.pop %v1075
    %v1078 = vrsqrt.pop %v1076
    %v1079 = vmul.f32 %v1001, %v1001
    %v1080 = vmul.f32 %v1002, %v1002
    %v1081 = vsel %vm124, %v1079, 0.0
    %1082 = vadd.xlane.f32.xlu0 %v1081
    %v1083 = vpop.xlane.xlu0 %1082
    %v1084 = vsel %vm124, %v1080, 0.0
    %1085 = vadd.xlane.f32.xlu0 %v1084
    %v1086 = vpop.xlane.xlu0 %1085
    %v1087 = vrsqrt.pop %v1083
    %v1088 = vmul.f32 %v1083, %v1087
    %vm1089 = vcmp.eq.f32.partialorder %v1083, inf
    %v1090 = vsel %vm1089, %v1083, %v1088
    %vm1091 = vcmp.eq.f32.partialorder %v1083, 0.0
    %v1092 = vand.u32 %v1083, 2147483648
    %v1093 = vsel %vm1091, %v1092, %v1090
    %v1094 = vrsqrt.pop %v1086
    %v1095 = vmul.f32 %v1086, %v1094
    %vm1096 = vcmp.eq.f32.partialorder %v1086, inf
    %v1097 = vsel %vm1096, %v1086, %v1095
    %vm1098 = vcmp.eq.f32.partialorder %v1086, 0.0
    %v1099 = vand.u32 %v1086, 2147483648
    %v1100 = vsel %vm1098, %v1099, %v1097
    %v1101 = vmul.f32 %v1077, %v1093
    %v1102 = vmul.f32 %v1078, %v1100
    %v1103 = vmul.f32 %v1065, %v1101
    %v1104 = vmul.f32 %v1066, %v1102
    %v1105 = vadd.f32 %v1103, %v1001
    %v1106 = vadd.f32 %v1104, %v1002
    %v1107 = vpack.c.bf16 %v1106, %v1105
    %v1109 = vlaneseq
    %v1110 = vshrl.u32 %v1109, 7
    %v1111 = vsub.s32 0, %v1110
    %v1112 = vrot.slane %v1009, %v1111
    %v1118 = vunpack.c.l.b16 %v1004
    %v1119 = vunpack.c.l.b16 %v1005
    %v1120 = vunpack.c.l.b16 %v1006
    %v1121 = vunpack.c.l.b16 %v1007
    %v1122 = vpack.c.b16 %v1119, %v1118
    %v1123 = vpack.c.b16 %v1121, %v1120
    %v1127 = vsel %vm124, %v1107, 0
    %1129 = vmatprep.subr.bf16.mxu0 0
    %1130 = vmatpush1.bf16.msra.mxu0 %v1122
    %1131 = vmatprep.subr.bf16.mxu0 0
    %1132 = vmatpush1.bf16.msra.mxu0 %v1123
    %1133 = vmatprep.subr.bf16.mxu0 0
    %1134 = vmatpush1.bf16.msra.mxu0 0
    %1135 = vmatprep.subr.bf16.mxu0 0
    %1136 = vmatpush1.bf16.msra.mxu0 0
    %1137 = vmatprep.subr.bf16.mxu0 0
    %1138 = vmatpush1.bf16.msra.mxu0 0
    %1139 = vmatprep.subr.bf16.mxu0 0
    %1140 = vmatpush1.bf16.msra.mxu0 0
    %1141 = vmatprep.subr.bf16.mxu0 0
    %1142 = vmatpush1.bf16.msra.mxu0 0
    %1143 = vmatprep.subr.bf16.mxu0 0
    %1144 = vmatpush1.bf16.msra.mxu0 0
    %1145 = vmatprep.subr.bf16.mxu0 0
    %1146 = vmatpush1.bf16.msra.mxu0 0
    %1147 = vmatprep.subr.bf16.mxu0 0
    %1148 = vmatpush1.bf16.msra.mxu0 0
    %1149 = vmatprep.subr.bf16.mxu0 0
    %1150 = vmatpush1.bf16.msra.mxu0 0
    %1151 = vmatprep.subr.bf16.mxu0 0
    %1152 = vmatpush1.bf16.msra.mxu0 0
    %1153 = vmatprep.subr.bf16.mxu0 0
    %1154 = vmatpush1.bf16.msra.mxu0 0
    %1155 = vmatprep.subr.bf16.mxu0 0
    %1156 = vmatpush1.bf16.msra.mxu0 0
    %1157 = vmatprep.subr.bf16.mxu0 0
    %1158 = vmatpush1.bf16.msra.mxu0 0
    %1159 = vmatprep.subr.bf16.mxu0 0
    %1160 = vmatpush1.bf16.msra.mxu0 0
    %1161 = vmatprep.mubr.bf16.mxu0 0
    %1162 = vmatmul.mubr.bf16.gmra.mrb[0].mxu0 %v1127
    %v1163 = vpop.f32.mrb[0].mxu0
    %v1164 = vadd.f32 %v1112, %v1163
    %v1165 = vpop.f32.mrb[0].mxu0
    %v1166 = vpop.f32.mrb[0].mxu0
    %v1167 = vadd.f32 %v1112, %v1166
    %v1168 = vpop.f32.mrb[0].mxu0
    %1169 = vdwg.mxu0
    %v1170 = vmax.f32 %v1164, 0.0
    %v1171 = vmax.f32 %v1167, 0.0
    %v1172 = vpack.c.bf16 %v1171, %v1170
    %v1174 = vlaneseq
    %v1175 = vshrl.u32 %v1174, 7
    %v1176 = vsub.s32 0, %v1175
    %v1177 = vrot.slane %v1016, %v1176
    %v1183 = vunpack.c.l.b16 %v1011
    %v1184 = vunpack.c.l.b16 %v1012
    %v1185 = vunpack.c.l.b16 %v1013
    %v1186 = vunpack.c.l.b16 %v1014
    %v1187 = vpack.c.b16 %v1184, %v1183
    %v1188 = vpack.c.b16 %v1186, %v1185
    %v1192 = vsel %vm124, %v1172, 0
    %1194 = vmatprep.subr.bf16.mxu0 0
    %1195 = vmatpush1.bf16.msra.mxu0 %v1187
    %1196 = vmatprep.subr.bf16.mxu0 0
    %1197 = vmatpush1.bf16.msra.mxu0 %v1188
    %1198 = vmatprep.subr.bf16.mxu0 0
    %1199 = vmatpush1.bf16.msra.mxu0 0
    %1200 = vmatprep.subr.bf16.mxu0 0
    %1201 = vmatpush1.bf16.msra.mxu0 0
    %1202 = vmatprep.subr.bf16.mxu0 0
    %1203 = vmatpush1.bf16.msra.mxu0 0
    %1204 = vmatprep.subr.bf16.mxu0 0
    %1205 = vmatpush1.bf16.msra.mxu0 0
    %1206 = vmatprep.subr.bf16.mxu0 0
    %1207 = vmatpush1.bf16.msra.mxu0 0
    %1208 = vmatprep.subr.bf16.mxu0 0
    %1209 = vmatpush1.bf16.msra.mxu0 0
    %1210 = vmatprep.subr.bf16.mxu0 0
    %1211 = vmatpush1.bf16.msra.mxu0 0
    %1212 = vmatprep.subr.bf16.mxu0 0
    %1213 = vmatpush1.bf16.msra.mxu0 0
    %1214 = vmatprep.subr.bf16.mxu0 0
    %1215 = vmatpush1.bf16.msra.mxu0 0
    %1216 = vmatprep.subr.bf16.mxu0 0
    %1217 = vmatpush1.bf16.msra.mxu0 0
    %1218 = vmatprep.subr.bf16.mxu0 0
    %1219 = vmatpush1.bf16.msra.mxu0 0
    %1220 = vmatprep.subr.bf16.mxu0 0
    %1221 = vmatpush1.bf16.msra.mxu0 0
    %1222 = vmatprep.subr.bf16.mxu0 0
    %1223 = vmatpush1.bf16.msra.mxu0 0
    %1224 = vmatprep.subr.bf16.mxu0 0
    %1225 = vmatpush1.bf16.msra.mxu0 0
    %1226 = vmatprep.mubr.bf16.mxu0 0
    %1227 = vmatmul.mubr.bf16.gmra.mrb[0].mxu0 %v1192
    %v1228 = vpop.f32.mrb[0].mxu0
    %v1229 = vadd.f32 %v1177, %v1228
    %v1230 = vpop.f32.mrb[0].mxu0
    %v1231 = vpop.f32.mrb[0].mxu0
    %v1232 = vadd.f32 %v1177, %v1231
    %v1233 = vpop.f32.mrb[0].mxu0
    %1234 = vdwg.mxu0
    %v1235 = vmax.f32 %v1229, 0.0
    %v1236 = vmax.f32 %v1232, 0.0
    %v1237 = vadd.f32 %v1235, 1e-05
    %v1238 = vadd.f32 %v1236, 1e-05
    %s1239 = scalar_lea.vmem %s2, 80
    %v1240 = vld [vmem:[%s1239] sm:$0xf]
    %v1241 = vld [vmem:[%s1239 + $0x4] sm:$0xf]
    %v1242 = vld [vmem:[%s1239 + $0x8] sm:$0xf]
    %v1243 = vld [vmem:[%s1239 + $0xc] sm:$0xf]
    %s1244 = scalar_lea.vmem %s3, 5
    %v1245 = vld [vmem:[%s1244] sm:$0x1]
    %s1246 = scalar_lea.vmem %s4, 80
    %v1247 = vld [vmem:[%s1246] sm:$0xf]
    %v1248 = vld [vmem:[%s1246 + $0x4] sm:$0xf]
    %v1249 = vld [vmem:[%s1246 + $0x8] sm:$0xf]
    %v1250 = vld [vmem:[%s1246 + $0xc] sm:$0xf]
    %s1251 = scalar_lea.vmem %s5, 5
    %v1252 = vld [vmem:[%s1251] sm:$0x1]
    %v1253 = vmax.f32 %v1237, 0.0
    %v1254 = vmax.f32 %v1238, 0.0
    %v1255 = vadd.f32 %v1253, 1e-05
    %v1256 = vadd.f32 %v1254, 1e-05
    %v1257 = vmin.f32 %v1255, 100.0
    %v1258 = vmin.f32 %v1256, 100.0
    %v1259 = vpack.c.bf16 %v1258, %v1257
    %1260 = vmatprep.subr.bf16.mxu0 0
    %1261 = vmatpush1.bf16.msra.mxu0 %v1259
    %1262 = vmatprep.subr.bf16.mxu0 0
    %1263 = vmatpush1.bf16.msra.mxu0 0
    %1264 = vmatprep.subr.bf16.mxu0 0
    %1265 = vmatpush1.bf16.msra.mxu0 0
    %1266 = vmatprep.subr.bf16.mxu0 0
    %1267 = vmatpush1.bf16.msra.mxu0 0
    %1268 = vmatprep.subr.bf16.mxu0 0
    %1269 = vmatpush1.bf16.msra.mxu0 0
    %1270 = vmatprep.subr.bf16.mxu0 0
    %1271 = vmatpush1.bf16.msra.mxu0 0
    %1272 = vmatprep.subr.bf16.mxu0 0
    %1273 = vmatpush1.bf16.msra.mxu0 0
    %1274 = vmatprep.subr.bf16.mxu0 0
    %1275 = vmatpush1.bf16.msra.mxu0 0
    %1276 = vmatprep.subr.bf16.mxu0 0
    %1277 = vmatpush1.bf16.msra.mxu0 0
    %1278 = vmatprep.subr.bf16.mxu0 0
    %1279 = vmatpush1.bf16.msra.mxu0 0
    %1280 = vmatprep.subr.bf16.mxu0 0
    %1281 = vmatpush1.bf16.msra.mxu0 0
    %1282 = vmatprep.subr.bf16.mxu0 0
    %1283 = vmatpush1.bf16.msra.mxu0 0
    %1284 = vmatprep.subr.bf16.mxu0 0
    %1285 = vmatpush1.bf16.msra.mxu0 0
    %1286 = vmatprep.subr.bf16.mxu0 0
    %1287 = vmatpush1.bf16.msra.mxu0 0
    %1288 = vmatprep.subr.bf16.mxu0 0
    %1289 = vmatpush1.bf16.msra.mxu0 0
    %1290 = vmatprep.subr.bf16.mxu0 0
    %1291 = vmatpush1.bf16.msra.mxu0 0
    %1292 = vmatprep.mubr.bf16.mxu0 0
    %1293 = vmatmul.mubr.bf16.gmra.mrb[0].mxu0 %v77
    %v1294 = vpop.f32.mrb[0].mxu0
    %v1295 = vadd.f32 0.0, %v1294
    %v1296 = vpop.f32.mrb[0].mxu0
    %v1297 = vpop.f32.mrb[0].mxu0
    %v1298 = vadd.f32 0.0, %v1297
    %v1299 = vpop.f32.mrb[0].mxu0
    %1300 = vdwg.mxu0
    %v1301 = vmin.f32 %v1295, 100.0
    %v1302 = vmin.f32 %v1298, 100.0
    %v1303 = vmul.f32 %v1301, %v1301
    %v1304 = vmul.f32 %v1302, %v1302
    %v1305 = vsel %vm124, %v1303, 0.0
    %1306 = vadd.xlane.f32.xlu0 %v1305
    %v1307 = vpop.xlane.xlu0 %1306
    %v1308 = vsel %vm124, %v1304, 0.0
    %1309 = vadd.xlane.f32.xlu0 %v1308
    %v1310 = vpop.xlane.xlu0 %1309
    %v1311 = vmax.f32 %v1307, 1e-24
    %v1312 = vmax.f32 %v1310, 1e-24
    %v1313 = vrsqrt.pop %v1311
    %v1314 = vrsqrt.pop %v1312
    %v1315 = vmul.f32 %v1237, %v1237
    %v1316 = vmul.f32 %v1238, %v1238
    %v1317 = vsel %vm124, %v1315, 0.0
    %1318 = vadd.xlane.f32.xlu0 %v1317
    %v1319 = vpop.xlane.xlu0 %1318
    %v1320 = vsel %vm124, %v1316, 0.0
    %1321 = vadd.xlane.f32.xlu0 %v1320
    %v1322 = vpop.xlane.xlu0 %1321
    %v1323 = vrsqrt.pop %v1319
    %v1324 = vmul.f32 %v1319, %v1323
    %vm1325 = vcmp.eq.f32.partialorder %v1319, inf
    %v1326 = vsel %vm1325, %v1319, %v1324
    %vm1327 = vcmp.eq.f32.partialorder %v1319, 0.0
    %v1328 = vand.u32 %v1319, 2147483648
    %v1329 = vsel %vm1327, %v1328, %v1326
    %v1330 = vrsqrt.pop %v1322
    %v1331 = vmul.f32 %v1322, %v1330
    %vm1332 = vcmp.eq.f32.partialorder %v1322, inf
    %v1333 = vsel %vm1332, %v1322, %v1331
    %vm1334 = vcmp.eq.f32.partialorder %v1322, 0.0
    %v1335 = vand.u32 %v1322, 2147483648
    %v1336 = vsel %vm1334, %v1335, %v1333
    %v1337 = vmul.f32 %v1313, %v1329
    %v1338 = vmul.f32 %v1314, %v1336
    %v1339 = vmul.f32 %v1301, %v1337
    %v1340 = vmul.f32 %v1302, %v1338
    %v1341 = vadd.f32 %v1339, %v1237
    %v1342 = vadd.f32 %v1340, %v1238
    %v1343 = vpack.c.bf16 %v1342, %v1341
    %v1345 = vlaneseq
    %v1346 = vshrl.u32 %v1345, 7
    %v1347 = vsub.s32 0, %v1346
    %v1348 = vrot.slane %v1245, %v1347
    %v1354 = vunpack.c.l.b16 %v1240
    %v1355 = vunpack.c.l.b16 %v1241
    %v1356 = vunpack.c.l.b16 %v1242
    %v1357 = vunpack.c.l.b16 %v1243
    %v1358 = vpack.c.b16 %v1355, %v1354
    %v1359 = vpack.c.b16 %v1357, %v1356
    %v1363 = vsel %vm124, %v1343, 0
    %1365 = vmatprep.subr.bf16.mxu0 0
    %1366 = vmatpush1.bf16.msra.mxu0 %v1358
    %1367 = vmatprep.subr.bf16.mxu0 0
    %1368 = vmatpush1.bf16.msra.mxu0 %v1359
    %1369 = vmatprep.subr.bf16.mxu0 0
    %1370 = vmatpush1.bf16.msra.mxu0 0
    %1371 = vmatprep.subr.bf16.mxu0 0
    %1372 = vmatpush1.bf16.msra.mxu0 0
    %1373 = vmatprep.subr.bf16.mxu0 0
    %1374 = vmatpush1.bf16.msra.mxu0 0
    %1375 = vmatprep.subr.bf16.mxu0 0
    %1376 = vmatpush1.bf16.msra.mxu0 0
    %1377 = vmatprep.subr.bf16.mxu0 0
    %1378 = vmatpush1.bf16.msra.mxu0 0
    %1379 = vmatprep.subr.bf16.mxu0 0
    %1380 = vmatpush1.bf16.msra.mxu0 0
    %1381 = vmatprep.subr.bf16.mxu0 0
    %1382 = vmatpush1.bf16.msra.mxu0 0
    %1383 = vmatprep.subr.bf16.mxu0 0
    %1384 = vmatpush1.bf16.msra.mxu0 0
    %1385 = vmatprep.subr.bf16.mxu0 0
    %1386 = vmatpush1.bf16.msra.mxu0 0
    %1387 = vmatprep.subr.bf16.mxu0 0
    %1388 = vmatpush1.bf16.msra.mxu0 0
    %1389 = vmatprep.subr.bf16.mxu0 0
    %1390 = vmatpush1.bf16.msra.mxu0 0
    %1391 = vmatprep.subr.bf16.mxu0 0
    %1392 = vmatpush1.bf16.msra.mxu0 0
    %1393 = vmatprep.subr.bf16.mxu0 0
    %1394 = vmatpush1.bf16.msra.mxu0 0
    %1395 = vmatprep.subr.bf16.mxu0 0
    %1396 = vmatpush1.bf16.msra.mxu0 0
    %1397 = vmatprep.mubr.bf16.mxu0 0
    %1398 = vmatmul.mubr.bf16.gmra.mrb[0].mxu0 %v1363
    %v1399 = vpop.f32.mrb[0].mxu0
    %v1400 = vadd.f32 %v1348, %v1399
    %v1401 = vpop.f32.mrb[0].mxu0
    %v1402 = vpop.f32.mrb[0].mxu0
    %v1403 = vadd.f32 %v1348, %v1402
    %v1404 = vpop.f32.mrb[0].mxu0
    %1405 = vdwg.mxu0
    %v1406 = vmax.f32 %v1400, 0.0
    %v1407 = vmax.f32 %v1403, 0.0
    %v1408 = vpack.c.bf16 %v1407, %v1406
    %v1410 = vlaneseq
    %v1411 = vshrl.u32 %v1410, 7
    %v1412 = vsub.s32 0, %v1411
    %v1413 = vrot.slane %v1252, %v1412
    %v1419 = vunpack.c.l.b16 %v1247
    %v1420 = vunpack.c.l.b16 %v1248
    %v1421 = vunpack.c.l.b16 %v1249
    %v1422 = vunpack.c.l.b16 %v1250
    %v1423 = vpack.c.b16 %v1420, %v1419
    %v1424 = vpack.c.b16 %v1422, %v1421
    %v1428 = vsel %vm124, %v1408, 0
    %1430 = vmatprep.subr.bf16.mxu0 0
    %1431 = vmatpush1.bf16.msra.mxu0 %v1423
    %1432 = vmatprep.subr.bf16.mxu0 0
    %1433 = vmatpush1.bf16.msra.mxu0 %v1424
    %1434 = vmatprep.subr.bf16.mxu0 0
    %1435 = vmatpush1.bf16.msra.mxu0 0
    %1436 = vmatprep.subr.bf16.mxu0 0
    %1437 = vmatpush1.bf16.msra.mxu0 0
    %1438 = vmatprep.subr.bf16.mxu0 0
    %1439 = vmatpush1.bf16.msra.mxu0 0
    %1440 = vmatprep.subr.bf16.mxu0 0
    %1441 = vmatpush1.bf16.msra.mxu0 0
    %1442 = vmatprep.subr.bf16.mxu0 0
    %1443 = vmatpush1.bf16.msra.mxu0 0
    %1444 = vmatprep.subr.bf16.mxu0 0
    %1445 = vmatpush1.bf16.msra.mxu0 0
    %1446 = vmatprep.subr.bf16.mxu0 0
    %1447 = vmatpush1.bf16.msra.mxu0 0
    %1448 = vmatprep.subr.bf16.mxu0 0
    %1449 = vmatpush1.bf16.msra.mxu0 0
    %1450 = vmatprep.subr.bf16.mxu0 0
    %1451 = vmatpush1.bf16.msra.mxu0 0
    %1452 = vmatprep.subr.bf16.mxu0 0
    %1453 = vmatpush1.bf16.msra.mxu0 0
    %1454 = vmatprep.subr.bf16.mxu0 0
    %1455 = vmatpush1.bf16.msra.mxu0 0
    %1456 = vmatprep.subr.bf16.mxu0 0
    %1457 = vmatpush1.bf16.msra.mxu0 0
    %1458 = vmatprep.subr.bf16.mxu0 0
    %1459 = vmatpush1.bf16.msra.mxu0 0
    %1460 = vmatprep.subr.bf16.mxu0 0
    %1461 = vmatpush1.bf16.msra.mxu0 0
    %1462 = vmatprep.mubr.bf16.mxu0 0
    %1463 = vmatmul.mubr.bf16.gmra.mrb[0].mxu0 %v1428
    %v1464 = vpop.f32.mrb[0].mxu0
    %v1465 = vadd.f32 %v1413, %v1464
    %v1466 = vpop.f32.mrb[0].mxu0
    %v1467 = vpop.f32.mrb[0].mxu0
    %v1468 = vadd.f32 %v1413, %v1467
    %v1469 = vpop.f32.mrb[0].mxu0
    %1470 = vdwg.mxu0
    %v1471 = vmax.f32 %v1465, 0.0
    %v1472 = vmax.f32 %v1468, 0.0
    %v1473 = vadd.f32 %v1471, 1e-05
    %v1474 = vadd.f32 %v1472, 1e-05
    %s1475 = scalar_lea.vmem %s2, 96
    %v1476 = vld [vmem:[%s1475] sm:$0xf]
    %v1477 = vld [vmem:[%s1475 + $0x4] sm:$0xf]
    %v1478 = vld [vmem:[%s1475 + $0x8] sm:$0xf]
    %v1479 = vld [vmem:[%s1475 + $0xc] sm:$0xf]
    %s1480 = scalar_lea.vmem %s3, 6
    %v1481 = vld [vmem:[%s1480] sm:$0x1]
    %s1482 = scalar_lea.vmem %s4, 96
    %v1483 = vld [vmem:[%s1482] sm:$0xf]
    %v1484 = vld [vmem:[%s1482 + $0x4] sm:$0xf]
    %v1485 = vld [vmem:[%s1482 + $0x8] sm:$0xf]
    %v1486 = vld [vmem:[%s1482 + $0xc] sm:$0xf]
    %s1487 = scalar_lea.vmem %s5, 6
    %v1488 = vld [vmem:[%s1487] sm:$0x1]
    %v1489 = vmax.f32 %v1473, 0.0
    %v1490 = vmax.f32 %v1474, 0.0
    %v1491 = vadd.f32 %v1489, 1e-05
    %v1492 = vadd.f32 %v1490, 1e-05
    %v1493 = vmin.f32 %v1491, 100.0
    %v1494 = vmin.f32 %v1492, 100.0
    %v1495 = vpack.c.bf16 %v1494, %v1493
    %1496 = vmatprep.subr.bf16.mxu0 0
    %1497 = vmatpush1.bf16.msra.mxu0 %v1495
    %1498 = vmatprep.subr.bf16.mxu0 0
    %1499 = vmatpush1.bf16.msra.mxu0 0
    %1500 = vmatprep.subr.bf16.mxu0 0
    %1501 = vmatpush1.bf16.msra.mxu0 0
    %1502 = vmatprep.subr.bf16.mxu0 0
    %1503 = vmatpush1.bf16.msra.mxu0 0
    %1504 = vmatprep.subr.bf16.mxu0 0
    %1505 = vmatpush1.bf16.msra.mxu0 0
    %1506 = vmatprep.subr.bf16.mxu0 0
    %1507 = vmatpush1.bf16.msra.mxu0 0
    %1508 = vmatprep.subr.bf16.mxu0 0
    %1509 = vmatpush1.bf16.msra.mxu0 0
    %1510 = vmatprep.subr.bf16.mxu0 0
    %1511 = vmatpush1.bf16.msra.mxu0 0
    %1512 = vmatprep.subr.bf16.mxu0 0
    %1513 = vmatpush1.bf16.msra.mxu0 0
    %1514 = vmatprep.subr.bf16.mxu0 0
    %1515 = vmatpush1.bf16.msra.mxu0 0
    %1516 = vmatprep.subr.bf16.mxu0 0
    %1517 = vmatpush1.bf16.msra.mxu0 0
    %1518 = vmatprep.subr.bf16.mxu0 0
    %1519 = vmatpush1.bf16.msra.mxu0 0
    %1520 = vmatprep.subr.bf16.mxu0 0
    %1521 = vmatpush1.bf16.msra.mxu0 0
    %1522 = vmatprep.subr.bf16.mxu0 0
    %1523 = vmatpush1.bf16.msra.mxu0 0
    %1524 = vmatprep.subr.bf16.mxu0 0
    %1525 = vmatpush1.bf16.msra.mxu0 0
    %1526 = vmatprep.subr.bf16.mxu0 0
    %1527 = vmatpush1.bf16.msra.mxu0 0
    %1528 = vmatprep.mubr.bf16.mxu0 0
    %1529 = vmatmul.mubr.bf16.gmra.mrb[0].mxu0 %v77
    %v1530 = vpop.f32.mrb[0].mxu0
    %v1531 = vadd.f32 0.0, %v1530
    %v1532 = vpop.f32.mrb[0].mxu0
    %v1533 = vpop.f32.mrb[0].mxu0
    %v1534 = vadd.f32 0.0, %v1533
    %v1535 = vpop.f32.mrb[0].mxu0
    %1536 = vdwg.mxu0
    %v1537 = vmin.f32 %v1531, 100.0
    %v1538 = vmin.f32 %v1534, 100.0
    %v1539 = vmul.f32 %v1537, %v1537
    %v1540 = vmul.f32 %v1538, %v1538
    %v1541 = vsel %vm124, %v1539, 0.0
    %1542 = vadd.xlane.f32.xlu0 %v1541
    %v1543 = vpop.xlane.xlu0 %1542
    %v1544 = vsel %vm124, %v1540, 0.0
    %1545 = vadd.xlane.f32.xlu0 %v1544
    %v1546 = vpop.xlane.xlu0 %1545
    %v1547 = vmax.f32 %v1543, 1e-24
    %v1548 = vmax.f32 %v1546, 1e-24
    %v1549 = vrsqrt.pop %v1547
    %v1550 = vrsqrt.pop %v1548
    %v1551 = vmul.f32 %v1473, %v1473
    %v1552 = vmul.f32 %v1474, %v1474
    %v1553 = vsel %vm124, %v1551, 0.0
    %1554 = vadd.xlane.f32.xlu0 %v1553
    %v1555 = vpop.xlane.xlu0 %1554
    %v1556 = vsel %vm124, %v1552, 0.0
    %1557 = vadd.xlane.f32.xlu0 %v1556
    %v1558 = vpop.xlane.xlu0 %1557
    %v1559 = vrsqrt.pop %v1555
    %v1560 = vmul.f32 %v1555, %v1559
    %vm1561 = vcmp.eq.f32.partialorder %v1555, inf
    %v1562 = vsel %vm1561, %v1555, %v1560
    %vm1563 = vcmp.eq.f32.partialorder %v1555, 0.0
    %v1564 = vand.u32 %v1555, 2147483648
    %v1565 = vsel %vm1563, %v1564, %v1562
    %v1566 = vrsqrt.pop %v1558
    %v1567 = vmul.f32 %v1558, %v1566
    %vm1568 = vcmp.eq.f32.partialorder %v1558, inf
    %v1569 = vsel %vm1568, %v1558, %v1567
    %vm1570 = vcmp.eq.f32.partialorder %v1558, 0.0
    %v1571 = vand.u32 %v1558, 2147483648
    %v1572 = vsel %vm1570, %v1571, %v1569
    %v1573 = vmul.f32 %v1549, %v1565
    %v1574 = vmul.f32 %v1550, %v1572
    %v1575 = vmul.f32 %v1537, %v1573
    %v1576 = vmul.f32 %v1538, %v1574
    %v1577 = vadd.f32 %v1575, %v1473
    %v1578 = vadd.f32 %v1576, %v1474
    %v1579 = vpack.c.bf16 %v1578, %v1577
    %v1581 = vlaneseq
    %v1582 = vshrl.u32 %v1581, 7
    %v1583 = vsub.s32 0, %v1582
    %v1584 = vrot.slane %v1481, %v1583
    %v1590 = vunpack.c.l.b16 %v1476
    %v1591 = vunpack.c.l.b16 %v1477
    %v1592 = vunpack.c.l.b16 %v1478
    %v1593 = vunpack.c.l.b16 %v1479
    %v1594 = vpack.c.b16 %v1591, %v1590
    %v1595 = vpack.c.b16 %v1593, %v1592
    %v1599 = vsel %vm124, %v1579, 0
    %1601 = vmatprep.subr.bf16.mxu0 0
    %1602 = vmatpush1.bf16.msra.mxu0 %v1594
    %1603 = vmatprep.subr.bf16.mxu0 0
    %1604 = vmatpush1.bf16.msra.mxu0 %v1595
    %1605 = vmatprep.subr.bf16.mxu0 0
    %1606 = vmatpush1.bf16.msra.mxu0 0
    %1607 = vmatprep.subr.bf16.mxu0 0
    %1608 = vmatpush1.bf16.msra.mxu0 0
    %1609 = vmatprep.subr.bf16.mxu0 0
    %1610 = vmatpush1.bf16.msra.mxu0 0
    %1611 = vmatprep.subr.bf16.mxu0 0
    %1612 = vmatpush1.bf16.msra.mxu0 0
    %1613 = vmatprep.subr.bf16.mxu0 0
    %1614 = vmatpush1.bf16.msra.mxu0 0
    %1615 = vmatprep.subr.bf16.mxu0 0
    %1616 = vmatpush1.bf16.msra.mxu0 0
    %1617 = vmatprep.subr.bf16.mxu0 0
    %1618 = vmatpush1.bf16.msra.mxu0 0
    %1619 = vmatprep.subr.bf16.mxu0 0
    %1620 = vmatpush1.bf16.msra.mxu0 0
    %1621 = vmatprep.subr.bf16.mxu0 0
    %1622 = vmatpush1.bf16.msra.mxu0 0
    %1623 = vmatprep.subr.bf16.mxu0 0
    %1624 = vmatpush1.bf16.msra.mxu0 0
    %1625 = vmatprep.subr.bf16.mxu0 0
    %1626 = vmatpush1.bf16.msra.mxu0 0
    %1627 = vmatprep.subr.bf16.mxu0 0
    %1628 = vmatpush1.bf16.msra.mxu0 0
    %1629 = vmatprep.subr.bf16.mxu0 0
    %1630 = vmatpush1.bf16.msra.mxu0 0
    %1631 = vmatprep.subr.bf16.mxu0 0
    %1632 = vmatpush1.bf16.msra.mxu0 0
    %1633 = vmatprep.mubr.bf16.mxu0 0
    %1634 = vmatmul.mubr.bf16.gmra.mrb[0].mxu0 %v1599
    %v1635 = vpop.f32.mrb[0].mxu0
    %v1636 = vadd.f32 %v1584, %v1635
    %v1637 = vpop.f32.mrb[0].mxu0
    %v1638 = vpop.f32.mrb[0].mxu0
    %v1639 = vadd.f32 %v1584, %v1638
    %v1640 = vpop.f32.mrb[0].mxu0
    %1641 = vdwg.mxu0
    %v1642 = vmax.f32 %v1636, 0.0
    %v1643 = vmax.f32 %v1639, 0.0
    %v1644 = vpack.c.bf16 %v1643, %v1642
    %v1646 = vlaneseq
    %v1647 = vshrl.u32 %v1646, 7
    %v1648 = vsub.s32 0, %v1647
    %v1649 = vrot.slane %v1488, %v1648
    %v1655 = vunpack.c.l.b16 %v1483
    %v1656 = vunpack.c.l.b16 %v1484
    %v1657 = vunpack.c.l.b16 %v1485
    %v1658 = vunpack.c.l.b16 %v1486
    %v1659 = vpack.c.b16 %v1656, %v1655
    %v1660 = vpack.c.b16 %v1658, %v1657
    %v1664 = vsel %vm124, %v1644, 0
    %1666 = vmatprep.subr.bf16.mxu0 0
    %1667 = vmatpush1.bf16.msra.mxu0 %v1659
    %1668 = vmatprep.subr.bf16.mxu0 0
    %1669 = vmatpush1.bf16.msra.mxu0 %v1660
    %1670 = vmatprep.subr.bf16.mxu0 0
    %1671 = vmatpush1.bf16.msra.mxu0 0
    %1672 = vmatprep.subr.bf16.mxu0 0
    %1673 = vmatpush1.bf16.msra.mxu0 0
    %1674 = vmatprep.subr.bf16.mxu0 0
    %1675 = vmatpush1.bf16.msra.mxu0 0
    %1676 = vmatprep.subr.bf16.mxu0 0
    %1677 = vmatpush1.bf16.msra.mxu0 0
    %1678 = vmatprep.subr.bf16.mxu0 0
    %1679 = vmatpush1.bf16.msra.mxu0 0
    %1680 = vmatprep.subr.bf16.mxu0 0
    %1681 = vmatpush1.bf16.msra.mxu0 0
    %1682 = vmatprep.subr.bf16.mxu0 0
    %1683 = vmatpush1.bf16.msra.mxu0 0
    %1684 = vmatprep.subr.bf16.mxu0 0
    %1685 = vmatpush1.bf16.msra.mxu0 0
    %1686 = vmatprep.subr.bf16.mxu0 0
    %1687 = vmatpush1.bf16.msra.mxu0 0
    %1688 = vmatprep.subr.bf16.mxu0 0
    %1689 = vmatpush1.bf16.msra.mxu0 0
    %1690 = vmatprep.subr.bf16.mxu0 0
    %1691 = vmatpush1.bf16.msra.mxu0 0
    %1692 = vmatprep.subr.bf16.mxu0 0
    %1693 = vmatpush1.bf16.msra.mxu0 0
    %1694 = vmatprep.subr.bf16.mxu0 0
    %1695 = vmatpush1.bf16.msra.mxu0 0
    %1696 = vmatprep.subr.bf16.mxu0 0
    %1697 = vmatpush1.bf16.msra.mxu0 0
    %1698 = vmatprep.mubr.bf16.mxu0 0
    %1699 = vmatmul.mubr.bf16.gmra.mrb[0].mxu0 %v1664
    %v1700 = vpop.f32.mrb[0].mxu0
    %v1701 = vadd.f32 %v1649, %v1700
    %v1702 = vpop.f32.mrb[0].mxu0
    %v1703 = vpop.f32.mrb[0].mxu0
    %v1704 = vadd.f32 %v1649, %v1703
    %v1705 = vpop.f32.mrb[0].mxu0
    %1706 = vdwg.mxu0
    %v1707 = vmax.f32 %v1701, 0.0
    %v1708 = vmax.f32 %v1704, 0.0
    %v1709 = vadd.f32 %v1707, 1e-05
    %v1710 = vadd.f32 %v1708, 1e-05
    %s1711 = scalar_lea.vmem %s2, 112
    %v1712 = vld [vmem:[%s1711] sm:$0xf]
    %v1713 = vld [vmem:[%s1711 + $0x4] sm:$0xf]
    %v1714 = vld [vmem:[%s1711 + $0x8] sm:$0xf]
    %v1715 = vld [vmem:[%s1711 + $0xc] sm:$0xf]
    %s1716 = scalar_lea.vmem %s3, 7
    %v1717 = vld [vmem:[%s1716] sm:$0x1]
    %s1718 = scalar_lea.vmem %s4, 112
    %v1719 = vld [vmem:[%s1718] sm:$0xf]
    %v1720 = vld [vmem:[%s1718 + $0x4] sm:$0xf]
    %v1721 = vld [vmem:[%s1718 + $0x8] sm:$0xf]
    %v1722 = vld [vmem:[%s1718 + $0xc] sm:$0xf]
    %s1723 = scalar_lea.vmem %s5, 7
    %v1724 = vld [vmem:[%s1723] sm:$0x1]
    %v1725 = vmax.f32 %v1709, 0.0
    %v1726 = vmax.f32 %v1710, 0.0
    %v1727 = vadd.f32 %v1725, 1e-05
    %v1728 = vadd.f32 %v1726, 1e-05
    %v1729 = vmin.f32 %v1727, 100.0
    %v1730 = vmin.f32 %v1728, 100.0
    %v1731 = vpack.c.bf16 %v1730, %v1729
    %1732 = vmatprep.subr.bf16.mxu0 0
    %1733 = vmatpush1.bf16.msra.mxu0 %v1731
    %1734 = vmatprep.subr.bf16.mxu0 0
    %1735 = vmatpush1.bf16.msra.mxu0 0
    %1736 = vmatprep.subr.bf16.mxu0 0
    %1737 = vmatpush1.bf16.msra.mxu0 0
    %1738 = vmatprep.subr.bf16.mxu0 0
    %1739 = vmatpush1.bf16.msra.mxu0 0
    %1740 = vmatprep.subr.bf16.mxu0 0
    %1741 = vmatpush1.bf16.msra.mxu0 0
    %1742 = vmatprep.subr.bf16.mxu0 0
    %1743 = vmatpush1.bf16.msra.mxu0 0
    %1744 = vmatprep.subr.bf16.mxu0 0
    %1745 = vmatpush1.bf16.msra.mxu0 0
    %1746 = vmatprep.subr.bf16.mxu0 0
    %1747 = vmatpush1.bf16.msra.mxu0 0
    %1748 = vmatprep.subr.bf16.mxu0 0
    %1749 = vmatpush1.bf16.msra.mxu0 0
    %1750 = vmatprep.subr.bf16.mxu0 0
    %1751 = vmatpush1.bf16.msra.mxu0 0
    %1752 = vmatprep.subr.bf16.mxu0 0
    %1753 = vmatpush1.bf16.msra.mxu0 0
    %1754 = vmatprep.subr.bf16.mxu0 0
    %1755 = vmatpush1.bf16.msra.mxu0 0
    %1756 = vmatprep.subr.bf16.mxu0 0
    %1757 = vmatpush1.bf16.msra.mxu0 0
    %1758 = vmatprep.subr.bf16.mxu0 0
    %1759 = vmatpush1.bf16.msra.mxu0 0
    %1760 = vmatprep.subr.bf16.mxu0 0
    %1761 = vmatpush1.bf16.msra.mxu0 0
    %1762 = vmatprep.subr.bf16.mxu0 0
    %1763 = vmatpush1.bf16.msra.mxu0 0
    %1764 = vmatprep.mubr.bf16.mxu0 0
    %1765 = vmatmul.mubr.bf16.gmra.mrb[0].mxu0 %v77
    %v1766 = vpop.f32.mrb[0].mxu0
    %v1767 = vadd.f32 0.0, %v1766
    %v1768 = vpop.f32.mrb[0].mxu0
    %v1769 = vpop.f32.mrb[0].mxu0
    %v1770 = vadd.f32 0.0, %v1769
    %v1771 = vpop.f32.mrb[0].mxu0
    %1772 = vdwg.mxu0
    %v1773 = vmin.f32 %v1767, 100.0
    %v1774 = vmin.f32 %v1770, 100.0
    %v1775 = vmul.f32 %v1773, %v1773
    %v1776 = vmul.f32 %v1774, %v1774
    %v1777 = vsel %vm124, %v1775, 0.0
    %1778 = vadd.xlane.f32.xlu0 %v1777
    %v1779 = vpop.xlane.xlu0 %1778
    %v1780 = vsel %vm124, %v1776, 0.0
    %1781 = vadd.xlane.f32.xlu0 %v1780
    %v1782 = vpop.xlane.xlu0 %1781
    %v1783 = vmax.f32 %v1779, 1e-24
    %v1784 = vmax.f32 %v1782, 1e-24
    %v1785 = vrsqrt.pop %v1783
    %v1786 = vrsqrt.pop %v1784
    %v1787 = vmul.f32 %v1709, %v1709
    %v1788 = vmul.f32 %v1710, %v1710
    %v1789 = vsel %vm124, %v1787, 0.0
    %1790 = vadd.xlane.f32.xlu0 %v1789
    %v1791 = vpop.xlane.xlu0 %1790
    %v1792 = vsel %vm124, %v1788, 0.0
    %1793 = vadd.xlane.f32.xlu0 %v1792
    %v1794 = vpop.xlane.xlu0 %1793
    %v1795 = vrsqrt.pop %v1791
    %v1796 = vmul.f32 %v1791, %v1795
    %vm1797 = vcmp.eq.f32.partialorder %v1791, inf
    %v1798 = vsel %vm1797, %v1791, %v1796
    %vm1799 = vcmp.eq.f32.partialorder %v1791, 0.0
    %v1800 = vand.u32 %v1791, 2147483648
    %v1801 = vsel %vm1799, %v1800, %v1798
    %v1802 = vrsqrt.pop %v1794
    %v1803 = vmul.f32 %v1794, %v1802
    %vm1804 = vcmp.eq.f32.partialorder %v1794, inf
    %v1805 = vsel %vm1804, %v1794, %v1803
    %vm1806 = vcmp.eq.f32.partialorder %v1794, 0.0
    %v1807 = vand.u32 %v1794, 2147483648
    %v1808 = vsel %vm1806, %v1807, %v1805
    %v1809 = vmul.f32 %v1785, %v1801
    %v1810 = vmul.f32 %v1786, %v1808
    %v1811 = vmul.f32 %v1773, %v1809
    %v1812 = vmul.f32 %v1774, %v1810
    %v1813 = vadd.f32 %v1811, %v1709
    %v1814 = vadd.f32 %v1812, %v1710
    %v1815 = vpack.c.bf16 %v1814, %v1813
    %v1817 = vlaneseq
    %v1818 = vshrl.u32 %v1817, 7
    %v1819 = vsub.s32 0, %v1818
    %v1820 = vrot.slane %v1717, %v1819
    %v1826 = vunpack.c.l.b16 %v1712
    %v1827 = vunpack.c.l.b16 %v1713
    %v1828 = vunpack.c.l.b16 %v1714
    %v1829 = vunpack.c.l.b16 %v1715
    %v1830 = vpack.c.b16 %v1827, %v1826
    %v1831 = vpack.c.b16 %v1829, %v1828
    %v1835 = vsel %vm124, %v1815, 0
    %1837 = vmatprep.subr.bf16.mxu0 0
    %1838 = vmatpush1.bf16.msra.mxu0 %v1830
    %1839 = vmatprep.subr.bf16.mxu0 0
    %1840 = vmatpush1.bf16.msra.mxu0 %v1831
    %1841 = vmatprep.subr.bf16.mxu0 0
    %1842 = vmatpush1.bf16.msra.mxu0 0
    %1843 = vmatprep.subr.bf16.mxu0 0
    %1844 = vmatpush1.bf16.msra.mxu0 0
    %1845 = vmatprep.subr.bf16.mxu0 0
    %1846 = vmatpush1.bf16.msra.mxu0 0
    %1847 = vmatprep.subr.bf16.mxu0 0
    %1848 = vmatpush1.bf16.msra.mxu0 0
    %1849 = vmatprep.subr.bf16.mxu0 0
    %1850 = vmatpush1.bf16.msra.mxu0 0
    %1851 = vmatprep.subr.bf16.mxu0 0
    %1852 = vmatpush1.bf16.msra.mxu0 0
    %1853 = vmatprep.subr.bf16.mxu0 0
    %1854 = vmatpush1.bf16.msra.mxu0 0
    %1855 = vmatprep.subr.bf16.mxu0 0
    %1856 = vmatpush1.bf16.msra.mxu0 0
    %1857 = vmatprep.subr.bf16.mxu0 0
    %1858 = vmatpush1.bf16.msra.mxu0 0
    %1859 = vmatprep.subr.bf16.mxu0 0
    %1860 = vmatpush1.bf16.msra.mxu0 0
    %1861 = vmatprep.subr.bf16.mxu0 0
    %1862 = vmatpush1.bf16.msra.mxu0 0
    %1863 = vmatprep.subr.bf16.mxu0 0
    %1864 = vmatpush1.bf16.msra.mxu0 0
    %1865 = vmatprep.subr.bf16.mxu0 0
    %1866 = vmatpush1.bf16.msra.mxu0 0
    %1867 = vmatprep.subr.bf16.mxu0 0
    %1868 = vmatpush1.bf16.msra.mxu0 0
    %1869 = vmatprep.mubr.bf16.mxu0 0
    %1870 = vmatmul.mubr.bf16.gmra.mrb[0].mxu0 %v1835
    %v1871 = vpop.f32.mrb[0].mxu0
    %v1872 = vadd.f32 %v1820, %v1871
    %v1873 = vpop.f32.mrb[0].mxu0
    %v1874 = vpop.f32.mrb[0].mxu0
    %v1875 = vadd.f32 %v1820, %v1874
    %v1876 = vpop.f32.mrb[0].mxu0
    %1877 = vdwg.mxu0
    %v1878 = vmax.f32 %v1872, 0.0
    %v1879 = vmax.f32 %v1875, 0.0
    %v1880 = vpack.c.bf16 %v1879, %v1878
    %v1882 = vlaneseq
    %v1883 = vshrl.u32 %v1882, 7
    %v1884 = vsub.s32 0, %v1883
    %v1885 = vrot.slane %v1724, %v1884
    %v1891 = vunpack.c.l.b16 %v1719
    %v1892 = vunpack.c.l.b16 %v1720
    %v1893 = vunpack.c.l.b16 %v1721
    %v1894 = vunpack.c.l.b16 %v1722
    %v1895 = vpack.c.b16 %v1892, %v1891
    %v1896 = vpack.c.b16 %v1894, %v1893
    %v1900 = vsel %vm124, %v1880, 0
    %1902 = vmatprep.subr.bf16.mxu0 0
    %1903 = vmatpush1.bf16.msra.mxu0 %v1895
    %1904 = vmatprep.subr.bf16.mxu0 0
    %1905 = vmatpush1.bf16.msra.mxu0 %v1896
    %1906 = vmatprep.subr.bf16.mxu0 0
    %1907 = vmatpush1.bf16.msra.mxu0 0
    %1908 = vmatprep.subr.bf16.mxu0 0
    %1909 = vmatpush1.bf16.msra.mxu0 0
    %1910 = vmatprep.subr.bf16.mxu0 0
    %1911 = vmatpush1.bf16.msra.mxu0 0
    %1912 = vmatprep.subr.bf16.mxu0 0
    %1913 = vmatpush1.bf16.msra.mxu0 0
    %1914 = vmatprep.subr.bf16.mxu0 0
    %1915 = vmatpush1.bf16.msra.mxu0 0
    %1916 = vmatprep.subr.bf16.mxu0 0
    %1917 = vmatpush1.bf16.msra.mxu0 0
    %1918 = vmatprep.subr.bf16.mxu0 0
    %1919 = vmatpush1.bf16.msra.mxu0 0
    %1920 = vmatprep.subr.bf16.mxu0 0
    %1921 = vmatpush1.bf16.msra.mxu0 0
    %1922 = vmatprep.subr.bf16.mxu0 0
    %1923 = vmatpush1.bf16.msra.mxu0 0
    %1924 = vmatprep.subr.bf16.mxu0 0
    %1925 = vmatpush1.bf16.msra.mxu0 0
    %1926 = vmatprep.subr.bf16.mxu0 0
    %1927 = vmatpush1.bf16.msra.mxu0 0
    %1928 = vmatprep.subr.bf16.mxu0 0
    %1929 = vmatpush1.bf16.msra.mxu0 0
    %1930 = vmatprep.subr.bf16.mxu0 0
    %1931 = vmatpush1.bf16.msra.mxu0 0
    %1932 = vmatprep.subr.bf16.mxu0 0
    %1933 = vmatpush1.bf16.msra.mxu0 0
    %1934 = vmatprep.mubr.bf16.mxu0 0
    %1935 = vmatmul.mubr.bf16.gmra.mrb[0].mxu0 %v1900
    %v1936 = vpop.f32.mrb[0].mxu0
    %v1937 = vadd.f32 %v1885, %v1936
    %v1938 = vpop.f32.mrb[0].mxu0
    %v1939 = vpop.f32.mrb[0].mxu0
    %v1940 = vadd.f32 %v1885, %v1939
    %v1941 = vpop.f32.mrb[0].mxu0
    %1942 = vdwg.mxu0
    %v1943 = vadd.f32 %v1937, %v51
    %v1944 = vadd.f32 %v1940, %v52
    %v1945 = vpack.c.bf16 %v1944, %v1943
    %v1946 = vld [vmem:[%s6] sm:$0xf]
    %v1947 = vld [vmem:[%s6 + $0x4] sm:$0xf]
    %v1948 = vld [vmem:[%s6 + $0x8] sm:$0xf]
    %v1949 = vld [vmem:[%s6 + $0xc] sm:$0xf]
    %v1950 = vld [vmem:[%s7] sm:$0x1]
    %v1952 = vlaneseq
    %v1953 = vshrl.u32 %v1952, 7
    %v1954 = vsub.s32 0, %v1953
    %v1955 = vrot.slane %v1950, %v1954
    %v1961 = vunpack.c.l.b16 %v1946
    %v1962 = vunpack.c.l.b16 %v1947
    %v1963 = vunpack.c.l.b16 %v1948
    %v1964 = vunpack.c.l.b16 %v1949
    %v1965 = vpack.c.b16 %v1962, %v1961
    %v1966 = vpack.c.b16 %v1964, %v1963
    %v1970 = vsel %vm124, %v1945, 0
    %1972 = vmatprep.subr.bf16.mxu0 0
    %1973 = vmatpush1.bf16.msra.mxu0 %v1965
    %1974 = vmatprep.subr.bf16.mxu0 0
    %1975 = vmatpush1.bf16.msra.mxu0 %v1966
    %1976 = vmatprep.subr.bf16.mxu0 0
    %1977 = vmatpush1.bf16.msra.mxu0 0
    %1978 = vmatprep.subr.bf16.mxu0 0
    %1979 = vmatpush1.bf16.msra.mxu0 0
    %1980 = vmatprep.subr.bf16.mxu0 0
    %1981 = vmatpush1.bf16.msra.mxu0 0
    %1982 = vmatprep.subr.bf16.mxu0 0
    %1983 = vmatpush1.bf16.msra.mxu0 0
    %1984 = vmatprep.subr.bf16.mxu0 0
    %1985 = vmatpush1.bf16.msra.mxu0 0
    %1986 = vmatprep.subr.bf16.mxu0 0
    %1987 = vmatpush1.bf16.msra.mxu0 0
    %1988 = vmatprep.subr.bf16.mxu0 0
    %1989 = vmatpush1.bf16.msra.mxu0 0
    %1990 = vmatprep.subr.bf16.mxu0 0
    %1991 = vmatpush1.bf16.msra.mxu0 0
    %1992 = vmatprep.subr.bf16.mxu0 0
    %1993 = vmatpush1.bf16.msra.mxu0 0
    %1994 = vmatprep.subr.bf16.mxu0 0
    %1995 = vmatpush1.bf16.msra.mxu0 0
    %1996 = vmatprep.subr.bf16.mxu0 0
    %1997 = vmatpush1.bf16.msra.mxu0 0
    %1998 = vmatprep.subr.bf16.mxu0 0
    %1999 = vmatpush1.bf16.msra.mxu0 0
    %2000 = vmatprep.subr.bf16.mxu0 0
    %2001 = vmatpush1.bf16.msra.mxu0 0
    %2002 = vmatprep.subr.bf16.mxu0 0
    %2003 = vmatpush1.bf16.msra.mxu0 0
    %2004 = vmatprep.mubr.bf16.mxu0 0
    %2005 = vmatmul.mubr.bf16.gmra.mrb[0].mxu0 %v1970
    %v2006 = vpop.f32.mrb[0].mxu0
    %v2007 = vadd.f32 %v1955, %v2006
    %v2008 = vpop.f32.mrb[0].mxu0
    %v2009 = vpop.f32.mrb[0].mxu0
    %v2010 = vadd.f32 %v1955, %v2009
    %v2011 = vpop.f32.mrb[0].mxu0
    %2012 = vdwg.mxu0
    %v2013 = vmax.f32 %v2007, 0.0
    %v2014 = vmax.f32 %v2010, 0.0
    %v2015 = vadd.f32 %v2013, 1e-05
    %v2016 = vadd.f32 %v2014, 1e-05
    %v2017 = vld [vmem:[%s8] sm:$0xf]
    %v2018 = vld [vmem:[%s8 + $0x4] sm:$0xf]
    %v2019 = vld [vmem:[%s8 + $0x8] sm:$0xf]
    %v2020 = vld [vmem:[%s8 + $0xc] sm:$0xf]
    %v2021 = vld [vmem:[%s8 + $0x10] sm:$0xf]
    %v2022 = vld [vmem:[%s8 + $0x14] sm:$0xf]
    %v2023 = vld [vmem:[%s8 + $0x18] sm:$0xf]
    %v2024 = vld [vmem:[%s8 + $0x1c] sm:$0xf]
    %v2025 = vld [vmem:[%s9] sm:$0x1]
    %v2026 = vld [vmem:[%s10] sm:$0xf]
    %v2027 = vld [vmem:[%s10 + $0x4] sm:$0xf]
    %v2028 = vld [vmem:[%s10 + $0x8] sm:$0xf]
    %v2029 = vld [vmem:[%s10 + $0xc] sm:$0xf]
    %v2030 = vld [vmem:[%s10 + $0x10] sm:$0xf]
    %v2031 = vld [vmem:[%s10 + $0x14] sm:$0xf]
    %v2032 = vld [vmem:[%s10 + $0x18] sm:$0xf]
    %v2033 = vld [vmem:[%s10 + $0x1c] sm:$0xf]
    %v2034 = vld [vmem:[%s11] sm:$0x1]
    %v2035 = vmax.f32 %v2015, 0.0
    %v2036 = vmax.f32 %v2016, 0.0
    %v2037 = vadd.f32 %v2035, 1e-05
    %v2038 = vadd.f32 %v2036, 1e-05
    %v2039 = vmin.f32 %v2037, 100.0
    %v2040 = vmin.f32 %v2038, 100.0
    %v2041 = vpack.c.bf16 %v2040, %v2039
    %2042 = vmatprep.subr.bf16.mxu0 0
    %2043 = vmatpush1.bf16.msra.mxu0 %v2041
    %2044 = vmatprep.subr.bf16.mxu0 0
    %2045 = vmatpush1.bf16.msra.mxu0 0
    %2046 = vmatprep.subr.bf16.mxu0 0
    %2047 = vmatpush1.bf16.msra.mxu0 0
    %2048 = vmatprep.subr.bf16.mxu0 0
    %2049 = vmatpush1.bf16.msra.mxu0 0
    %2050 = vmatprep.subr.bf16.mxu0 0
    %2051 = vmatpush1.bf16.msra.mxu0 0
    %2052 = vmatprep.subr.bf16.mxu0 0
    %2053 = vmatpush1.bf16.msra.mxu0 0
    %2054 = vmatprep.subr.bf16.mxu0 0
    %2055 = vmatpush1.bf16.msra.mxu0 0
    %2056 = vmatprep.subr.bf16.mxu0 0
    %2057 = vmatpush1.bf16.msra.mxu0 0
    %2058 = vmatprep.subr.bf16.mxu0 0
    %2059 = vmatpush1.bf16.msra.mxu0 0
    %2060 = vmatprep.subr.bf16.mxu0 0
    %2061 = vmatpush1.bf16.msra.mxu0 0
    %2062 = vmatprep.subr.bf16.mxu0 0
    %2063 = vmatpush1.bf16.msra.mxu0 0
    %2064 = vmatprep.subr.bf16.mxu0 0
    %2065 = vmatpush1.bf16.msra.mxu0 0
    %2066 = vmatprep.subr.bf16.mxu0 0
    %2067 = vmatpush1.bf16.msra.mxu0 0
    %2068 = vmatprep.subr.bf16.mxu0 0
    %2069 = vmatpush1.bf16.msra.mxu0 0
    %2070 = vmatprep.subr.bf16.mxu0 0
    %2071 = vmatpush1.bf16.msra.mxu0 0
    %2072 = vmatprep.subr.bf16.mxu0 0
    %2073 = vmatpush1.bf16.msra.mxu0 0
    %2074 = vmatprep.mubr.bf16.mxu0 0
    %2075 = vmatmul.mubr.bf16.gmra.mrb[0].mxu0 %v77
    %v2076 = vpop.f32.mrb[0].mxu0
    %v2077 = vadd.f32 0.0, %v2076
    %v2078 = vpop.f32.mrb[0].mxu0
    %v2079 = vpop.f32.mrb[0].mxu0
    %v2080 = vadd.f32 0.0, %v2079
    %v2081 = vpop.f32.mrb[0].mxu0
    %2082 = vdwg.mxu0
    %v2083 = vmin.f32 %v2077, 100.0
    %v2084 = vmin.f32 %v2080, 100.0
    %v2085 = vmul.f32 %v2083, %v2083
    %v2086 = vmul.f32 %v2084, %v2084
    %vm2087 = vcmask 523264
    %v2088 = vsel %vm2087, %v2085, 0.0
    %2089 = vadd.xlane.f32.xlu0 %v2088
    %v2090 = vpop.xlane.xlu0 %2089
    %v2091 = vsel %vm2087, %v2086, 0.0
    %2092 = vadd.xlane.f32.xlu0 %v2091
    %v2093 = vpop.xlane.xlu0 %2092
    %v2094 = vmax.f32 %v2090, 1e-24
    %v2095 = vmax.f32 %v2093, 1e-24
    %v2096 = vrsqrt.pop %v2094
    %v2097 = vrsqrt.pop %v2095
    %v2098 = vmul.f32 %v2015, %v2015
    %v2099 = vmul.f32 %v2016, %v2016
    %v2100 = vsel %vm2087, %v2098, 0.0
    %2101 = vadd.xlane.f32.xlu0 %v2100
    %v2102 = vpop.xlane.xlu0 %2101
    %v2103 = vsel %vm2087, %v2099, 0.0
    %2104 = vadd.xlane.f32.xlu0 %v2103
    %v2105 = vpop.xlane.xlu0 %2104
    %v2106 = vrsqrt.pop %v2102
    %v2107 = vmul.f32 %v2102, %v2106
    %vm2108 = vcmp.eq.f32.partialorder %v2102, inf
    %v2109 = vsel %vm2108, %v2102, %v2107
    %vm2110 = vcmp.eq.f32.partialorder %v2102, 0.0
    %v2111 = vand.u32 %v2102, 2147483648
    %v2112 = vsel %vm2110, %v2111, %v2109
    %v2113 = vrsqrt.pop %v2105
    %v2114 = vmul.f32 %v2105, %v2113
    %vm2115 = vcmp.eq.f32.partialorder %v2105, inf
    %v2116 = vsel %vm2115, %v2105, %v2114
    %vm2117 = vcmp.eq.f32.partialorder %v2105, 0.0
    %v2118 = vand.u32 %v2105, 2147483648
    %v2119 = vsel %vm2117, %v2118, %v2116
    %v2120 = vmul.f32 %v2096, %v2112
    %v2121 = vmul.f32 %v2097, %v2119
    %v2122 = vmul.f32 %v2083, %v2120
    %v2123 = vmul.f32 %v2084, %v2121
    %v2124 = vadd.f32 %v2122, %v2015
    %v2125 = vadd.f32 %v2123, %v2016
    %v2126 = vpack.c.bf16 %v2125, %v2124
    %v2128 = vlaneseq
    %v2129 = vshrl.u32 %v2128, 7
    %v2130 = vsub.s32 0, %v2129
    %v2131 = vrot.slane %v2025, %v2130
    %v2141 = vunpack.c.l.b16 %v2017
    %v2142 = vunpack.c.l.b16 %v2018
    %v2143 = vunpack.c.l.b16 %v2019
    %v2144 = vunpack.c.l.b16 %v2020
    %v2145 = vunpack.c.l.b16 %v2021
    %v2146 = vunpack.c.l.b16 %v2022
    %v2147 = vunpack.c.l.b16 %v2023
    %v2148 = vunpack.c.l.b16 %v2024
    %v2149 = vpack.c.b16 %v2142, %v2141
    %v2150 = vpack.c.b16 %v2144, %v2143
    %v2151 = vpack.c.b16 %v2146, %v2145
    %v2152 = vpack.c.b16 %v2148, %v2147
    %v2158 = vsel %vm2087, %v2126, 0
    %2160 = vmatprep.subr.bf16.mxu0 0
    %2161 = vmatpush1.bf16.msra.mxu0 %v2149
    %2162 = vmatprep.subr.bf16.mxu0 0
    %2163 = vmatpush1.bf16.msra.mxu0 %v2150
    %2164 = vmatprep.subr.bf16.mxu0 0
    %2165 = vmatpush1.bf16.msra.mxu0 %v2151
    %2166 = vmatprep.subr.bf16.mxu0 0
    %2167 = vmatpush1.bf16.msra.mxu0 %v2152
    %2168 = vmatprep.subr.bf16.mxu0 0
    %2169 = vmatpush1.bf16.msra.mxu0 0
    %2170 = vmatprep.subr.bf16.mxu0 0
    %2171 = vmatpush1.bf16.msra.mxu0 0
    %2172 = vmatprep.subr.bf16.mxu0 0
    %2173 = vmatpush1.bf16.msra.mxu0 0
    %2174 = vmatprep.subr.bf16.mxu0 0
    %2175 = vmatpush1.bf16.msra.mxu0 0
    %2176 = vmatprep.subr.bf16.mxu0 0
    %2177 = vmatpush1.bf16.msra.mxu0 0
    %2178 = vmatprep.subr.bf16.mxu0 0
    %2179 = vmatpush1.bf16.msra.mxu0 0
    %2180 = vmatprep.subr.bf16.mxu0 0
    %2181 = vmatpush1.bf16.msra.mxu0 0
    %2182 = vmatprep.subr.bf16.mxu0 0
    %2183 = vmatpush1.bf16.msra.mxu0 0
    %2184 = vmatprep.subr.bf16.mxu0 0
    %2185 = vmatpush1.bf16.msra.mxu0 0
    %2186 = vmatprep.subr.bf16.mxu0 0
    %2187 = vmatpush1.bf16.msra.mxu0 0
    %2188 = vmatprep.subr.bf16.mxu0 0
    %2189 = vmatpush1.bf16.msra.mxu0 0
    %2190 = vmatprep.subr.bf16.mxu0 0
    %2191 = vmatpush1.bf16.msra.mxu0 0
    %2192 = vmatprep.mubr.bf16.mxu0 0
    %2193 = vmatmul.mubr.bf16.gmra.mrb[0].mxu0 %v2158
    %v2194 = vpop.f32.mrb[0].mxu0
    %v2195 = vadd.f32 %v2131, %v2194
    %v2196 = vpop.f32.mrb[0].mxu0
    %v2197 = vpop.f32.mrb[0].mxu0
    %v2198 = vadd.f32 %v2131, %v2197
    %v2199 = vpop.f32.mrb[0].mxu0
    %2200 = vdwg.mxu0
    %v2201 = vmax.f32 %v2195, 0.0
    %v2202 = vmax.f32 %v2198, 0.0
    %v2203 = vpack.c.bf16 %v2202, %v2201
    %v2205 = vlaneseq
    %v2206 = vshrl.u32 %v2205, 7
    %v2207 = vsub.s32 0, %v2206
    %v2208 = vrot.slane %v2034, %v2207
    %v2218 = vunpack.c.l.b16 %v2026
    %v2219 = vunpack.c.l.b16 %v2027
    %v2220 = vunpack.c.l.b16 %v2028
    %v2221 = vunpack.c.l.b16 %v2029
    %v2222 = vunpack.c.l.b16 %v2030
    %v2223 = vunpack.c.l.b16 %v2031
    %v2224 = vunpack.c.l.b16 %v2032
    %v2225 = vunpack.c.l.b16 %v2033
    %v2226 = vpack.c.b16 %v2219, %v2218
    %v2227 = vpack.c.b16 %v2221, %v2220
    %v2228 = vpack.c.b16 %v2223, %v2222
    %v2229 = vpack.c.b16 %v2225, %v2224
    %v2235 = vsel %vm2087, %v2203, 0
    %2237 = vmatprep.subr.bf16.mxu0 0
    %2238 = vmatpush1.bf16.msra.mxu0 %v2226
    %2239 = vmatprep.subr.bf16.mxu0 0
    %2240 = vmatpush1.bf16.msra.mxu0 %v2227
    %2241 = vmatprep.subr.bf16.mxu0 0
    %2242 = vmatpush1.bf16.msra.mxu0 %v2228
    %2243 = vmatprep.subr.bf16.mxu0 0
    %2244 = vmatpush1.bf16.msra.mxu0 %v2229
    %2245 = vmatprep.subr.bf16.mxu0 0
    %2246 = vmatpush1.bf16.msra.mxu0 0
    %2247 = vmatprep.subr.bf16.mxu0 0
    %2248 = vmatpush1.bf16.msra.mxu0 0
    %2249 = vmatprep.subr.bf16.mxu0 0
    %2250 = vmatpush1.bf16.msra.mxu0 0
    %2251 = vmatprep.subr.bf16.mxu0 0
    %2252 = vmatpush1.bf16.msra.mxu0 0
    %2253 = vmatprep.subr.bf16.mxu0 0
    %2254 = vmatpush1.bf16.msra.mxu0 0
    %2255 = vmatprep.subr.bf16.mxu0 0
    %2256 = vmatpush1.bf16.msra.mxu0 0
    %2257 = vmatprep.subr.bf16.mxu0 0
    %2258 = vmatpush1.bf16.msra.mxu0 0
    %2259 = vmatprep.subr.bf16.mxu0 0
    %2260 = vmatpush1.bf16.msra.mxu0 0
    %2261 = vmatprep.subr.bf16.mxu0 0
    %2262 = vmatpush1.bf16.msra.mxu0 0
    %2263 = vmatprep.subr.bf16.mxu0 0
    %2264 = vmatpush1.bf16.msra.mxu0 0
    %2265 = vmatprep.subr.bf16.mxu0 0
    %2266 = vmatpush1.bf16.msra.mxu0 0
    %2267 = vmatprep.subr.bf16.mxu0 0
    %2268 = vmatpush1.bf16.msra.mxu0 0
    %2269 = vmatprep.mubr.bf16.mxu0 0
    %2270 = vmatmul.mubr.bf16.gmra.mrb[0].mxu0 %v2235
    %v2271 = vpop.f32.mrb[0].mxu0
    %v2272 = vadd.f32 %v2208, %v2271
    %v2273 = vpop.f32.mrb[0].mxu0
    %v2274 = vpop.f32.mrb[0].mxu0
    %v2275 = vadd.f32 %v2208, %v2274
    %v2276 = vpop.f32.mrb[0].mxu0
    %2277 = vdwg.mxu0
    %v2278 = vmax.f32 %v2272, 0.0
    %v2279 = vmax.f32 %v2275, 0.0
    %v2280 = vadd.f32 %v2278, 1e-05
    %v2281 = vadd.f32 %v2279, 1e-05
    %s2282 = scalar_lea.vmem %s8, 32
    %v2283 = vld [vmem:[%s2282] sm:$0xf]
    %v2284 = vld [vmem:[%s2282 + $0x4] sm:$0xf]
    %v2285 = vld [vmem:[%s2282 + $0x8] sm:$0xf]
    %v2286 = vld [vmem:[%s2282 + $0xc] sm:$0xf]
    %v2287 = vld [vmem:[%s2282 + $0x10] sm:$0xf]
    %v2288 = vld [vmem:[%s2282 + $0x14] sm:$0xf]
    %v2289 = vld [vmem:[%s2282 + $0x18] sm:$0xf]
    %v2290 = vld [vmem:[%s2282 + $0x1c] sm:$0xf]
    %s2291 = scalar_lea.vmem %s9, 1
    %v2292 = vld [vmem:[%s2291] sm:$0x1]
    %s2293 = scalar_lea.vmem %s10, 32
    %v2294 = vld [vmem:[%s2293] sm:$0xf]
    %v2295 = vld [vmem:[%s2293 + $0x4] sm:$0xf]
    %v2296 = vld [vmem:[%s2293 + $0x8] sm:$0xf]
    %v2297 = vld [vmem:[%s2293 + $0xc] sm:$0xf]
    %v2298 = vld [vmem:[%s2293 + $0x10] sm:$0xf]
    %v2299 = vld [vmem:[%s2293 + $0x14] sm:$0xf]
    %v2300 = vld [vmem:[%s2293 + $0x18] sm:$0xf]
    %v2301 = vld [vmem:[%s2293 + $0x1c] sm:$0xf]
    %s2302 = scalar_lea.vmem %s11, 1
    %v2303 = vld [vmem:[%s2302] sm:$0x1]
    %v2304 = vmax.f32 %v2280, 0.0
    %v2305 = vmax.f32 %v2281, 0.0
    %v2306 = vadd.f32 %v2304, 1e-05
    %v2307 = vadd.f32 %v2305, 1e-05
    %v2308 = vmin.f32 %v2306, 100.0
    %v2309 = vmin.f32 %v2307, 100.0
    %v2310 = vpack.c.bf16 %v2309, %v2308
    %2311 = vmatprep.subr.bf16.mxu0 0
    %2312 = vmatpush1.bf16.msra.mxu0 %v2310
    %2313 = vmatprep.subr.bf16.mxu0 0
    %2314 = vmatpush1.bf16.msra.mxu0 0
    %2315 = vmatprep.subr.bf16.mxu0 0
    %2316 = vmatpush1.bf16.msra.mxu0 0
    %2317 = vmatprep.subr.bf16.mxu0 0
    %2318 = vmatpush1.bf16.msra.mxu0 0
    %2319 = vmatprep.subr.bf16.mxu0 0
    %2320 = vmatpush1.bf16.msra.mxu0 0
    %2321 = vmatprep.subr.bf16.mxu0 0
    %2322 = vmatpush1.bf16.msra.mxu0 0
    %2323 = vmatprep.subr.bf16.mxu0 0
    %2324 = vmatpush1.bf16.msra.mxu0 0
    %2325 = vmatprep.subr.bf16.mxu0 0
    %2326 = vmatpush1.bf16.msra.mxu0 0
    %2327 = vmatprep.subr.bf16.mxu0 0
    %2328 = vmatpush1.bf16.msra.mxu0 0
    %2329 = vmatprep.subr.bf16.mxu0 0
    %2330 = vmatpush1.bf16.msra.mxu0 0
    %2331 = vmatprep.subr.bf16.mxu0 0
    %2332 = vmatpush1.bf16.msra.mxu0 0
    %2333 = vmatprep.subr.bf16.mxu0 0
    %2334 = vmatpush1.bf16.msra.mxu0 0
    %2335 = vmatprep.subr.bf16.mxu0 0
    %2336 = vmatpush1.bf16.msra.mxu0 0
    %2337 = vmatprep.subr.bf16.mxu0 0
    %2338 = vmatpush1.bf16.msra.mxu0 0
    %2339 = vmatprep.subr.bf16.mxu0 0
    %2340 = vmatpush1.bf16.msra.mxu0 0
    %2341 = vmatprep.subr.bf16.mxu0 0
    %2342 = vmatpush1.bf16.msra.mxu0 0
    %2343 = vmatprep.mubr.bf16.mxu0 0
    %2344 = vmatmul.mubr.bf16.gmra.mrb[0].mxu0 %v77
    %v2345 = vpop.f32.mrb[0].mxu0
    %v2346 = vadd.f32 0.0, %v2345
    %v2347 = vpop.f32.mrb[0].mxu0
    %v2348 = vpop.f32.mrb[0].mxu0
    %v2349 = vadd.f32 0.0, %v2348
    %v2350 = vpop.f32.mrb[0].mxu0
    %2351 = vdwg.mxu0
    %v2352 = vmin.f32 %v2346, 100.0
    %v2353 = vmin.f32 %v2349, 100.0
    %v2354 = vmul.f32 %v2352, %v2352
    %v2355 = vmul.f32 %v2353, %v2353
    %v2356 = vsel %vm2087, %v2354, 0.0
    %2357 = vadd.xlane.f32.xlu0 %v2356
    %v2358 = vpop.xlane.xlu0 %2357
    %v2359 = vsel %vm2087, %v2355, 0.0
    %2360 = vadd.xlane.f32.xlu0 %v2359
    %v2361 = vpop.xlane.xlu0 %2360
    %v2362 = vmax.f32 %v2358, 1e-24
    %v2363 = vmax.f32 %v2361, 1e-24
    %v2364 = vrsqrt.pop %v2362
    %v2365 = vrsqrt.pop %v2363
    %v2366 = vmul.f32 %v2280, %v2280
    %v2367 = vmul.f32 %v2281, %v2281
    %v2368 = vsel %vm2087, %v2366, 0.0
    %2369 = vadd.xlane.f32.xlu0 %v2368
    %v2370 = vpop.xlane.xlu0 %2369
    %v2371 = vsel %vm2087, %v2367, 0.0
    %2372 = vadd.xlane.f32.xlu0 %v2371
    %v2373 = vpop.xlane.xlu0 %2372
    %v2374 = vrsqrt.pop %v2370
    %v2375 = vmul.f32 %v2370, %v2374
    %vm2376 = vcmp.eq.f32.partialorder %v2370, inf
    %v2377 = vsel %vm2376, %v2370, %v2375
    %vm2378 = vcmp.eq.f32.partialorder %v2370, 0.0
    %v2379 = vand.u32 %v2370, 2147483648
    %v2380 = vsel %vm2378, %v2379, %v2377
    %v2381 = vrsqrt.pop %v2373
    %v2382 = vmul.f32 %v2373, %v2381
    %vm2383 = vcmp.eq.f32.partialorder %v2373, inf
    %v2384 = vsel %vm2383, %v2373, %v2382
    %vm2385 = vcmp.eq.f32.partialorder %v2373, 0.0
    %v2386 = vand.u32 %v2373, 2147483648
    %v2387 = vsel %vm2385, %v2386, %v2384
    %v2388 = vmul.f32 %v2364, %v2380
    %v2389 = vmul.f32 %v2365, %v2387
    %v2390 = vmul.f32 %v2352, %v2388
    %v2391 = vmul.f32 %v2353, %v2389
    %v2392 = vadd.f32 %v2390, %v2280
    %v2393 = vadd.f32 %v2391, %v2281
    %v2394 = vpack.c.bf16 %v2393, %v2392
    %v2396 = vlaneseq
    %v2397 = vshrl.u32 %v2396, 7
    %v2398 = vsub.s32 0, %v2397
    %v2399 = vrot.slane %v2292, %v2398
    %v2409 = vunpack.c.l.b16 %v2283
    %v2410 = vunpack.c.l.b16 %v2284
    %v2411 = vunpack.c.l.b16 %v2285
    %v2412 = vunpack.c.l.b16 %v2286
    %v2413 = vunpack.c.l.b16 %v2287
    %v2414 = vunpack.c.l.b16 %v2288
    %v2415 = vunpack.c.l.b16 %v2289
    %v2416 = vunpack.c.l.b16 %v2290
    %v2417 = vpack.c.b16 %v2410, %v2409
    %v2418 = vpack.c.b16 %v2412, %v2411
    %v2419 = vpack.c.b16 %v2414, %v2413
    %v2420 = vpack.c.b16 %v2416, %v2415
    %v2426 = vsel %vm2087, %v2394, 0
    %2428 = vmatprep.subr.bf16.mxu0 0
    %2429 = vmatpush1.bf16.msra.mxu0 %v2417
    %2430 = vmatprep.subr.bf16.mxu0 0
    %2431 = vmatpush1.bf16.msra.mxu0 %v2418
    %2432 = vmatprep.subr.bf16.mxu0 0
    %2433 = vmatpush1.bf16.msra.mxu0 %v2419
    %2434 = vmatprep.subr.bf16.mxu0 0
    %2435 = vmatpush1.bf16.msra.mxu0 %v2420
    %2436 = vmatprep.subr.bf16.mxu0 0
    %2437 = vmatpush1.bf16.msra.mxu0 0
    %2438 = vmatprep.subr.bf16.mxu0 0
    %2439 = vmatpush1.bf16.msra.mxu0 0
    %2440 = vmatprep.subr.bf16.mxu0 0
    %2441 = vmatpush1.bf16.msra.mxu0 0
    %2442 = vmatprep.subr.bf16.mxu0 0
    %2443 = vmatpush1.bf16.msra.mxu0 0
    %2444 = vmatprep.subr.bf16.mxu0 0
    %2445 = vmatpush1.bf16.msra.mxu0 0
    %2446 = vmatprep.subr.bf16.mxu0 0
    %2447 = vmatpush1.bf16.msra.mxu0 0
    %2448 = vmatprep.subr.bf16.mxu0 0
    %2449 = vmatpush1.bf16.msra.mxu0 0
    %2450 = vmatprep.subr.bf16.mxu0 0
    %2451 = vmatpush1.bf16.msra.mxu0 0
    %2452 = vmatprep.subr.bf16.mxu0 0
    %2453 = vmatpush1.bf16.msra.mxu0 0
    %2454 = vmatprep.subr.bf16.mxu0 0
    %2455 = vmatpush1.bf16.msra.mxu0 0
    %2456 = vmatprep.subr.bf16.mxu0 0
    %2457 = vmatpush1.bf16.msra.mxu0 0
    %2458 = vmatprep.subr.bf16.mxu0 0
    %2459 = vmatpush1.bf16.msra.mxu0 0
    %2460 = vmatprep.mubr.bf16.mxu0 0
    %2461 = vmatmul.mubr.bf16.gmra.mrb[0].mxu0 %v2426
    %v2462 = vpop.f32.mrb[0].mxu0
    %v2463 = vadd.f32 %v2399, %v2462
    %v2464 = vpop.f32.mrb[0].mxu0
    %v2465 = vpop.f32.mrb[0].mxu0
    %v2466 = vadd.f32 %v2399, %v2465
    %v2467 = vpop.f32.mrb[0].mxu0
    %2468 = vdwg.mxu0
    %v2469 = vmax.f32 %v2463, 0.0
    %v2470 = vmax.f32 %v2466, 0.0
    %v2471 = vpack.c.bf16 %v2470, %v2469
    %v2473 = vlaneseq
    %v2474 = vshrl.u32 %v2473, 7
    %v2475 = vsub.s32 0, %v2474
    %v2476 = vrot.slane %v2303, %v2475
    %v2486 = vunpack.c.l.b16 %v2294
    %v2487 = vunpack.c.l.b16 %v2295
    %v2488 = vunpack.c.l.b16 %v2296
    %v2489 = vunpack.c.l.b16 %v2297
    %v2490 = vunpack.c.l.b16 %v2298
    %v2491 = vunpack.c.l.b16 %v2299
    %v2492 = vunpack.c.l.b16 %v2300
    %v2493 = vunpack.c.l.b16 %v2301
    %v2494 = vpack.c.b16 %v2487, %v2486
    %v2495 = vpack.c.b16 %v2489, %v2488
    %v2496 = vpack.c.b16 %v2491, %v2490
    %v2497 = vpack.c.b16 %v2493, %v2492
    %v2503 = vsel %vm2087, %v2471, 0
    %2505 = vmatprep.subr.bf16.mxu0 0
    %2506 = vmatpush1.bf16.msra.mxu0 %v2494
    %2507 = vmatprep.subr.bf16.mxu0 0
    %2508 = vmatpush1.bf16.msra.mxu0 %v2495
    %2509 = vmatprep.subr.bf16.mxu0 0
    %2510 = vmatpush1.bf16.msra.mxu0 %v2496
    %2511 = vmatprep.subr.bf16.mxu0 0
    %2512 = vmatpush1.bf16.msra.mxu0 %v2497
    %2513 = vmatprep.subr.bf16.mxu0 0
    %2514 = vmatpush1.bf16.msra.mxu0 0
    %2515 = vmatprep.subr.bf16.mxu0 0
    %2516 = vmatpush1.bf16.msra.mxu0 0
    %2517 = vmatprep.subr.bf16.mxu0 0
    %2518 = vmatpush1.bf16.msra.mxu0 0
    %2519 = vmatprep.subr.bf16.mxu0 0
    %2520 = vmatpush1.bf16.msra.mxu0 0
    %2521 = vmatprep.subr.bf16.mxu0 0
    %2522 = vmatpush1.bf16.msra.mxu0 0
    %2523 = vmatprep.subr.bf16.mxu0 0
    %2524 = vmatpush1.bf16.msra.mxu0 0
    %2525 = vmatprep.subr.bf16.mxu0 0
    %2526 = vmatpush1.bf16.msra.mxu0 0
    %2527 = vmatprep.subr.bf16.mxu0 0
    %2528 = vmatpush1.bf16.msra.mxu0 0
    %2529 = vmatprep.subr.bf16.mxu0 0
    %2530 = vmatpush1.bf16.msra.mxu0 0
    %2531 = vmatprep.subr.bf16.mxu0 0
    %2532 = vmatpush1.bf16.msra.mxu0 0
    %2533 = vmatprep.subr.bf16.mxu0 0
    %2534 = vmatpush1.bf16.msra.mxu0 0
    %2535 = vmatprep.subr.bf16.mxu0 0
    %2536 = vmatpush1.bf16.msra.mxu0 0
    %2537 = vmatprep.mubr.bf16.mxu0 0
    %2538 = vmatmul.mubr.bf16.gmra.mrb[0].mxu0 %v2503
    %v2539 = vpop.f32.mrb[0].mxu0
    %v2540 = vadd.f32 %v2476, %v2539
    %v2541 = vpop.f32.mrb[0].mxu0
    %v2542 = vpop.f32.mrb[0].mxu0
    %v2543 = vadd.f32 %v2476, %v2542
    %v2544 = vpop.f32.mrb[0].mxu0
    %2545 = vdwg.mxu0
    %v2546 = vmax.f32 %v2540, 0.0
    %v2547 = vmax.f32 %v2543, 0.0
    %v2548 = vadd.f32 %v2546, 1e-05
    %v2549 = vadd.f32 %v2547, 1e-05
    %s2550 = scalar_lea.vmem %s8, 64
    %v2551 = vld [vmem:[%s2550] sm:$0xf]
    %v2552 = vld [vmem:[%s2550 + $0x4] sm:$0xf]
    %v2553 = vld [vmem:[%s2550 + $0x8] sm:$0xf]
    %v2554 = vld [vmem:[%s2550 + $0xc] sm:$0xf]
    %v2555 = vld [vmem:[%s2550 + $0x10] sm:$0xf]
    %v2556 = vld [vmem:[%s2550 + $0x14] sm:$0xf]
    %v2557 = vld [vmem:[%s2550 + $0x18] sm:$0xf]
    %v2558 = vld [vmem:[%s2550 + $0x1c] sm:$0xf]
    %s2559 = scalar_lea.vmem %s9, 2
    %v2560 = vld [vmem:[%s2559] sm:$0x1]
    %s2561 = scalar_lea.vmem %s10, 64
    %v2562 = vld [vmem:[%s2561] sm:$0xf]
    %v2563 = vld [vmem:[%s2561 + $0x4] sm:$0xf]
    %v2564 = vld [vmem:[%s2561 + $0x8] sm:$0xf]
    %v2565 = vld [vmem:[%s2561 + $0xc] sm:$0xf]
    %v2566 = vld [vmem:[%s2561 + $0x10] sm:$0xf]
    %v2567 = vld [vmem:[%s2561 + $0x14] sm:$0xf]
    %v2568 = vld [vmem:[%s2561 + $0x18] sm:$0xf]
    %v2569 = vld [vmem:[%s2561 + $0x1c] sm:$0xf]
    %s2570 = scalar_lea.vmem %s11, 2
    %v2571 = vld [vmem:[%s2570] sm:$0x1]
    %v2572 = vmax.f32 %v2548, 0.0
    %v2573 = vmax.f32 %v2549, 0.0
    %v2574 = vadd.f32 %v2572, 1e-05
    %v2575 = vadd.f32 %v2573, 1e-05
    %v2576 = vmin.f32 %v2574, 100.0
    %v2577 = vmin.f32 %v2575, 100.0
    %v2578 = vpack.c.bf16 %v2577, %v2576
    %2579 = vmatprep.subr.bf16.mxu0 0
    %2580 = vmatpush1.bf16.msra.mxu0 %v2578
    %2581 = vmatprep.subr.bf16.mxu0 0
    %2582 = vmatpush1.bf16.msra.mxu0 0
    %2583 = vmatprep.subr.bf16.mxu0 0
    %2584 = vmatpush1.bf16.msra.mxu0 0
    %2585 = vmatprep.subr.bf16.mxu0 0
    %2586 = vmatpush1.bf16.msra.mxu0 0
    %2587 = vmatprep.subr.bf16.mxu0 0
    %2588 = vmatpush1.bf16.msra.mxu0 0
    %2589 = vmatprep.subr.bf16.mxu0 0
    %2590 = vmatpush1.bf16.msra.mxu0 0
    %2591 = vmatprep.subr.bf16.mxu0 0
    %2592 = vmatpush1.bf16.msra.mxu0 0
    %2593 = vmatprep.subr.bf16.mxu0 0
    %2594 = vmatpush1.bf16.msra.mxu0 0
    %2595 = vmatprep.subr.bf16.mxu0 0
    %2596 = vmatpush1.bf16.msra.mxu0 0
    %2597 = vmatprep.subr.bf16.mxu0 0
    %2598 = vmatpush1.bf16.msra.mxu0 0
    %2599 = vmatprep.subr.bf16.mxu0 0
    %2600 = vmatpush1.bf16.msra.mxu0 0
    %2601 = vmatprep.subr.bf16.mxu0 0
    %2602 = vmatpush1.bf16.msra.mxu0 0
    %2603 = vmatprep.subr.bf16.mxu0 0
    %2604 = vmatpush1.bf16.msra.mxu0 0
    %2605 = vmatprep.subr.bf16.mxu0 0
    %2606 = vmatpush1.bf16.msra.mxu0 0
    %2607 = vmatprep.subr.bf16.mxu0 0
    %2608 = vmatpush1.bf16.msra.mxu0 0
    %2609 = vmatprep.subr.bf16.mxu0 0
    %2610 = vmatpush1.bf16.msra.mxu0 0
    %2611 = vmatprep.mubr.bf16.mxu0 0
    %2612 = vmatmul.mubr.bf16.gmra.mrb[0].mxu0 %v77
    %v2613 = vpop.f32.mrb[0].mxu0
    %v2614 = vadd.f32 0.0, %v2613
    %v2615 = vpop.f32.mrb[0].mxu0
    %v2616 = vpop.f32.mrb[0].mxu0
    %v2617 = vadd.f32 0.0, %v2616
    %v2618 = vpop.f32.mrb[0].mxu0
    %2619 = vdwg.mxu0
    %v2620 = vmin.f32 %v2614, 100.0
    %v2621 = vmin.f32 %v2617, 100.0
    %v2622 = vmul.f32 %v2620, %v2620
    %v2623 = vmul.f32 %v2621, %v2621
    %v2624 = vsel %vm2087, %v2622, 0.0
    %2625 = vadd.xlane.f32.xlu0 %v2624
    %v2626 = vpop.xlane.xlu0 %2625
    %v2627 = vsel %vm2087, %v2623, 0.0
    %2628 = vadd.xlane.f32.xlu0 %v2627
    %v2629 = vpop.xlane.xlu0 %2628
    %v2630 = vmax.f32 %v2626, 1e-24
    %v2631 = vmax.f32 %v2629, 1e-24
    %v2632 = vrsqrt.pop %v2630
    %v2633 = vrsqrt.pop %v2631
    %v2634 = vmul.f32 %v2548, %v2548
    %v2635 = vmul.f32 %v2549, %v2549
    %v2636 = vsel %vm2087, %v2634, 0.0
    %2637 = vadd.xlane.f32.xlu0 %v2636
    %v2638 = vpop.xlane.xlu0 %2637
    %v2639 = vsel %vm2087, %v2635, 0.0
    %2640 = vadd.xlane.f32.xlu0 %v2639
    %v2641 = vpop.xlane.xlu0 %2640
    %v2642 = vrsqrt.pop %v2638
    %v2643 = vmul.f32 %v2638, %v2642
    %vm2644 = vcmp.eq.f32.partialorder %v2638, inf
    %v2645 = vsel %vm2644, %v2638, %v2643
    %vm2646 = vcmp.eq.f32.partialorder %v2638, 0.0
    %v2647 = vand.u32 %v2638, 2147483648
    %v2648 = vsel %vm2646, %v2647, %v2645
    %v2649 = vrsqrt.pop %v2641
    %v2650 = vmul.f32 %v2641, %v2649
    %vm2651 = vcmp.eq.f32.partialorder %v2641, inf
    %v2652 = vsel %vm2651, %v2641, %v2650
    %vm2653 = vcmp.eq.f32.partialorder %v2641, 0.0
    %v2654 = vand.u32 %v2641, 2147483648
    %v2655 = vsel %vm2653, %v2654, %v2652
    %v2656 = vmul.f32 %v2632, %v2648
    %v2657 = vmul.f32 %v2633, %v2655
    %v2658 = vmul.f32 %v2620, %v2656
    %v2659 = vmul.f32 %v2621, %v2657
    %v2660 = vadd.f32 %v2658, %v2548
    %v2661 = vadd.f32 %v2659, %v2549
    %v2662 = vpack.c.bf16 %v2661, %v2660
    %v2664 = vlaneseq
    %v2665 = vshrl.u32 %v2664, 7
    %v2666 = vsub.s32 0, %v2665
    %v2667 = vrot.slane %v2560, %v2666
    %v2677 = vunpack.c.l.b16 %v2551
    %v2678 = vunpack.c.l.b16 %v2552
    %v2679 = vunpack.c.l.b16 %v2553
    %v2680 = vunpack.c.l.b16 %v2554
    %v2681 = vunpack.c.l.b16 %v2555
    %v2682 = vunpack.c.l.b16 %v2556
    %v2683 = vunpack.c.l.b16 %v2557
    %v2684 = vunpack.c.l.b16 %v2558
    %v2685 = vpack.c.b16 %v2678, %v2677
    %v2686 = vpack.c.b16 %v2680, %v2679
    %v2687 = vpack.c.b16 %v2682, %v2681
    %v2688 = vpack.c.b16 %v2684, %v2683
    %v2694 = vsel %vm2087, %v2662, 0
    %2696 = vmatprep.subr.bf16.mxu0 0
    %2697 = vmatpush1.bf16.msra.mxu0 %v2685
    %2698 = vmatprep.subr.bf16.mxu0 0
    %2699 = vmatpush1.bf16.msra.mxu0 %v2686
    %2700 = vmatprep.subr.bf16.mxu0 0
    %2701 = vmatpush1.bf16.msra.mxu0 %v2687
    %2702 = vmatprep.subr.bf16.mxu0 0
    %2703 = vmatpush1.bf16.msra.mxu0 %v2688
    %2704 = vmatprep.subr.bf16.mxu0 0
    %2705 = vmatpush1.bf16.msra.mxu0 0
    %2706 = vmatprep.subr.bf16.mxu0 0
    %2707 = vmatpush1.bf16.msra.mxu0 0
    %2708 = vmatprep.subr.bf16.mxu0 0
    %2709 = vmatpush1.bf16.msra.mxu0 0
    %2710 = vmatprep.subr.bf16.mxu0 0
    %2711 = vmatpush1.bf16.msra.mxu0 0
    %2712 = vmatprep.subr.bf16.mxu0 0
    %2713 = vmatpush1.bf16.msra.mxu0 0
    %2714 = vmatprep.subr.bf16.mxu0 0
    %2715 = vmatpush1.bf16.msra.mxu0 0
    %2716 = vmatprep.subr.bf16.mxu0 0
    %2717 = vmatpush1.bf16.msra.mxu0 0
    %2718 = vmatprep.subr.bf16.mxu0 0
    %2719 = vmatpush1.bf16.msra.mxu0 0
    %2720 = vmatprep.subr.bf16.mxu0 0
    %2721 = vmatpush1.bf16.msra.mxu0 0
    %2722 = vmatprep.subr.bf16.mxu0 0
    %2723 = vmatpush1.bf16.msra.mxu0 0
    %2724 = vmatprep.subr.bf16.mxu0 0
    %2725 = vmatpush1.bf16.msra.mxu0 0
    %2726 = vmatprep.subr.bf16.mxu0 0
    %2727 = vmatpush1.bf16.msra.mxu0 0
    %2728 = vmatprep.mubr.bf16.mxu0 0
    %2729 = vmatmul.mubr.bf16.gmra.mrb[0].mxu0 %v2694
    %v2730 = vpop.f32.mrb[0].mxu0
    %v2731 = vadd.f32 %v2667, %v2730
    %v2732 = vpop.f32.mrb[0].mxu0
    %v2733 = vpop.f32.mrb[0].mxu0
    %v2734 = vadd.f32 %v2667, %v2733
    %v2735 = vpop.f32.mrb[0].mxu0
    %2736 = vdwg.mxu0
    %v2737 = vmax.f32 %v2731, 0.0
    %v2738 = vmax.f32 %v2734, 0.0
    %v2739 = vpack.c.bf16 %v2738, %v2737
    %v2741 = vlaneseq
    %v2742 = vshrl.u32 %v2741, 7
    %v2743 = vsub.s32 0, %v2742
    %v2744 = vrot.slane %v2571, %v2743
    %v2754 = vunpack.c.l.b16 %v2562
    %v2755 = vunpack.c.l.b16 %v2563
    %v2756 = vunpack.c.l.b16 %v2564
    %v2757 = vunpack.c.l.b16 %v2565
    %v2758 = vunpack.c.l.b16 %v2566
    %v2759 = vunpack.c.l.b16 %v2567
    %v2760 = vunpack.c.l.b16 %v2568
    %v2761 = vunpack.c.l.b16 %v2569
    %v2762 = vpack.c.b16 %v2755, %v2754
    %v2763 = vpack.c.b16 %v2757, %v2756
    %v2764 = vpack.c.b16 %v2759, %v2758
    %v2765 = vpack.c.b16 %v2761, %v2760
    %v2771 = vsel %vm2087, %v2739, 0
    %2773 = vmatprep.subr.bf16.mxu0 0
    %2774 = vmatpush1.bf16.msra.mxu0 %v2762
    %2775 = vmatprep.subr.bf16.mxu0 0
    %2776 = vmatpush1.bf16.msra.mxu0 %v2763
    %2777 = vmatprep.subr.bf16.mxu0 0
    %2778 = vmatpush1.bf16.msra.mxu0 %v2764
    %2779 = vmatprep.subr.bf16.mxu0 0
    %2780 = vmatpush1.bf16.msra.mxu0 %v2765
    %2781 = vmatprep.subr.bf16.mxu0 0
    %2782 = vmatpush1.bf16.msra.mxu0 0
    %2783 = vmatprep.subr.bf16.mxu0 0
    %2784 = vmatpush1.bf16.msra.mxu0 0
    %2785 = vmatprep.subr.bf16.mxu0 0
    %2786 = vmatpush1.bf16.msra.mxu0 0
    %2787 = vmatprep.subr.bf16.mxu0 0
    %2788 = vmatpush1.bf16.msra.mxu0 0
    %2789 = vmatprep.subr.bf16.mxu0 0
    %2790 = vmatpush1.bf16.msra.mxu0 0
    %2791 = vmatprep.subr.bf16.mxu0 0
    %2792 = vmatpush1.bf16.msra.mxu0 0
    %2793 = vmatprep.subr.bf16.mxu0 0
    %2794 = vmatpush1.bf16.msra.mxu0 0
    %2795 = vmatprep.subr.bf16.mxu0 0
    %2796 = vmatpush1.bf16.msra.mxu0 0
    %2797 = vmatprep.subr.bf16.mxu0 0
    %2798 = vmatpush1.bf16.msra.mxu0 0
    %2799 = vmatprep.subr.bf16.mxu0 0
    %2800 = vmatpush1.bf16.msra.mxu0 0
    %2801 = vmatprep.subr.bf16.mxu0 0
    %2802 = vmatpush1.bf16.msra.mxu0 0
    %2803 = vmatprep.subr.bf16.mxu0 0
    %2804 = vmatpush1.bf16.msra.mxu0 0
    %2805 = vmatprep.mubr.bf16.mxu0 0
    %2806 = vmatmul.mubr.bf16.gmra.mrb[0].mxu0 %v2771
    %v2807 = vpop.f32.mrb[0].mxu0
    %v2808 = vadd.f32 %v2744, %v2807
    %v2809 = vpop.f32.mrb[0].mxu0
    %v2810 = vpop.f32.mrb[0].mxu0
    %v2811 = vadd.f32 %v2744, %v2810
    %v2812 = vpop.f32.mrb[0].mxu0
    %2813 = vdwg.mxu0
    %v2814 = vmax.f32 %v2808, 0.0
    %v2815 = vmax.f32 %v2811, 0.0
    %v2816 = vadd.f32 %v2814, 1e-05
    %v2817 = vadd.f32 %v2815, 1e-05
    %s2818 = scalar_lea.vmem %s8, 96
    %v2819 = vld [vmem:[%s2818] sm:$0xf]
    %v2820 = vld [vmem:[%s2818 + $0x4] sm:$0xf]
    %v2821 = vld [vmem:[%s2818 + $0x8] sm:$0xf]
    %v2822 = vld [vmem:[%s2818 + $0xc] sm:$0xf]
    %v2823 = vld [vmem:[%s2818 + $0x10] sm:$0xf]
    %v2824 = vld [vmem:[%s2818 + $0x14] sm:$0xf]
    %v2825 = vld [vmem:[%s2818 + $0x18] sm:$0xf]
    %v2826 = vld [vmem:[%s2818 + $0x1c] sm:$0xf]
    %s2827 = scalar_lea.vmem %s9, 3
    %v2828 = vld [vmem:[%s2827] sm:$0x1]
    %s2829 = scalar_lea.vmem %s10, 96
    %v2830 = vld [vmem:[%s2829] sm:$0xf]
    %v2831 = vld [vmem:[%s2829 + $0x4] sm:$0xf]
    %v2832 = vld [vmem:[%s2829 + $0x8] sm:$0xf]
    %v2833 = vld [vmem:[%s2829 + $0xc] sm:$0xf]
    %v2834 = vld [vmem:[%s2829 + $0x10] sm:$0xf]
    %v2835 = vld [vmem:[%s2829 + $0x14] sm:$0xf]
    %v2836 = vld [vmem:[%s2829 + $0x18] sm:$0xf]
    %v2837 = vld [vmem:[%s2829 + $0x1c] sm:$0xf]
    %s2838 = scalar_lea.vmem %s11, 3
    %v2839 = vld [vmem:[%s2838] sm:$0x1]
    %v2840 = vmax.f32 %v2816, 0.0
    %v2841 = vmax.f32 %v2817, 0.0
    %v2842 = vadd.f32 %v2840, 1e-05
    %v2843 = vadd.f32 %v2841, 1e-05
    %v2844 = vmin.f32 %v2842, 100.0
    %v2845 = vmin.f32 %v2843, 100.0
    %v2846 = vpack.c.bf16 %v2845, %v2844
    %2847 = vmatprep.subr.bf16.mxu0 0
    %2848 = vmatpush1.bf16.msra.mxu0 %v2846
    %2849 = vmatprep.subr.bf16.mxu0 0
    %2850 = vmatpush1.bf16.msra.mxu0 0
    %2851 = vmatprep.subr.bf16.mxu0 0
    %2852 = vmatpush1.bf16.msra.mxu0 0
    %2853 = vmatprep.subr.bf16.mxu0 0
    %2854 = vmatpush1.bf16.msra.mxu0 0
    %2855 = vmatprep.subr.bf16.mxu0 0
    %2856 = vmatpush1.bf16.msra.mxu0 0
    %2857 = vmatprep.subr.bf16.mxu0 0
    %2858 = vmatpush1.bf16.msra.mxu0 0
    %2859 = vmatprep.subr.bf16.mxu0 0
    %2860 = vmatpush1.bf16.msra.mxu0 0
    %2861 = vmatprep.subr.bf16.mxu0 0
    %2862 = vmatpush1.bf16.msra.mxu0 0
    %2863 = vmatprep.subr.bf16.mxu0 0
    %2864 = vmatpush1.bf16.msra.mxu0 0
    %2865 = vmatprep.subr.bf16.mxu0 0
    %2866 = vmatpush1.bf16.msra.mxu0 0
    %2867 = vmatprep.subr.bf16.mxu0 0
    %2868 = vmatpush1.bf16.msra.mxu0 0
    %2869 = vmatprep.subr.bf16.mxu0 0
    %2870 = vmatpush1.bf16.msra.mxu0 0
    %2871 = vmatprep.subr.bf16.mxu0 0
    %2872 = vmatpush1.bf16.msra.mxu0 0
    %2873 = vmatprep.subr.bf16.mxu0 0
    %2874 = vmatpush1.bf16.msra.mxu0 0
    %2875 = vmatprep.subr.bf16.mxu0 0
    %2876 = vmatpush1.bf16.msra.mxu0 0
    %2877 = vmatprep.subr.bf16.mxu0 0
    %2878 = vmatpush1.bf16.msra.mxu0 0
    %2879 = vmatprep.mubr.bf16.mxu0 0
    %2880 = vmatmul.mubr.bf16.gmra.mrb[0].mxu0 %v77
    %v2881 = vpop.f32.mrb[0].mxu0
    %v2882 = vadd.f32 0.0, %v2881
    %v2883 = vpop.f32.mrb[0].mxu0
    %v2884 = vpop.f32.mrb[0].mxu0
    %v2885 = vadd.f32 0.0, %v2884
    %v2886 = vpop.f32.mrb[0].mxu0
    %2887 = vdwg.mxu0
    %v2888 = vmin.f32 %v2882, 100.0
    %v2889 = vmin.f32 %v2885, 100.0
    %v2890 = vmul.f32 %v2888, %v2888
    %v2891 = vmul.f32 %v2889, %v2889
    %v2892 = vsel %vm2087, %v2890, 0.0
    %2893 = vadd.xlane.f32.xlu0 %v2892
    %v2894 = vpop.xlane.xlu0 %2893
    %v2895 = vsel %vm2087, %v2891, 0.0
    %2896 = vadd.xlane.f32.xlu0 %v2895
    %v2897 = vpop.xlane.xlu0 %2896
    %v2898 = vmax.f32 %v2894, 1e-24
    %v2899 = vmax.f32 %v2897, 1e-24
    %v2900 = vrsqrt.pop %v2898
    %v2901 = vrsqrt.pop %v2899
    %v2902 = vmul.f32 %v2816, %v2816
    %v2903 = vmul.f32 %v2817, %v2817
    %v2904 = vsel %vm2087, %v2902, 0.0
    %2905 = vadd.xlane.f32.xlu0 %v2904
    %v2906 = vpop.xlane.xlu0 %2905
    %v2907 = vsel %vm2087, %v2903, 0.0
    %2908 = vadd.xlane.f32.xlu0 %v2907
    %v2909 = vpop.xlane.xlu0 %2908
    %v2910 = vrsqrt.pop %v2906
    %v2911 = vmul.f32 %v2906, %v2910
    %vm2912 = vcmp.eq.f32.partialorder %v2906, inf
    %v2913 = vsel %vm2912, %v2906, %v2911
    %vm2914 = vcmp.eq.f32.partialorder %v2906, 0.0
    %v2915 = vand.u32 %v2906, 2147483648
    %v2916 = vsel %vm2914, %v2915, %v2913
    %v2917 = vrsqrt.pop %v2909
    %v2918 = vmul.f32 %v2909, %v2917
    %vm2919 = vcmp.eq.f32.partialorder %v2909, inf
    %v2920 = vsel %vm2919, %v2909, %v2918
    %vm2921 = vcmp.eq.f32.partialorder %v2909, 0.0
    %v2922 = vand.u32 %v2909, 2147483648
    %v2923 = vsel %vm2921, %v2922, %v2920
    %v2924 = vmul.f32 %v2900, %v2916
    %v2925 = vmul.f32 %v2901, %v2923
    %v2926 = vmul.f32 %v2888, %v2924
    %v2927 = vmul.f32 %v2889, %v2925
    %v2928 = vadd.f32 %v2926, %v2816
    %v2929 = vadd.f32 %v2927, %v2817
    %v2930 = vpack.c.bf16 %v2929, %v2928
    %v2932 = vlaneseq
    %v2933 = vshrl.u32 %v2932, 7
    %v2934 = vsub.s32 0, %v2933
    %v2935 = vrot.slane %v2828, %v2934
    %v2945 = vunpack.c.l.b16 %v2819
    %v2946 = vunpack.c.l.b16 %v2820
    %v2947 = vunpack.c.l.b16 %v2821
    %v2948 = vunpack.c.l.b16 %v2822
    %v2949 = vunpack.c.l.b16 %v2823
    %v2950 = vunpack.c.l.b16 %v2824
    %v2951 = vunpack.c.l.b16 %v2825
    %v2952 = vunpack.c.l.b16 %v2826
    %v2953 = vpack.c.b16 %v2946, %v2945
    %v2954 = vpack.c.b16 %v2948, %v2947
    %v2955 = vpack.c.b16 %v2950, %v2949
    %v2956 = vpack.c.b16 %v2952, %v2951
    %v2962 = vsel %vm2087, %v2930, 0
    %2964 = vmatprep.subr.bf16.mxu0 0
    %2965 = vmatpush1.bf16.msra.mxu0 %v2953
    %2966 = vmatprep.subr.bf16.mxu0 0
    %2967 = vmatpush1.bf16.msra.mxu0 %v2954
    %2968 = vmatprep.subr.bf16.mxu0 0
    %2969 = vmatpush1.bf16.msra.mxu0 %v2955
    %2970 = vmatprep.subr.bf16.mxu0 0
    %2971 = vmatpush1.bf16.msra.mxu0 %v2956
    %2972 = vmatprep.subr.bf16.mxu0 0
    %2973 = vmatpush1.bf16.msra.mxu0 0
    %2974 = vmatprep.subr.bf16.mxu0 0
    %2975 = vmatpush1.bf16.msra.mxu0 0
    %2976 = vmatprep.subr.bf16.mxu0 0
    %2977 = vmatpush1.bf16.msra.mxu0 0
    %2978 = vmatprep.subr.bf16.mxu0 0
    %2979 = vmatpush1.bf16.msra.mxu0 0
    %2980 = vmatprep.subr.bf16.mxu0 0
    %2981 = vmatpush1.bf16.msra.mxu0 0
    %2982 = vmatprep.subr.bf16.mxu0 0
    %2983 = vmatpush1.bf16.msra.mxu0 0
    %2984 = vmatprep.subr.bf16.mxu0 0
    %2985 = vmatpush1.bf16.msra.mxu0 0
    %2986 = vmatprep.subr.bf16.mxu0 0
    %2987 = vmatpush1.bf16.msra.mxu0 0
    %2988 = vmatprep.subr.bf16.mxu0 0
    %2989 = vmatpush1.bf16.msra.mxu0 0
    %2990 = vmatprep.subr.bf16.mxu0 0
    %2991 = vmatpush1.bf16.msra.mxu0 0
    %2992 = vmatprep.subr.bf16.mxu0 0
    %2993 = vmatpush1.bf16.msra.mxu0 0
    %2994 = vmatprep.subr.bf16.mxu0 0
    %2995 = vmatpush1.bf16.msra.mxu0 0
    %2996 = vmatprep.mubr.bf16.mxu0 0
    %2997 = vmatmul.mubr.bf16.gmra.mrb[0].mxu0 %v2962
    %v2998 = vpop.f32.mrb[0].mxu0
    %v2999 = vadd.f32 %v2935, %v2998
    %v3000 = vpop.f32.mrb[0].mxu0
    %v3001 = vpop.f32.mrb[0].mxu0
    %v3002 = vadd.f32 %v2935, %v3001
    %v3003 = vpop.f32.mrb[0].mxu0
    %3004 = vdwg.mxu0
    %v3005 = vmax.f32 %v2999, 0.0
    %v3006 = vmax.f32 %v3002, 0.0
    %v3007 = vpack.c.bf16 %v3006, %v3005
    %v3009 = vlaneseq
    %v3010 = vshrl.u32 %v3009, 7
    %v3011 = vsub.s32 0, %v3010
    %v3012 = vrot.slane %v2839, %v3011
    %v3022 = vunpack.c.l.b16 %v2830
    %v3023 = vunpack.c.l.b16 %v2831
    %v3024 = vunpack.c.l.b16 %v2832
    %v3025 = vunpack.c.l.b16 %v2833
    %v3026 = vunpack.c.l.b16 %v2834
    %v3027 = vunpack.c.l.b16 %v2835
    %v3028 = vunpack.c.l.b16 %v2836
    %v3029 = vunpack.c.l.b16 %v2837
    %v3030 = vpack.c.b16 %v3023, %v3022
    %v3031 = vpack.c.b16 %v3025, %v3024
    %v3032 = vpack.c.b16 %v3027, %v3026
    %v3033 = vpack.c.b16 %v3029, %v3028
    %v3039 = vsel %vm2087, %v3007, 0
    %3041 = vmatprep.subr.bf16.mxu0 0
    %3042 = vmatpush1.bf16.msra.mxu0 %v3030
    %3043 = vmatprep.subr.bf16.mxu0 0
    %3044 = vmatpush1.bf16.msra.mxu0 %v3031
    %3045 = vmatprep.subr.bf16.mxu0 0
    %3046 = vmatpush1.bf16.msra.mxu0 %v3032
    %3047 = vmatprep.subr.bf16.mxu0 0
    %3048 = vmatpush1.bf16.msra.mxu0 %v3033
    %3049 = vmatprep.subr.bf16.mxu0 0
    %3050 = vmatpush1.bf16.msra.mxu0 0
    %3051 = vmatprep.subr.bf16.mxu0 0
    %3052 = vmatpush1.bf16.msra.mxu0 0
    %3053 = vmatprep.subr.bf16.mxu0 0
    %3054 = vmatpush1.bf16.msra.mxu0 0
    %3055 = vmatprep.subr.bf16.mxu0 0
    %3056 = vmatpush1.bf16.msra.mxu0 0
    %3057 = vmatprep.subr.bf16.mxu0 0
    %3058 = vmatpush1.bf16.msra.mxu0 0
    %3059 = vmatprep.subr.bf16.mxu0 0
    %3060 = vmatpush1.bf16.msra.mxu0 0
    %3061 = vmatprep.subr.bf16.mxu0 0
    %3062 = vmatpush1.bf16.msra.mxu0 0
    %3063 = vmatprep.subr.bf16.mxu0 0
    %3064 = vmatpush1.bf16.msra.mxu0 0
    %3065 = vmatprep.subr.bf16.mxu0 0
    %3066 = vmatpush1.bf16.msra.mxu0 0
    %3067 = vmatprep.subr.bf16.mxu0 0
    %3068 = vmatpush1.bf16.msra.mxu0 0
    %3069 = vmatprep.subr.bf16.mxu0 0
    %3070 = vmatpush1.bf16.msra.mxu0 0
    %3071 = vmatprep.subr.bf16.mxu0 0
    %3072 = vmatpush1.bf16.msra.mxu0 0
    %3073 = vmatprep.mubr.bf16.mxu0 0
    %3074 = vmatmul.mubr.bf16.gmra.mrb[0].mxu0 %v3039
    %v3075 = vpop.f32.mrb[0].mxu0
    %v3076 = vadd.f32 %v3012, %v3075
    %v3077 = vpop.f32.mrb[0].mxu0
    %v3078 = vpop.f32.mrb[0].mxu0
    %v3079 = vadd.f32 %v3012, %v3078
    %v3080 = vpop.f32.mrb[0].mxu0
    %3081 = vdwg.mxu0
    %v3082 = vmax.f32 %v3076, 0.0
    %v3083 = vmax.f32 %v3079, 0.0
    %v3084 = vadd.f32 %v3082, 1e-05
    %v3085 = vadd.f32 %v3083, 1e-05
    %s3086 = scalar_lea.vmem %s8, 128
    %v3087 = vld [vmem:[%s3086] sm:$0xf]
    %v3088 = vld [vmem:[%s3086 + $0x4] sm:$0xf]
    %v3089 = vld [vmem:[%s3086 + $0x8] sm:$0xf]
    %v3090 = vld [vmem:[%s3086 + $0xc] sm:$0xf]
    %v3091 = vld [vmem:[%s3086 + $0x10] sm:$0xf]
    %v3092 = vld [vmem:[%s3086 + $0x14] sm:$0xf]
    %v3093 = vld [vmem:[%s3086 + $0x18] sm:$0xf]
    %v3094 = vld [vmem:[%s3086 + $0x1c] sm:$0xf]
    %s3095 = scalar_lea.vmem %s9, 4
    %v3096 = vld [vmem:[%s3095] sm:$0x1]
    %s3097 = scalar_lea.vmem %s10, 128
    %v3098 = vld [vmem:[%s3097] sm:$0xf]
    %v3099 = vld [vmem:[%s3097 + $0x4] sm:$0xf]
    %v3100 = vld [vmem:[%s3097 + $0x8] sm:$0xf]
    %v3101 = vld [vmem:[%s3097 + $0xc] sm:$0xf]
    %v3102 = vld [vmem:[%s3097 + $0x10] sm:$0xf]
    %v3103 = vld [vmem:[%s3097 + $0x14] sm:$0xf]
    %v3104 = vld [vmem:[%s3097 + $0x18] sm:$0xf]
    %v3105 = vld [vmem:[%s3097 + $0x1c] sm:$0xf]
    %s3106 = scalar_lea.vmem %s11, 4
    %v3107 = vld [vmem:[%s3106] sm:$0x1]
    %v3108 = vmax.f32 %v3084, 0.0
    %v3109 = vmax.f32 %v3085, 0.0
    %v3110 = vadd.f32 %v3108, 1e-05
    %v3111 = vadd.f32 %v3109, 1e-05
    %v3112 = vmin.f32 %v3110, 100.0
    %v3113 = vmin.f32 %v3111, 100.0
    %v3114 = vpack.c.bf16 %v3113, %v3112
    %3115 = vmatprep.subr.bf16.mxu0 0
    %3116 = vmatpush1.bf16.msra.mxu0 %v3114
    %3117 = vmatprep.subr.bf16.mxu0 0
    %3118 = vmatpush1.bf16.msra.mxu0 0
    %3119 = vmatprep.subr.bf16.mxu0 0
    %3120 = vmatpush1.bf16.msra.mxu0 0
    %3121 = vmatprep.subr.bf16.mxu0 0
    %3122 = vmatpush1.bf16.msra.mxu0 0
    %3123 = vmatprep.subr.bf16.mxu0 0
    %3124 = vmatpush1.bf16.msra.mxu0 0
    %3125 = vmatprep.subr.bf16.mxu0 0
    %3126 = vmatpush1.bf16.msra.mxu0 0
    %3127 = vmatprep.subr.bf16.mxu0 0
    %3128 = vmatpush1.bf16.msra.mxu0 0
    %3129 = vmatprep.subr.bf16.mxu0 0
    %3130 = vmatpush1.bf16.msra.mxu0 0
    %3131 = vmatprep.subr.bf16.mxu0 0
    %3132 = vmatpush1.bf16.msra.mxu0 0
    %3133 = vmatprep.subr.bf16.mxu0 0
    %3134 = vmatpush1.bf16.msra.mxu0 0
    %3135 = vmatprep.subr.bf16.mxu0 0
    %3136 = vmatpush1.bf16.msra.mxu0 0
    %3137 = vmatprep.subr.bf16.mxu0 0
    %3138 = vmatpush1.bf16.msra.mxu0 0
    %3139 = vmatprep.subr.bf16.mxu0 0
    %3140 = vmatpush1.bf16.msra.mxu0 0
    %3141 = vmatprep.subr.bf16.mxu0 0
    %3142 = vmatpush1.bf16.msra.mxu0 0
    %3143 = vmatprep.subr.bf16.mxu0 0
    %3144 = vmatpush1.bf16.msra.mxu0 0
    %3145 = vmatprep.subr.bf16.mxu0 0
    %3146 = vmatpush1.bf16.msra.mxu0 0
    %3147 = vmatprep.mubr.bf16.mxu0 0
    %3148 = vmatmul.mubr.bf16.gmra.mrb[0].mxu0 %v77
    %v3149 = vpop.f32.mrb[0].mxu0
    %v3150 = vadd.f32 0.0, %v3149
    %v3151 = vpop.f32.mrb[0].mxu0
    %v3152 = vpop.f32.mrb[0].mxu0
    %v3153 = vadd.f32 0.0, %v3152
    %v3154 = vpop.f32.mrb[0].mxu0
    %3155 = vdwg.mxu0
    %v3156 = vmin.f32 %v3150, 100.0
    %v3157 = vmin.f32 %v3153, 100.0
    %v3158 = vmul.f32 %v3156, %v3156
    %v3159 = vmul.f32 %v3157, %v3157
    %v3160 = vsel %vm2087, %v3158, 0.0
    %3161 = vadd.xlane.f32.xlu0 %v3160
    %v3162 = vpop.xlane.xlu0 %3161
    %v3163 = vsel %vm2087, %v3159, 0.0
    %3164 = vadd.xlane.f32.xlu0 %v3163
    %v3165 = vpop.xlane.xlu0 %3164
    %v3166 = vmax.f32 %v3162, 1e-24
    %v3167 = vmax.f32 %v3165, 1e-24
    %v3168 = vrsqrt.pop %v3166
    %v3169 = vrsqrt.pop %v3167
    %v3170 = vmul.f32 %v3084, %v3084
    %v3171 = vmul.f32 %v3085, %v3085
    %v3172 = vsel %vm2087, %v3170, 0.0
    %3173 = vadd.xlane.f32.xlu0 %v3172
    %v3174 = vpop.xlane.xlu0 %3173
    %v3175 = vsel %vm2087, %v3171, 0.0
    %3176 = vadd.xlane.f32.xlu0 %v3175
    %v3177 = vpop.xlane.xlu0 %3176
    %v3178 = vrsqrt.pop %v3174
    %v3179 = vmul.f32 %v3174, %v3178
    %vm3180 = vcmp.eq.f32.partialorder %v3174, inf
    %v3181 = vsel %vm3180, %v3174, %v3179
    %vm3182 = vcmp.eq.f32.partialorder %v3174, 0.0
    %v3183 = vand.u32 %v3174, 2147483648
    %v3184 = vsel %vm3182, %v3183, %v3181
    %v3185 = vrsqrt.pop %v3177
    %v3186 = vmul.f32 %v3177, %v3185
    %vm3187 = vcmp.eq.f32.partialorder %v3177, inf
    %v3188 = vsel %vm3187, %v3177, %v3186
    %vm3189 = vcmp.eq.f32.partialorder %v3177, 0.0
    %v3190 = vand.u32 %v3177, 2147483648
    %v3191 = vsel %vm3189, %v3190, %v3188
    %v3192 = vmul.f32 %v3168, %v3184
    %v3193 = vmul.f32 %v3169, %v3191
    %v3194 = vmul.f32 %v3156, %v3192
    %v3195 = vmul.f32 %v3157, %v3193
    %v3196 = vadd.f32 %v3194, %v3084
    %v3197 = vadd.f32 %v3195, %v3085
    %v3198 = vpack.c.bf16 %v3197, %v3196
    %v3200 = vlaneseq
    %v3201 = vshrl.u32 %v3200, 7
    %v3202 = vsub.s32 0, %v3201
    %v3203 = vrot.slane %v3096, %v3202
    %v3213 = vunpack.c.l.b16 %v3087
    %v3214 = vunpack.c.l.b16 %v3088
    %v3215 = vunpack.c.l.b16 %v3089
    %v3216 = vunpack.c.l.b16 %v3090
    %v3217 = vunpack.c.l.b16 %v3091
    %v3218 = vunpack.c.l.b16 %v3092
    %v3219 = vunpack.c.l.b16 %v3093
    %v3220 = vunpack.c.l.b16 %v3094
    %v3221 = vpack.c.b16 %v3214, %v3213
    %v3222 = vpack.c.b16 %v3216, %v3215
    %v3223 = vpack.c.b16 %v3218, %v3217
    %v3224 = vpack.c.b16 %v3220, %v3219
    %v3230 = vsel %vm2087, %v3198, 0
    %3232 = vmatprep.subr.bf16.mxu0 0
    %3233 = vmatpush1.bf16.msra.mxu0 %v3221
    %3234 = vmatprep.subr.bf16.mxu0 0
    %3235 = vmatpush1.bf16.msra.mxu0 %v3222
    %3236 = vmatprep.subr.bf16.mxu0 0
    %3237 = vmatpush1.bf16.msra.mxu0 %v3223
    %3238 = vmatprep.subr.bf16.mxu0 0
    %3239 = vmatpush1.bf16.msra.mxu0 %v3224
    %3240 = vmatprep.subr.bf16.mxu0 0
    %3241 = vmatpush1.bf16.msra.mxu0 0
    %3242 = vmatprep.subr.bf16.mxu0 0
    %3243 = vmatpush1.bf16.msra.mxu0 0
    %3244 = vmatprep.subr.bf16.mxu0 0
    %3245 = vmatpush1.bf16.msra.mxu0 0
    %3246 = vmatprep.subr.bf16.mxu0 0
    %3247 = vmatpush1.bf16.msra.mxu0 0
    %3248 = vmatprep.subr.bf16.mxu0 0
    %3249 = vmatpush1.bf16.msra.mxu0 0
    %3250 = vmatprep.subr.bf16.mxu0 0
    %3251 = vmatpush1.bf16.msra.mxu0 0
    %3252 = vmatprep.subr.bf16.mxu0 0
    %3253 = vmatpush1.bf16.msra.mxu0 0
    %3254 = vmatprep.subr.bf16.mxu0 0
    %3255 = vmatpush1.bf16.msra.mxu0 0
    %3256 = vmatprep.subr.bf16.mxu0 0
    %3257 = vmatpush1.bf16.msra.mxu0 0
    %3258 = vmatprep.subr.bf16.mxu0 0
    %3259 = vmatpush1.bf16.msra.mxu0 0
    %3260 = vmatprep.subr.bf16.mxu0 0
    %3261 = vmatpush1.bf16.msra.mxu0 0
    %3262 = vmatprep.subr.bf16.mxu0 0
    %3263 = vmatpush1.bf16.msra.mxu0 0
    %3264 = vmatprep.mubr.bf16.mxu0 0
    %3265 = vmatmul.mubr.bf16.gmra.mrb[0].mxu0 %v3230
    %v3266 = vpop.f32.mrb[0].mxu0
    %v3267 = vadd.f32 %v3203, %v3266
    %v3268 = vpop.f32.mrb[0].mxu0
    %v3269 = vpop.f32.mrb[0].mxu0
    %v3270 = vadd.f32 %v3203, %v3269
    %v3271 = vpop.f32.mrb[0].mxu0
    %3272 = vdwg.mxu0
    %v3273 = vmax.f32 %v3267, 0.0
    %v3274 = vmax.f32 %v3270, 0.0
    %v3275 = vpack.c.bf16 %v3274, %v3273
    %v3277 = vlaneseq
    %v3278 = vshrl.u32 %v3277, 7
    %v3279 = vsub.s32 0, %v3278
    %v3280 = vrot.slane %v3107, %v3279
    %v3290 = vunpack.c.l.b16 %v3098
    %v3291 = vunpack.c.l.b16 %v3099
    %v3292 = vunpack.c.l.b16 %v3100
    %v3293 = vunpack.c.l.b16 %v3101
    %v3294 = vunpack.c.l.b16 %v3102
    %v3295 = vunpack.c.l.b16 %v3103
    %v3296 = vunpack.c.l.b16 %v3104
    %v3297 = vunpack.c.l.b16 %v3105
    %v3298 = vpack.c.b16 %v3291, %v3290
    %v3299 = vpack.c.b16 %v3293, %v3292
    %v3300 = vpack.c.b16 %v3295, %v3294
    %v3301 = vpack.c.b16 %v3297, %v3296
    %v3307 = vsel %vm2087, %v3275, 0
    %3309 = vmatprep.subr.bf16.mxu0 0
    %3310 = vmatpush1.bf16.msra.mxu0 %v3298
    %3311 = vmatprep.subr.bf16.mxu0 0
    %3312 = vmatpush1.bf16.msra.mxu0 %v3299
    %3313 = vmatprep.subr.bf16.mxu0 0
    %3314 = vmatpush1.bf16.msra.mxu0 %v3300
    %3315 = vmatprep.subr.bf16.mxu0 0
    %3316 = vmatpush1.bf16.msra.mxu0 %v3301
    %3317 = vmatprep.subr.bf16.mxu0 0
    %3318 = vmatpush1.bf16.msra.mxu0 0
    %3319 = vmatprep.subr.bf16.mxu0 0
    %3320 = vmatpush1.bf16.msra.mxu0 0
    %3321 = vmatprep.subr.bf16.mxu0 0
    %3322 = vmatpush1.bf16.msra.mxu0 0
    %3323 = vmatprep.subr.bf16.mxu0 0
    %3324 = vmatpush1.bf16.msra.mxu0 0
    %3325 = vmatprep.subr.bf16.mxu0 0
    %3326 = vmatpush1.bf16.msra.mxu0 0
    %3327 = vmatprep.subr.bf16.mxu0 0
    %3328 = vmatpush1.bf16.msra.mxu0 0
    %3329 = vmatprep.subr.bf16.mxu0 0
    %3330 = vmatpush1.bf16.msra.mxu0 0
    %3331 = vmatprep.subr.bf16.mxu0 0
    %3332 = vmatpush1.bf16.msra.mxu0 0
    %3333 = vmatprep.subr.bf16.mxu0 0
    %3334 = vmatpush1.bf16.msra.mxu0 0
    %3335 = vmatprep.subr.bf16.mxu0 0
    %3336 = vmatpush1.bf16.msra.mxu0 0
    %3337 = vmatprep.subr.bf16.mxu0 0
    %3338 = vmatpush1.bf16.msra.mxu0 0
    %3339 = vmatprep.subr.bf16.mxu0 0
    %3340 = vmatpush1.bf16.msra.mxu0 0
    %3341 = vmatprep.mubr.bf16.mxu0 0
    %3342 = vmatmul.mubr.bf16.gmra.mrb[0].mxu0 %v3307
    %v3343 = vpop.f32.mrb[0].mxu0
    %v3344 = vadd.f32 %v3280, %v3343
    %v3345 = vpop.f32.mrb[0].mxu0
    %v3346 = vpop.f32.mrb[0].mxu0
    %v3347 = vadd.f32 %v3280, %v3346
    %v3348 = vpop.f32.mrb[0].mxu0
    %3349 = vdwg.mxu0
    %v3350 = vmax.f32 %v3344, 0.0
    %v3351 = vmax.f32 %v3347, 0.0
    %v3352 = vadd.f32 %v3350, 1e-05
    %v3353 = vadd.f32 %v3351, 1e-05
    %s3354 = scalar_lea.vmem %s8, 160
    %v3355 = vld [vmem:[%s3354] sm:$0xf]
    %v3356 = vld [vmem:[%s3354 + $0x4] sm:$0xf]
    %v3357 = vld [vmem:[%s3354 + $0x8] sm:$0xf]
    %v3358 = vld [vmem:[%s3354 + $0xc] sm:$0xf]
    %v3359 = vld [vmem:[%s3354 + $0x10] sm:$0xf]
    %v3360 = vld [vmem:[%s3354 + $0x14] sm:$0xf]
    %v3361 = vld [vmem:[%s3354 + $0x18] sm:$0xf]
    %v3362 = vld [vmem:[%s3354 + $0x1c] sm:$0xf]
    %s3363 = scalar_lea.vmem %s9, 5
    %v3364 = vld [vmem:[%s3363] sm:$0x1]
    %s3365 = scalar_lea.vmem %s10, 160
    %v3366 = vld [vmem:[%s3365] sm:$0xf]
    %v3367 = vld [vmem:[%s3365 + $0x4] sm:$0xf]
    %v3368 = vld [vmem:[%s3365 + $0x8] sm:$0xf]
    %v3369 = vld [vmem:[%s3365 + $0xc] sm:$0xf]
    %v3370 = vld [vmem:[%s3365 + $0x10] sm:$0xf]
    %v3371 = vld [vmem:[%s3365 + $0x14] sm:$0xf]
    %v3372 = vld [vmem:[%s3365 + $0x18] sm:$0xf]
    %v3373 = vld [vmem:[%s3365 + $0x1c] sm:$0xf]
    %s3374 = scalar_lea.vmem %s11, 5
    %v3375 = vld [vmem:[%s3374] sm:$0x1]
    %v3376 = vmax.f32 %v3352, 0.0
    %v3377 = vmax.f32 %v3353, 0.0
    %v3378 = vadd.f32 %v3376, 1e-05
    %v3379 = vadd.f32 %v3377, 1e-05
    %v3380 = vmin.f32 %v3378, 100.0
    %v3381 = vmin.f32 %v3379, 100.0
    %v3382 = vpack.c.bf16 %v3381, %v3380
    %3383 = vmatprep.subr.bf16.mxu0 0
    %3384 = vmatpush1.bf16.msra.mxu0 %v3382
    %3385 = vmatprep.subr.bf16.mxu0 0
    %3386 = vmatpush1.bf16.msra.mxu0 0
    %3387 = vmatprep.subr.bf16.mxu0 0
    %3388 = vmatpush1.bf16.msra.mxu0 0
    %3389 = vmatprep.subr.bf16.mxu0 0
    %3390 = vmatpush1.bf16.msra.mxu0 0
    %3391 = vmatprep.subr.bf16.mxu0 0
    %3392 = vmatpush1.bf16.msra.mxu0 0
    %3393 = vmatprep.subr.bf16.mxu0 0
    %3394 = vmatpush1.bf16.msra.mxu0 0
    %3395 = vmatprep.subr.bf16.mxu0 0
    %3396 = vmatpush1.bf16.msra.mxu0 0
    %3397 = vmatprep.subr.bf16.mxu0 0
    %3398 = vmatpush1.bf16.msra.mxu0 0
    %3399 = vmatprep.subr.bf16.mxu0 0
    %3400 = vmatpush1.bf16.msra.mxu0 0
    %3401 = vmatprep.subr.bf16.mxu0 0
    %3402 = vmatpush1.bf16.msra.mxu0 0
    %3403 = vmatprep.subr.bf16.mxu0 0
    %3404 = vmatpush1.bf16.msra.mxu0 0
    %3405 = vmatprep.subr.bf16.mxu0 0
    %3406 = vmatpush1.bf16.msra.mxu0 0
    %3407 = vmatprep.subr.bf16.mxu0 0
    %3408 = vmatpush1.bf16.msra.mxu0 0
    %3409 = vmatprep.subr.bf16.mxu0 0
    %3410 = vmatpush1.bf16.msra.mxu0 0
    %3411 = vmatprep.subr.bf16.mxu0 0
    %3412 = vmatpush1.bf16.msra.mxu0 0
    %3413 = vmatprep.subr.bf16.mxu0 0
    %3414 = vmatpush1.bf16.msra.mxu0 0
    %3415 = vmatprep.mubr.bf16.mxu0 0
    %3416 = vmatmul.mubr.bf16.gmra.mrb[0].mxu0 %v77
    %v3417 = vpop.f32.mrb[0].mxu0
    %v3418 = vadd.f32 0.0, %v3417
    %v3419 = vpop.f32.mrb[0].mxu0
    %v3420 = vpop.f32.mrb[0].mxu0
    %v3421 = vadd.f32 0.0, %v3420
    %v3422 = vpop.f32.mrb[0].mxu0
    %3423 = vdwg.mxu0
    %v3424 = vmin.f32 %v3418, 100.0
    %v3425 = vmin.f32 %v3421, 100.0
    %v3426 = vmul.f32 %v3424, %v3424
    %v3427 = vmul.f32 %v3425, %v3425
    %v3428 = vsel %vm2087, %v3426, 0.0
    %3429 = vadd.xlane.f32.xlu0 %v3428
    %v3430 = vpop.xlane.xlu0 %3429
    %v3431 = vsel %vm2087, %v3427, 0.0
    %3432 = vadd.xlane.f32.xlu0 %v3431
    %v3433 = vpop.xlane.xlu0 %3432
    %v3434 = vmax.f32 %v3430, 1e-24
    %v3435 = vmax.f32 %v3433, 1e-24
    %v3436 = vrsqrt.pop %v3434
    %v3437 = vrsqrt.pop %v3435
    %v3438 = vmul.f32 %v3352, %v3352
    %v3439 = vmul.f32 %v3353, %v3353
    %v3440 = vsel %vm2087, %v3438, 0.0
    %3441 = vadd.xlane.f32.xlu0 %v3440
    %v3442 = vpop.xlane.xlu0 %3441
    %v3443 = vsel %vm2087, %v3439, 0.0
    %3444 = vadd.xlane.f32.xlu0 %v3443
    %v3445 = vpop.xlane.xlu0 %3444
    %v3446 = vrsqrt.pop %v3442
    %v3447 = vmul.f32 %v3442, %v3446
    %vm3448 = vcmp.eq.f32.partialorder %v3442, inf
    %v3449 = vsel %vm3448, %v3442, %v3447
    %vm3450 = vcmp.eq.f32.partialorder %v3442, 0.0
    %v3451 = vand.u32 %v3442, 2147483648
    %v3452 = vsel %vm3450, %v3451, %v3449
    %v3453 = vrsqrt.pop %v3445
    %v3454 = vmul.f32 %v3445, %v3453
    %vm3455 = vcmp.eq.f32.partialorder %v3445, inf
    %v3456 = vsel %vm3455, %v3445, %v3454
    %vm3457 = vcmp.eq.f32.partialorder %v3445, 0.0
    %v3458 = vand.u32 %v3445, 2147483648
    %v3459 = vsel %vm3457, %v3458, %v3456
    %v3460 = vmul.f32 %v3436, %v3452
    %v3461 = vmul.f32 %v3437, %v3459
    %v3462 = vmul.f32 %v3424, %v3460
    %v3463 = vmul.f32 %v3425, %v3461
    %v3464 = vadd.f32 %v3462, %v3352
    %v3465 = vadd.f32 %v3463, %v3353
    %v3466 = vpack.c.bf16 %v3465, %v3464
    %v3468 = vlaneseq
    %v3469 = vshrl.u32 %v3468, 7
    %v3470 = vsub.s32 0, %v3469
    %v3471 = vrot.slane %v3364, %v3470
    %v3481 = vunpack.c.l.b16 %v3355
    %v3482 = vunpack.c.l.b16 %v3356
    %v3483 = vunpack.c.l.b16 %v3357
    %v3484 = vunpack.c.l.b16 %v3358
    %v3485 = vunpack.c.l.b16 %v3359
    %v3486 = vunpack.c.l.b16 %v3360
    %v3487 = vunpack.c.l.b16 %v3361
    %v3488 = vunpack.c.l.b16 %v3362
    %v3489 = vpack.c.b16 %v3482, %v3481
    %v3490 = vpack.c.b16 %v3484, %v3483
    %v3491 = vpack.c.b16 %v3486, %v3485
    %v3492 = vpack.c.b16 %v3488, %v3487
    %v3498 = vsel %vm2087, %v3466, 0
    %3500 = vmatprep.subr.bf16.mxu0 0
    %3501 = vmatpush1.bf16.msra.mxu0 %v3489
    %3502 = vmatprep.subr.bf16.mxu0 0
    %3503 = vmatpush1.bf16.msra.mxu0 %v3490
    %3504 = vmatprep.subr.bf16.mxu0 0
    %3505 = vmatpush1.bf16.msra.mxu0 %v3491
    %3506 = vmatprep.subr.bf16.mxu0 0
    %3507 = vmatpush1.bf16.msra.mxu0 %v3492
    %3508 = vmatprep.subr.bf16.mxu0 0
    %3509 = vmatpush1.bf16.msra.mxu0 0
    %3510 = vmatprep.subr.bf16.mxu0 0
    %3511 = vmatpush1.bf16.msra.mxu0 0
    %3512 = vmatprep.subr.bf16.mxu0 0
    %3513 = vmatpush1.bf16.msra.mxu0 0
    %3514 = vmatprep.subr.bf16.mxu0 0
    %3515 = vmatpush1.bf16.msra.mxu0 0
    %3516 = vmatprep.subr.bf16.mxu0 0
    %3517 = vmatpush1.bf16.msra.mxu0 0
    %3518 = vmatprep.subr.bf16.mxu0 0
    %3519 = vmatpush1.bf16.msra.mxu0 0
    %3520 = vmatprep.subr.bf16.mxu0 0
    %3521 = vmatpush1.bf16.msra.mxu0 0
    %3522 = vmatprep.subr.bf16.mxu0 0
    %3523 = vmatpush1.bf16.msra.mxu0 0
    %3524 = vmatprep.subr.bf16.mxu0 0
    %3525 = vmatpush1.bf16.msra.mxu0 0
    %3526 = vmatprep.subr.bf16.mxu0 0
    %3527 = vmatpush1.bf16.msra.mxu0 0
    %3528 = vmatprep.subr.bf16.mxu0 0
    %3529 = vmatpush1.bf16.msra.mxu0 0
    %3530 = vmatprep.subr.bf16.mxu0 0
    %3531 = vmatpush1.bf16.msra.mxu0 0
    %3532 = vmatprep.mubr.bf16.mxu0 0
    %3533 = vmatmul.mubr.bf16.gmra.mrb[0].mxu0 %v3498
    %v3534 = vpop.f32.mrb[0].mxu0
    %v3535 = vadd.f32 %v3471, %v3534
    %v3536 = vpop.f32.mrb[0].mxu0
    %v3537 = vpop.f32.mrb[0].mxu0
    %v3538 = vadd.f32 %v3471, %v3537
    %v3539 = vpop.f32.mrb[0].mxu0
    %3540 = vdwg.mxu0
    %v3541 = vmax.f32 %v3535, 0.0
    %v3542 = vmax.f32 %v3538, 0.0
    %v3543 = vpack.c.bf16 %v3542, %v3541
    %v3545 = vlaneseq
    %v3546 = vshrl.u32 %v3545, 7
    %v3547 = vsub.s32 0, %v3546
    %v3548 = vrot.slane %v3375, %v3547
    %v3558 = vunpack.c.l.b16 %v3366
    %v3559 = vunpack.c.l.b16 %v3367
    %v3560 = vunpack.c.l.b16 %v3368
    %v3561 = vunpack.c.l.b16 %v3369
    %v3562 = vunpack.c.l.b16 %v3370
    %v3563 = vunpack.c.l.b16 %v3371
    %v3564 = vunpack.c.l.b16 %v3372
    %v3565 = vunpack.c.l.b16 %v3373
    %v3566 = vpack.c.b16 %v3559, %v3558
    %v3567 = vpack.c.b16 %v3561, %v3560
    %v3568 = vpack.c.b16 %v3563, %v3562
    %v3569 = vpack.c.b16 %v3565, %v3564
    %v3575 = vsel %vm2087, %v3543, 0
    %3577 = vmatprep.subr.bf16.mxu0 0
    %3578 = vmatpush1.bf16.msra.mxu0 %v3566
    %3579 = vmatprep.subr.bf16.mxu0 0
    %3580 = vmatpush1.bf16.msra.mxu0 %v3567
    %3581 = vmatprep.subr.bf16.mxu0 0
    %3582 = vmatpush1.bf16.msra.mxu0 %v3568
    %3583 = vmatprep.subr.bf16.mxu0 0
    %3584 = vmatpush1.bf16.msra.mxu0 %v3569
    %3585 = vmatprep.subr.bf16.mxu0 0
    %3586 = vmatpush1.bf16.msra.mxu0 0
    %3587 = vmatprep.subr.bf16.mxu0 0
    %3588 = vmatpush1.bf16.msra.mxu0 0
    %3589 = vmatprep.subr.bf16.mxu0 0
    %3590 = vmatpush1.bf16.msra.mxu0 0
    %3591 = vmatprep.subr.bf16.mxu0 0
    %3592 = vmatpush1.bf16.msra.mxu0 0
    %3593 = vmatprep.subr.bf16.mxu0 0
    %3594 = vmatpush1.bf16.msra.mxu0 0
    %3595 = vmatprep.subr.bf16.mxu0 0
    %3596 = vmatpush1.bf16.msra.mxu0 0
    %3597 = vmatprep.subr.bf16.mxu0 0
    %3598 = vmatpush1.bf16.msra.mxu0 0
    %3599 = vmatprep.subr.bf16.mxu0 0
    %3600 = vmatpush1.bf16.msra.mxu0 0
    %3601 = vmatprep.subr.bf16.mxu0 0
    %3602 = vmatpush1.bf16.msra.mxu0 0
    %3603 = vmatprep.subr.bf16.mxu0 0
    %3604 = vmatpush1.bf16.msra.mxu0 0
    %3605 = vmatprep.subr.bf16.mxu0 0
    %3606 = vmatpush1.bf16.msra.mxu0 0
    %3607 = vmatprep.subr.bf16.mxu0 0
    %3608 = vmatpush1.bf16.msra.mxu0 0
    %3609 = vmatprep.mubr.bf16.mxu0 0
    %3610 = vmatmul.mubr.bf16.gmra.mrb[0].mxu0 %v3575
    %v3611 = vpop.f32.mrb[0].mxu0
    %v3612 = vadd.f32 %v3548, %v3611
    %v3613 = vpop.f32.mrb[0].mxu0
    %v3614 = vpop.f32.mrb[0].mxu0
    %v3615 = vadd.f32 %v3548, %v3614
    %v3616 = vpop.f32.mrb[0].mxu0
    %3617 = vdwg.mxu0
    %v3618 = vmax.f32 %v3612, 0.0
    %v3619 = vmax.f32 %v3615, 0.0
    %v3620 = vadd.f32 %v3618, 1e-05
    %v3621 = vadd.f32 %v3619, 1e-05
    %s3622 = scalar_lea.vmem %s8, 192
    %v3623 = vld [vmem:[%s3622] sm:$0xf]
    %v3624 = vld [vmem:[%s3622 + $0x4] sm:$0xf]
    %v3625 = vld [vmem:[%s3622 + $0x8] sm:$0xf]
    %v3626 = vld [vmem:[%s3622 + $0xc] sm:$0xf]
    %v3627 = vld [vmem:[%s3622 + $0x10] sm:$0xf]
    %v3628 = vld [vmem:[%s3622 + $0x14] sm:$0xf]
    %v3629 = vld [vmem:[%s3622 + $0x18] sm:$0xf]
    %v3630 = vld [vmem:[%s3622 + $0x1c] sm:$0xf]
    %s3631 = scalar_lea.vmem %s9, 6
    %v3632 = vld [vmem:[%s3631] sm:$0x1]
    %s3633 = scalar_lea.vmem %s10, 192
    %v3634 = vld [vmem:[%s3633] sm:$0xf]
    %v3635 = vld [vmem:[%s3633 + $0x4] sm:$0xf]
    %v3636 = vld [vmem:[%s3633 + $0x8] sm:$0xf]
    %v3637 = vld [vmem:[%s3633 + $0xc] sm:$0xf]
    %v3638 = vld [vmem:[%s3633 + $0x10] sm:$0xf]
    %v3639 = vld [vmem:[%s3633 + $0x14] sm:$0xf]
    %v3640 = vld [vmem:[%s3633 + $0x18] sm:$0xf]
    %v3641 = vld [vmem:[%s3633 + $0x1c] sm:$0xf]
    %s3642 = scalar_lea.vmem %s11, 6
    %v3643 = vld [vmem:[%s3642] sm:$0x1]
    %v3644 = vmax.f32 %v3620, 0.0
    %v3645 = vmax.f32 %v3621, 0.0
    %v3646 = vadd.f32 %v3644, 1e-05
    %v3647 = vadd.f32 %v3645, 1e-05
    %v3648 = vmin.f32 %v3646, 100.0
    %v3649 = vmin.f32 %v3647, 100.0
    %v3650 = vpack.c.bf16 %v3649, %v3648
    %3651 = vmatprep.subr.bf16.mxu0 0
    %3652 = vmatpush1.bf16.msra.mxu0 %v3650
    %3653 = vmatprep.subr.bf16.mxu0 0
    %3654 = vmatpush1.bf16.msra.mxu0 0
    %3655 = vmatprep.subr.bf16.mxu0 0
    %3656 = vmatpush1.bf16.msra.mxu0 0
    %3657 = vmatprep.subr.bf16.mxu0 0
    %3658 = vmatpush1.bf16.msra.mxu0 0
    %3659 = vmatprep.subr.bf16.mxu0 0
    %3660 = vmatpush1.bf16.msra.mxu0 0
    %3661 = vmatprep.subr.bf16.mxu0 0
    %3662 = vmatpush1.bf16.msra.mxu0 0
    %3663 = vmatprep.subr.bf16.mxu0 0
    %3664 = vmatpush1.bf16.msra.mxu0 0
    %3665 = vmatprep.subr.bf16.mxu0 0
    %3666 = vmatpush1.bf16.msra.mxu0 0
    %3667 = vmatprep.subr.bf16.mxu0 0
    %3668 = vmatpush1.bf16.msra.mxu0 0
    %3669 = vmatprep.subr.bf16.mxu0 0
    %3670 = vmatpush1.bf16.msra.mxu0 0
    %3671 = vmatprep.subr.bf16.mxu0 0
    %3672 = vmatpush1.bf16.msra.mxu0 0
    %3673 = vmatprep.subr.bf16.mxu0 0
    %3674 = vmatpush1.bf16.msra.mxu0 0
    %3675 = vmatprep.subr.bf16.mxu0 0
    %3676 = vmatpush1.bf16.msra.mxu0 0
    %3677 = vmatprep.subr.bf16.mxu0 0
    %3678 = vmatpush1.bf16.msra.mxu0 0
    %3679 = vmatprep.subr.bf16.mxu0 0
    %3680 = vmatpush1.bf16.msra.mxu0 0
    %3681 = vmatprep.subr.bf16.mxu0 0
    %3682 = vmatpush1.bf16.msra.mxu0 0
    %3683 = vmatprep.mubr.bf16.mxu0 0
    %3684 = vmatmul.mubr.bf16.gmra.mrb[0].mxu0 %v77
    %v3685 = vpop.f32.mrb[0].mxu0
    %v3686 = vadd.f32 0.0, %v3685
    %v3687 = vpop.f32.mrb[0].mxu0
    %v3688 = vpop.f32.mrb[0].mxu0
    %v3689 = vadd.f32 0.0, %v3688
    %v3690 = vpop.f32.mrb[0].mxu0
    %3691 = vdwg.mxu0
    %v3692 = vmin.f32 %v3686, 100.0
    %v3693 = vmin.f32 %v3689, 100.0
    %v3694 = vmul.f32 %v3692, %v3692
    %v3695 = vmul.f32 %v3693, %v3693
    %v3696 = vsel %vm2087, %v3694, 0.0
    %3697 = vadd.xlane.f32.xlu0 %v3696
    %v3698 = vpop.xlane.xlu0 %3697
    %v3699 = vsel %vm2087, %v3695, 0.0
    %3700 = vadd.xlane.f32.xlu0 %v3699
    %v3701 = vpop.xlane.xlu0 %3700
    %v3702 = vmax.f32 %v3698, 1e-24
    %v3703 = vmax.f32 %v3701, 1e-24
    %v3704 = vrsqrt.pop %v3702
    %v3705 = vrsqrt.pop %v3703
    %v3706 = vmul.f32 %v3620, %v3620
    %v3707 = vmul.f32 %v3621, %v3621
    %v3708 = vsel %vm2087, %v3706, 0.0
    %3709 = vadd.xlane.f32.xlu0 %v3708
    %v3710 = vpop.xlane.xlu0 %3709
    %v3711 = vsel %vm2087, %v3707, 0.0
    %3712 = vadd.xlane.f32.xlu0 %v3711
    %v3713 = vpop.xlane.xlu0 %3712
    %v3714 = vrsqrt.pop %v3710
    %v3715 = vmul.f32 %v3710, %v3714
    %vm3716 = vcmp.eq.f32.partialorder %v3710, inf
    %v3717 = vsel %vm3716, %v3710, %v3715
    %vm3718 = vcmp.eq.f32.partialorder %v3710, 0.0
    %v3719 = vand.u32 %v3710, 2147483648
    %v3720 = vsel %vm3718, %v3719, %v3717
    %v3721 = vrsqrt.pop %v3713
    %v3722 = vmul.f32 %v3713, %v3721
    %vm3723 = vcmp.eq.f32.partialorder %v3713, inf
    %v3724 = vsel %vm3723, %v3713, %v3722
    %vm3725 = vcmp.eq.f32.partialorder %v3713, 0.0
    %v3726 = vand.u32 %v3713, 2147483648
    %v3727 = vsel %vm3725, %v3726, %v3724
    %v3728 = vmul.f32 %v3704, %v3720
    %v3729 = vmul.f32 %v3705, %v3727
    %v3730 = vmul.f32 %v3692, %v3728
    %v3731 = vmul.f32 %v3693, %v3729
    %v3732 = vadd.f32 %v3730, %v3620
    %v3733 = vadd.f32 %v3731, %v3621
    %v3734 = vpack.c.bf16 %v3733, %v3732
    %v3736 = vlaneseq
    %v3737 = vshrl.u32 %v3736, 7
    %v3738 = vsub.s32 0, %v3737
    %v3739 = vrot.slane %v3632, %v3738
    %v3749 = vunpack.c.l.b16 %v3623
    %v3750 = vunpack.c.l.b16 %v3624
    %v3751 = vunpack.c.l.b16 %v3625
    %v3752 = vunpack.c.l.b16 %v3626
    %v3753 = vunpack.c.l.b16 %v3627
    %v3754 = vunpack.c.l.b16 %v3628
    %v3755 = vunpack.c.l.b16 %v3629
    %v3756 = vunpack.c.l.b16 %v3630
    %v3757 = vpack.c.b16 %v3750, %v3749
    %v3758 = vpack.c.b16 %v3752, %v3751
    %v3759 = vpack.c.b16 %v3754, %v3753
    %v3760 = vpack.c.b16 %v3756, %v3755
    %v3766 = vsel %vm2087, %v3734, 0
    %3768 = vmatprep.subr.bf16.mxu0 0
    %3769 = vmatpush1.bf16.msra.mxu0 %v3757
    %3770 = vmatprep.subr.bf16.mxu0 0
    %3771 = vmatpush1.bf16.msra.mxu0 %v3758
    %3772 = vmatprep.subr.bf16.mxu0 0
    %3773 = vmatpush1.bf16.msra.mxu0 %v3759
    %3774 = vmatprep.subr.bf16.mxu0 0
    %3775 = vmatpush1.bf16.msra.mxu0 %v3760
    %3776 = vmatprep.subr.bf16.mxu0 0
    %3777 = vmatpush1.bf16.msra.mxu0 0
    %3778 = vmatprep.subr.bf16.mxu0 0
    %3779 = vmatpush1.bf16.msra.mxu0 0
    %3780 = vmatprep.subr.bf16.mxu0 0
    %3781 = vmatpush1.bf16.msra.mxu0 0
    %3782 = vmatprep.subr.bf16.mxu0 0
    %3783 = vmatpush1.bf16.msra.mxu0 0
    %3784 = vmatprep.subr.bf16.mxu0 0
    %3785 = vmatpush1.bf16.msra.mxu0 0
    %3786 = vmatprep.subr.bf16.mxu0 0
    %3787 = vmatpush1.bf16.msra.mxu0 0
    %3788 = vmatprep.subr.bf16.mxu0 0
    %3789 = vmatpush1.bf16.msra.mxu0 0
    %3790 = vmatprep.subr.bf16.mxu0 0
    %3791 = vmatpush1.bf16.msra.mxu0 0
    %3792 = vmatprep.subr.bf16.mxu0 0
    %3793 = vmatpush1.bf16.msra.mxu0 0
    %3794 = vmatprep.subr.bf16.mxu0 0
    %3795 = vmatpush1.bf16.msra.mxu0 0
    %3796 = vmatprep.subr.bf16.mxu0 0
    %3797 = vmatpush1.bf16.msra.mxu0 0
    %3798 = vmatprep.subr.bf16.mxu0 0
    %3799 = vmatpush1.bf16.msra.mxu0 0
    %3800 = vmatprep.mubr.bf16.mxu0 0
    %3801 = vmatmul.mubr.bf16.gmra.mrb[0].mxu0 %v3766
    %v3802 = vpop.f32.mrb[0].mxu0
    %v3803 = vadd.f32 %v3739, %v3802
    %v3804 = vpop.f32.mrb[0].mxu0
    %v3805 = vpop.f32.mrb[0].mxu0
    %v3806 = vadd.f32 %v3739, %v3805
    %v3807 = vpop.f32.mrb[0].mxu0
    %3808 = vdwg.mxu0
    %v3809 = vmax.f32 %v3803, 0.0
    %v3810 = vmax.f32 %v3806, 0.0
    %v3811 = vpack.c.bf16 %v3810, %v3809
    %v3813 = vlaneseq
    %v3814 = vshrl.u32 %v3813, 7
    %v3815 = vsub.s32 0, %v3814
    %v3816 = vrot.slane %v3643, %v3815
    %v3826 = vunpack.c.l.b16 %v3634
    %v3827 = vunpack.c.l.b16 %v3635
    %v3828 = vunpack.c.l.b16 %v3636
    %v3829 = vunpack.c.l.b16 %v3637
    %v3830 = vunpack.c.l.b16 %v3638
    %v3831 = vunpack.c.l.b16 %v3639
    %v3832 = vunpack.c.l.b16 %v3640
    %v3833 = vunpack.c.l.b16 %v3641
    %v3834 = vpack.c.b16 %v3827, %v3826
    %v3835 = vpack.c.b16 %v3829, %v3828
    %v3836 = vpack.c.b16 %v3831, %v3830
    %v3837 = vpack.c.b16 %v3833, %v3832
    %v3843 = vsel %vm2087, %v3811, 0
    %3845 = vmatprep.subr.bf16.mxu0 0
    %3846 = vmatpush1.bf16.msra.mxu0 %v3834
    %3847 = vmatprep.subr.bf16.mxu0 0
    %3848 = vmatpush1.bf16.msra.mxu0 %v3835
    %3849 = vmatprep.subr.bf16.mxu0 0
    %3850 = vmatpush1.bf16.msra.mxu0 %v3836
    %3851 = vmatprep.subr.bf16.mxu0 0
    %3852 = vmatpush1.bf16.msra.mxu0 %v3837
    %3853 = vmatprep.subr.bf16.mxu0 0
    %3854 = vmatpush1.bf16.msra.mxu0 0
    %3855 = vmatprep.subr.bf16.mxu0 0
    %3856 = vmatpush1.bf16.msra.mxu0 0
    %3857 = vmatprep.subr.bf16.mxu0 0
    %3858 = vmatpush1.bf16.msra.mxu0 0
    %3859 = vmatprep.subr.bf16.mxu0 0
    %3860 = vmatpush1.bf16.msra.mxu0 0
    %3861 = vmatprep.subr.bf16.mxu0 0
    %3862 = vmatpush1.bf16.msra.mxu0 0
    %3863 = vmatprep.subr.bf16.mxu0 0
    %3864 = vmatpush1.bf16.msra.mxu0 0
    %3865 = vmatprep.subr.bf16.mxu0 0
    %3866 = vmatpush1.bf16.msra.mxu0 0
    %3867 = vmatprep.subr.bf16.mxu0 0
    %3868 = vmatpush1.bf16.msra.mxu0 0
    %3869 = vmatprep.subr.bf16.mxu0 0
    %3870 = vmatpush1.bf16.msra.mxu0 0
    %3871 = vmatprep.subr.bf16.mxu0 0
    %3872 = vmatpush1.bf16.msra.mxu0 0
    %3873 = vmatprep.subr.bf16.mxu0 0
    %3874 = vmatpush1.bf16.msra.mxu0 0
    %3875 = vmatprep.subr.bf16.mxu0 0
    %3876 = vmatpush1.bf16.msra.mxu0 0
    %3877 = vmatprep.mubr.bf16.mxu0 0
    %3878 = vmatmul.mubr.bf16.gmra.mrb[0].mxu0 %v3843
    %v3879 = vpop.f32.mrb[0].mxu0
    %v3880 = vadd.f32 %v3816, %v3879
    %v3881 = vpop.f32.mrb[0].mxu0
    %v3882 = vpop.f32.mrb[0].mxu0
    %v3883 = vadd.f32 %v3816, %v3882
    %v3884 = vpop.f32.mrb[0].mxu0
    %3885 = vdwg.mxu0
    %v3886 = vmax.f32 %v3880, 0.0
    %v3887 = vmax.f32 %v3883, 0.0
    %v3888 = vadd.f32 %v3886, 1e-05
    %v3889 = vadd.f32 %v3887, 1e-05
    %s3890 = scalar_lea.vmem %s8, 224
    %v3891 = vld [vmem:[%s3890] sm:$0xf]
    %v3892 = vld [vmem:[%s3890 + $0x4] sm:$0xf]
    %v3893 = vld [vmem:[%s3890 + $0x8] sm:$0xf]
    %v3894 = vld [vmem:[%s3890 + $0xc] sm:$0xf]
    %v3895 = vld [vmem:[%s3890 + $0x10] sm:$0xf]
    %v3896 = vld [vmem:[%s3890 + $0x14] sm:$0xf]
    %v3897 = vld [vmem:[%s3890 + $0x18] sm:$0xf]
    %v3898 = vld [vmem:[%s3890 + $0x1c] sm:$0xf]
    %s3899 = scalar_lea.vmem %s9, 7
    %v3900 = vld [vmem:[%s3899] sm:$0x1]
    %s3901 = scalar_lea.vmem %s10, 224
    %v3902 = vld [vmem:[%s3901] sm:$0xf]
    %v3903 = vld [vmem:[%s3901 + $0x4] sm:$0xf]
    %v3904 = vld [vmem:[%s3901 + $0x8] sm:$0xf]
    %v3905 = vld [vmem:[%s3901 + $0xc] sm:$0xf]
    %v3906 = vld [vmem:[%s3901 + $0x10] sm:$0xf]
    %v3907 = vld [vmem:[%s3901 + $0x14] sm:$0xf]
    %v3908 = vld [vmem:[%s3901 + $0x18] sm:$0xf]
    %v3909 = vld [vmem:[%s3901 + $0x1c] sm:$0xf]
    %s3910 = scalar_lea.vmem %s11, 7
    %v3911 = vld [vmem:[%s3910] sm:$0x1]
    %v3912 = vmax.f32 %v3888, 0.0
    %v3913 = vmax.f32 %v3889, 0.0
    %v3914 = vadd.f32 %v3912, 1e-05
    %v3915 = vadd.f32 %v3913, 1e-05
    %v3916 = vmin.f32 %v3914, 100.0
    %v3917 = vmin.f32 %v3915, 100.0
    %v3918 = vpack.c.bf16 %v3917, %v3916
    %3919 = vmatprep.subr.bf16.mxu0 0
    %3920 = vmatpush1.bf16.msra.mxu0 %v3918
    %3921 = vmatprep.subr.bf16.mxu0 0
    %3922 = vmatpush1.bf16.msra.mxu0 0
    %3923 = vmatprep.subr.bf16.mxu0 0
    %3924 = vmatpush1.bf16.msra.mxu0 0
    %3925 = vmatprep.subr.bf16.mxu0 0
    %3926 = vmatpush1.bf16.msra.mxu0 0
    %3927 = vmatprep.subr.bf16.mxu0 0
    %3928 = vmatpush1.bf16.msra.mxu0 0
    %3929 = vmatprep.subr.bf16.mxu0 0
    %3930 = vmatpush1.bf16.msra.mxu0 0
    %3931 = vmatprep.subr.bf16.mxu0 0
    %3932 = vmatpush1.bf16.msra.mxu0 0
    %3933 = vmatprep.subr.bf16.mxu0 0
    %3934 = vmatpush1.bf16.msra.mxu0 0
    %3935 = vmatprep.subr.bf16.mxu0 0
    %3936 = vmatpush1.bf16.msra.mxu0 0
    %3937 = vmatprep.subr.bf16.mxu0 0
    %3938 = vmatpush1.bf16.msra.mxu0 0
    %3939 = vmatprep.subr.bf16.mxu0 0
    %3940 = vmatpush1.bf16.msra.mxu0 0
    %3941 = vmatprep.subr.bf16.mxu0 0
    %3942 = vmatpush1.bf16.msra.mxu0 0
    %3943 = vmatprep.subr.bf16.mxu0 0
    %3944 = vmatpush1.bf16.msra.mxu0 0
    %3945 = vmatprep.subr.bf16.mxu0 0
    %3946 = vmatpush1.bf16.msra.mxu0 0
    %3947 = vmatprep.subr.bf16.mxu0 0
    %3948 = vmatpush1.bf16.msra.mxu0 0
    %3949 = vmatprep.subr.bf16.mxu0 0
    %3950 = vmatpush1.bf16.msra.mxu0 0
    %3951 = vmatprep.mubr.bf16.mxu0 0
    %3952 = vmatmul.mubr.bf16.gmra.mrb[0].mxu0 %v77
    %v3953 = vpop.f32.mrb[0].mxu0
    %v3954 = vadd.f32 0.0, %v3953
    %v3955 = vpop.f32.mrb[0].mxu0
    %v3956 = vpop.f32.mrb[0].mxu0
    %v3957 = vadd.f32 0.0, %v3956
    %v3958 = vpop.f32.mrb[0].mxu0
    %3959 = vdwg.mxu0
    %v3960 = vmin.f32 %v3954, 100.0
    %v3961 = vmin.f32 %v3957, 100.0
    %v3962 = vmul.f32 %v3960, %v3960
    %v3963 = vmul.f32 %v3961, %v3961
    %v3964 = vsel %vm2087, %v3962, 0.0
    %3965 = vadd.xlane.f32.xlu0 %v3964
    %v3966 = vpop.xlane.xlu0 %3965
    %v3967 = vsel %vm2087, %v3963, 0.0
    %3968 = vadd.xlane.f32.xlu0 %v3967
    %v3969 = vpop.xlane.xlu0 %3968
    %v3970 = vmax.f32 %v3966, 1e-24
    %v3971 = vmax.f32 %v3969, 1e-24
    %v3972 = vrsqrt.pop %v3970
    %v3973 = vrsqrt.pop %v3971
    %v3974 = vmul.f32 %v3888, %v3888
    %v3975 = vmul.f32 %v3889, %v3889
    %v3976 = vsel %vm2087, %v3974, 0.0
    %3977 = vadd.xlane.f32.xlu0 %v3976
    %v3978 = vpop.xlane.xlu0 %3977
    %v3979 = vsel %vm2087, %v3975, 0.0
    %3980 = vadd.xlane.f32.xlu0 %v3979
    %v3981 = vpop.xlane.xlu0 %3980
    %v3982 = vrsqrt.pop %v3978
    %v3983 = vmul.f32 %v3978, %v3982
    %vm3984 = vcmp.eq.f32.partialorder %v3978, inf
    %v3985 = vsel %vm3984, %v3978, %v3983
    %vm3986 = vcmp.eq.f32.partialorder %v3978, 0.0
    %v3987 = vand.u32 %v3978, 2147483648
    %v3988 = vsel %vm3986, %v3987, %v3985
    %v3989 = vrsqrt.pop %v3981
    %v3990 = vmul.f32 %v3981, %v3989
    %vm3991 = vcmp.eq.f32.partialorder %v3981, inf
    %v3992 = vsel %vm3991, %v3981, %v3990
    %vm3993 = vcmp.eq.f32.partialorder %v3981, 0.0
    %v3994 = vand.u32 %v3981, 2147483648
    %v3995 = vsel %vm3993, %v3994, %v3992
    %v3996 = vmul.f32 %v3972, %v3988
    %v3997 = vmul.f32 %v3973, %v3995
    %v3998 = vmul.f32 %v3960, %v3996
    %v3999 = vmul.f32 %v3961, %v3997
    %v4000 = vadd.f32 %v3998, %v3888
    %v4001 = vadd.f32 %v3999, %v3889
    %v4002 = vpack.c.bf16 %v4001, %v4000
    %v4004 = vlaneseq
    %v4005 = vshrl.u32 %v4004, 7
    %v4006 = vsub.s32 0, %v4005
    %v4007 = vrot.slane %v3900, %v4006
    %v4017 = vunpack.c.l.b16 %v3891
    %v4018 = vunpack.c.l.b16 %v3892
    %v4019 = vunpack.c.l.b16 %v3893
    %v4020 = vunpack.c.l.b16 %v3894
    %v4021 = vunpack.c.l.b16 %v3895
    %v4022 = vunpack.c.l.b16 %v3896
    %v4023 = vunpack.c.l.b16 %v3897
    %v4024 = vunpack.c.l.b16 %v3898
    %v4025 = vpack.c.b16 %v4018, %v4017
    %v4026 = vpack.c.b16 %v4020, %v4019
    %v4027 = vpack.c.b16 %v4022, %v4021
    %v4028 = vpack.c.b16 %v4024, %v4023
    %v4034 = vsel %vm2087, %v4002, 0
    %4036 = vmatprep.subr.bf16.mxu0 0
    %4037 = vmatpush1.bf16.msra.mxu0 %v4025
    %4038 = vmatprep.subr.bf16.mxu0 0
    %4039 = vmatpush1.bf16.msra.mxu0 %v4026
    %4040 = vmatprep.subr.bf16.mxu0 0
    %4041 = vmatpush1.bf16.msra.mxu0 %v4027
    %4042 = vmatprep.subr.bf16.mxu0 0
    %4043 = vmatpush1.bf16.msra.mxu0 %v4028
    %4044 = vmatprep.subr.bf16.mxu0 0
    %4045 = vmatpush1.bf16.msra.mxu0 0
    %4046 = vmatprep.subr.bf16.mxu0 0
    %4047 = vmatpush1.bf16.msra.mxu0 0
    %4048 = vmatprep.subr.bf16.mxu0 0
    %4049 = vmatpush1.bf16.msra.mxu0 0
    %4050 = vmatprep.subr.bf16.mxu0 0
    %4051 = vmatpush1.bf16.msra.mxu0 0
    %4052 = vmatprep.subr.bf16.mxu0 0
    %4053 = vmatpush1.bf16.msra.mxu0 0
    %4054 = vmatprep.subr.bf16.mxu0 0
    %4055 = vmatpush1.bf16.msra.mxu0 0
    %4056 = vmatprep.subr.bf16.mxu0 0
    %4057 = vmatpush1.bf16.msra.mxu0 0
    %4058 = vmatprep.subr.bf16.mxu0 0
    %4059 = vmatpush1.bf16.msra.mxu0 0
    %4060 = vmatprep.subr.bf16.mxu0 0
    %4061 = vmatpush1.bf16.msra.mxu0 0
    %4062 = vmatprep.subr.bf16.mxu0 0
    %4063 = vmatpush1.bf16.msra.mxu0 0
    %4064 = vmatprep.subr.bf16.mxu0 0
    %4065 = vmatpush1.bf16.msra.mxu0 0
    %4066 = vmatprep.subr.bf16.mxu0 0
    %4067 = vmatpush1.bf16.msra.mxu0 0
    %4068 = vmatprep.mubr.bf16.mxu0 0
    %4069 = vmatmul.mubr.bf16.gmra.mrb[0].mxu0 %v4034
    %v4070 = vpop.f32.mrb[0].mxu0
    %v4071 = vadd.f32 %v4007, %v4070
    %v4072 = vpop.f32.mrb[0].mxu0
    %v4073 = vpop.f32.mrb[0].mxu0
    %v4074 = vadd.f32 %v4007, %v4073
    %v4075 = vpop.f32.mrb[0].mxu0
    %4076 = vdwg.mxu0
    %v4077 = vmax.f32 %v4071, 0.0
    %v4078 = vmax.f32 %v4074, 0.0
    %v4079 = vpack.c.bf16 %v4078, %v4077
    %v4081 = vlaneseq
    %v4082 = vshrl.u32 %v4081, 7
    %v4083 = vsub.s32 0, %v4082
    %v4084 = vrot.slane %v3911, %v4083
    %v4094 = vunpack.c.l.b16 %v3902
    %v4095 = vunpack.c.l.b16 %v3903
    %v4096 = vunpack.c.l.b16 %v3904
    %v4097 = vunpack.c.l.b16 %v3905
    %v4098 = vunpack.c.l.b16 %v3906
    %v4099 = vunpack.c.l.b16 %v3907
    %v4100 = vunpack.c.l.b16 %v3908
    %v4101 = vunpack.c.l.b16 %v3909
    %v4102 = vpack.c.b16 %v4095, %v4094
    %v4103 = vpack.c.b16 %v4097, %v4096
    %v4104 = vpack.c.b16 %v4099, %v4098
    %v4105 = vpack.c.b16 %v4101, %v4100
    %v4111 = vsel %vm2087, %v4079, 0
    %4113 = vmatprep.subr.bf16.mxu0 0
    %4114 = vmatpush1.bf16.msra.mxu0 %v4102
    %4115 = vmatprep.subr.bf16.mxu0 0
    %4116 = vmatpush1.bf16.msra.mxu0 %v4103
    %4117 = vmatprep.subr.bf16.mxu0 0
    %4118 = vmatpush1.bf16.msra.mxu0 %v4104
    %4119 = vmatprep.subr.bf16.mxu0 0
    %4120 = vmatpush1.bf16.msra.mxu0 %v4105
    %4121 = vmatprep.subr.bf16.mxu0 0
    %4122 = vmatpush1.bf16.msra.mxu0 0
    %4123 = vmatprep.subr.bf16.mxu0 0
    %4124 = vmatpush1.bf16.msra.mxu0 0
    %4125 = vmatprep.subr.bf16.mxu0 0
    %4126 = vmatpush1.bf16.msra.mxu0 0
    %4127 = vmatprep.subr.bf16.mxu0 0
    %4128 = vmatpush1.bf16.msra.mxu0 0
    %4129 = vmatprep.subr.bf16.mxu0 0
    %4130 = vmatpush1.bf16.msra.mxu0 0
    %4131 = vmatprep.subr.bf16.mxu0 0
    %4132 = vmatpush1.bf16.msra.mxu0 0
    %4133 = vmatprep.subr.bf16.mxu0 0
    %4134 = vmatpush1.bf16.msra.mxu0 0
    %4135 = vmatprep.subr.bf16.mxu0 0
    %4136 = vmatpush1.bf16.msra.mxu0 0
    %4137 = vmatprep.subr.bf16.mxu0 0
    %4138 = vmatpush1.bf16.msra.mxu0 0
    %4139 = vmatprep.subr.bf16.mxu0 0
    %4140 = vmatpush1.bf16.msra.mxu0 0
    %4141 = vmatprep.subr.bf16.mxu0 0
    %4142 = vmatpush1.bf16.msra.mxu0 0
    %4143 = vmatprep.subr.bf16.mxu0 0
    %4144 = vmatpush1.bf16.msra.mxu0 0
    %4145 = vmatprep.mubr.bf16.mxu0 0
    %4146 = vmatmul.mubr.bf16.gmra.mrb[0].mxu0 %v4111
    %v4147 = vpop.f32.mrb[0].mxu0
    %v4148 = vadd.f32 %v4084, %v4147
    %v4149 = vpop.f32.mrb[0].mxu0
    %v4150 = vpop.f32.mrb[0].mxu0
    %v4151 = vadd.f32 %v4084, %v4150
    %v4152 = vpop.f32.mrb[0].mxu0
    %4153 = vdwg.mxu0
    %v4154 = vadd.f32 %v4148, %v2015
    %v4155 = vadd.f32 %v4151, %v2016
    %v4156 = vpack.c.bf16 %v4155, %v4154
    %v4157 = vld [vmem:[%s12] sm:$0xf]
    %v4158 = vld [vmem:[%s12 + $0x4] sm:$0xf]
    %v4159 = vld [vmem:[%s12 + $0x8] sm:$0xf]
    %v4160 = vld [vmem:[%s12 + $0xc] sm:$0xf]
    %v4161 = vld [vmem:[%s12 + $0x10] sm:$0xf]
    %v4162 = vld [vmem:[%s12 + $0x14] sm:$0xf]
    %v4163 = vld [vmem:[%s12 + $0x18] sm:$0xf]
    %v4164 = vld [vmem:[%s12 + $0x1c] sm:$0xf]
    %v4165 = vld [vmem:[%s13] sm:$0x1]
    %v4167 = vlaneseq
    %v4168 = vshrl.u32 %v4167, 7
    %v4169 = vsub.s32 0, %v4168
    %v4170 = vrot.slane %v4165, %v4169
    %v4180 = vunpack.c.l.b16 %v4157
    %v4181 = vunpack.c.l.b16 %v4158
    %v4182 = vunpack.c.l.b16 %v4159
    %v4183 = vunpack.c.l.b16 %v4160
    %v4184 = vunpack.c.l.b16 %v4161
    %v4185 = vunpack.c.l.b16 %v4162
    %v4186 = vunpack.c.l.b16 %v4163
    %v4187 = vunpack.c.l.b16 %v4164
    %v4188 = vpack.c.b16 %v4181, %v4180
    %v4189 = vpack.c.b16 %v4183, %v4182
    %v4190 = vpack.c.b16 %v4185, %v4184
    %v4191 = vpack.c.b16 %v4187, %v4186
    %v4197 = vsel %vm2087, %v4156, 0
    %4199 = vmatprep.subr.bf16.mxu0 0
    %4200 = vmatpush1.bf16.msra.mxu0 %v4188
    %4201 = vmatprep.subr.bf16.mxu0 0
    %4202 = vmatpush1.bf16.msra.mxu0 %v4189
    %4203 = vmatprep.subr.bf16.mxu0 0
    %4204 = vmatpush1.bf16.msra.mxu0 %v4190
    %4205 = vmatprep.subr.bf16.mxu0 0
    %4206 = vmatpush1.bf16.msra.mxu0 %v4191
    %4207 = vmatprep.subr.bf16.mxu0 0
    %4208 = vmatpush1.bf16.msra.mxu0 0
    %4209 = vmatprep.subr.bf16.mxu0 0
    %4210 = vmatpush1.bf16.msra.mxu0 0
    %4211 = vmatprep.subr.bf16.mxu0 0
    %4212 = vmatpush1.bf16.msra.mxu0 0
    %4213 = vmatprep.subr.bf16.mxu0 0
    %4214 = vmatpush1.bf16.msra.mxu0 0
    %4215 = vmatprep.subr.bf16.mxu0 0
    %4216 = vmatpush1.bf16.msra.mxu0 0
    %4217 = vmatprep.subr.bf16.mxu0 0
    %4218 = vmatpush1.bf16.msra.mxu0 0
    %4219 = vmatprep.subr.bf16.mxu0 0
    %4220 = vmatpush1.bf16.msra.mxu0 0
    %4221 = vmatprep.subr.bf16.mxu0 0
    %4222 = vmatpush1.bf16.msra.mxu0 0
    %4223 = vmatprep.subr.bf16.mxu0 0
    %4224 = vmatpush1.bf16.msra.mxu0 0
    %4225 = vmatprep.subr.bf16.mxu0 0
    %4226 = vmatpush1.bf16.msra.mxu0 0
    %4227 = vmatprep.subr.bf16.mxu0 0
    %4228 = vmatpush1.bf16.msra.mxu0 0
    %4229 = vmatprep.subr.bf16.mxu0 0
    %4230 = vmatpush1.bf16.msra.mxu0 0
    %4231 = vmatprep.mubr.bf16.mxu0 0
    %4232 = vmatmul.mubr.bf16.gmra.mrb[0].mxu0 %v4197
    %v4233 = vpop.f32.mrb[0].mxu0
    %v4234 = vadd.f32 %v4170, %v4233
    %v4235 = vpop.f32.mrb[0].mxu0
    %v4236 = vpop.f32.mrb[0].mxu0
    %v4237 = vadd.f32 %v4170, %v4236
    %v4238 = vpop.f32.mrb[0].mxu0
    %4239 = vdwg.mxu0
    %v4240 = vmax.f32 %v4234, 0.0
    %v4241 = vmax.f32 %v4237, 0.0
    %v4242 = vadd.f32 %v4240, 1e-05
    %v4243 = vadd.f32 %v4241, 1e-05
    %4244 = vst [vmem:[#allocation2] sm:$0xff] %v4242
    %4245 = vst [vmem:[#allocation2 + $0x8] sm:$0xff] %v4243
    // Predicated region
    $region58: #{extractor_forward.1} parent=1 // pred_check
      _
    $region59: #{extractor_forward.1} parent=1 // pred_check_branch
      %4247 = sbr.rel (0) target = $region61
    $region60: #{extractor_forward.1} parent=1 // pred_region
      %s4249 = ssub.s32 256, 256
      %4250 = vsyncadd [#allocation3], %s4249
      %s4251 = sshll.u32 [#allocation2], 4
      %s4252 = int_to_ptr.vmem [resolvable:$true] %s4251
      %4257 = dma.vmem_to_hbm [thread:$0]  %s4252, 256, %s14, [#allocation3], 128, 128, 8
    $region61: #{extractor_forward.1} parent=1 // pred_fallthru
      _
    // Predicated region
    $region62: #{extractor_forward.1} parent=1 // pred_check
      _
    $region63: #{extractor_forward.1} parent=1 // pred_check_branch
      %4259 = sbr.rel (0) target = $region65
    $region64: #{extractor_forward.1} parent=1 // pred_region
      %4260 = dma.done [#allocation3], 256
    $region65: #{extractor_forward.1} parent=1 // pred_fallthru
      _
    %4261 = vsyncpa [#allocation3], 1

</llo_original>
